<compile_context>
chip_gen: v6e
topology: v6e:2x2x1
jax: 0.10.0
libtpu: 0.0.40
codegen_flags: <defaults>
</compile_context>

<pallas_src>
import jax
import jax.numpy as jnp
from jax.experimental import pallas as pl
from jax.experimental.pallas import tpu as pltpu

# ------------------------- small synthetic config -------------------------
VOCAB = 64
SEQ = 8           # sequence length
HIDDEN = 32       # hidden size
N_HEADS = 4
HEAD_DIM = HIDDEN // N_HEADS
FFN = 64          # intermediate size
N_LAYERS = 2
EPS = 1e-5
ALPHA_AUG = 0.8
FC_PAD = 128      # lane-dense padded width of the FC head output


# ------------------------------ kernel helpers -----------------------------
def _layer_norm(x, gamma, beta):
    mu = jnp.mean(x, axis=-1, keepdims=True)
    var = jnp.mean((x - mu) ** 2, axis=-1, keepdims=True)
    return (x - mu) * jax.lax.rsqrt(var + EPS) * gamma + beta


def _gelu(x):
    # tanh-approx GELU  # TODO(synk): torch/HF roberta uses the erf-based GELU.
    c = 0.7978845608028654  # sqrt(2/pi)
    return 0.5 * x * (1.0 + jnp.tanh(c * (x + 0.044715 * x * x * x)))


def _attention(q, k, v):
    """q, k, v: (N, S, H) bf16 -> (N, S, H) f32 context.

    Batched over all N rows with one einsum per head (static 4-way unroll).
    TODO(synk): no attention mask (real DittoModel uses the tokenizer mask).
    """
    scale = 1.0 / (HEAD_DIM ** 0.5)
    heads = []
    for hh in range(N_HEADS):
        sl = slice(hh * HEAD_DIM, (hh + 1) * HEAD_DIM)
        s = jnp.einsum("bqd,bkd->bqk", q[..., sl], k[..., sl],
                       preferred_element_type=jnp.float32) * scale      # (N,S,S)
        s = s - jnp.max(s, axis=-1, keepdims=True)
        p = jnp.exp(s)
        p = p * pl.reciprocal(jnp.sum(p, axis=-1, keepdims=True), approx=True)
        heads.append(jnp.einsum("bqk,bkd->bqd", p.astype(jnp.bfloat16),
                                v[..., sl],
                                preferred_element_type=jnp.float32))    # (N,S,HD)
    return jnp.concatenate(heads, axis=-1)                              # (N,S,H)


# --------------------------- fused forward kernel ---------------------------
def ditto_kernel(lam_ref,                                     # (1,1) f32 SMEM
                 x_ref,                                       # (N,S,H) f32
                 embg_ref, embb_ref,                          # (1,H) f32
                 wqkv_ref, bqkv_ref,                          # (L,H,3H) bf16 / (L,1,3H) f32
                 wo_ref, bo_ref,                              # (L,H,H) bf16 / (L,1,H) f32
                 ln1g_ref, ln1b_ref,                          # (L,1,H) f32
                 w1_ref, b1_ref,                              # (L,H,F) bf16 / (L,1,F) f32
                 w2_ref, b2_ref,                              # (L,F,H) bf16 / (L,1,H) f32
                 ln2g_ref, ln2b_ref,                          # (L,1,H) f32
                 fcw_ref, fcb_ref,                            # (H,128) bf16 / (1,128) f32
                 o_ref):                                      # (B,128) f32
    N, S, H = x_ref.shape
    M = N * S
    out_rows = o_ref.shape[0]
    paired = (N == 2 * out_rows) and (N != out_rows)          # static

    # Embedding LayerNorm, on the full (N*S, H) slab.
    h = _layer_norm(x_ref[...].reshape(M, H), embg_ref[...], embb_ref[...])

    # All encoder layers, fully unrolled (weights live in VMEM the whole time).
    for l in range(N_LAYERS):
        # ---- self-attention block: fused QKV matmul (one (M,H)x(H,3H)) ----
        qkv = jnp.dot(h.astype(jnp.bfloat16), wqkv_ref[l],
                      preferred_element_type=jnp.float32) + bqkv_ref[l]   # (M,3H)
        q = qkv[:, :H].reshape(N, S, H).astype(jnp.bfloat16)
        k = qkv[:, H:2 * H].reshape(N, S, H).astype(jnp.bfloat16)
        v = qkv[:, 2 * H:].reshape(N, S, H).astype(jnp.bfloat16)

        ctx = _attention(q, k, v).reshape(M, H)                           # (M,H) f32
        attn = jnp.dot(ctx.astype(jnp.bfloat16), wo_ref[l],
                       preferred_element_type=jnp.float32) + bo_ref[l]
        h1 = _layer_norm(h + attn, ln1g_ref[l], ln1b_ref[l])

        # ---- FFN block ----
        ff = _gelu(jnp.dot(h1.astype(jnp.bfloat16), w1_ref[l],
                           preferred_element_type=jnp.float32) + b1_ref[l])
        ff = jnp.dot(ff.astype(jnp.bfloat16), w2_ref[l],
                     preferred_element_type=jnp.float32) + b2_ref[l]
        h = _layer_norm(h1 + ff, ln2g_ref[l], ln2b_ref[l])

    # ---- CLS token, mixup, FC head (fused, lane-dense padded output) ----
    cls = h.reshape(N, S, H)[:, 0, :]                                     # (N,H)
    if paired:
        lam = lam_ref[0, 0]
        enc = cls[:out_rows] * lam + cls[out_rows:] * (1.0 - lam)
    else:
        enc = cls
    o_ref[...] = (jnp.dot(enc.astype(jnp.bfloat16), fcw_ref[...],
                          preferred_element_type=jnp.float32) + fcb_ref[...])


def _run_ditto_kernel(x_emb, lam, params, out_rows):
    inputs = (lam, x_emb, params["emb_g"], params["emb_b"],
              params["wqkv"], params["bqkv"], params["wo"], params["bo"],
              params["ln1_g"], params["ln1_b"],
              params["w1"], params["b1"], params["w2"], params["b2"],
              params["ln2_g"], params["ln2_b"],
              params["fc_w_pad"], params["fc_b_pad"])
    in_specs = ([pl.BlockSpec(memory_space=pltpu.MemorySpace.SMEM)]      # lam scalar
                + [pl.BlockSpec(memory_space=pltpu.MemorySpace.VMEM)] * (len(inputs) - 1))
    # Single invocation (no grid): the whole problem (<1 MiB) lives in VMEM.
    return pl.pallas_call(
        ditto_kernel,
        out_shape=jax.ShapeDtypeStruct((out_rows, FC_PAD), jnp.float32),
        in_specs=in_specs,
        out_specs=pl.BlockSpec(memory_space=pltpu.MemorySpace.VMEM),
    )(*inputs)


# --------------------------- params & plain-JAX glue ------------------------
def init_params(key):
    keys = iter(jax.random.split(key, 64))

    def dense(shape, scale=0.02):
        return jax.random.normal(next(keys), shape, jnp.float32) * scale

    def stack(make):
        return jnp.stack([make() for _ in range(N_LAYERS)], axis=0)

    params = {
        "tok_emb": dense((VOCAB, HIDDEN)),
        "pos_emb": dense((SEQ, HIDDEN)),
        "emb_g": jnp.ones((1, HIDDEN), jnp.float32),
        "emb_b": jnp.zeros((1, HIDDEN), jnp.float32),
        # fused QKV projection (Wq|Wk|Wv), matmul weights stored bf16 for the MXU
        "wqkv": stack(lambda: dense((HIDDEN, 3 * HIDDEN))).astype(jnp.bfloat16),
        "bqkv": jnp.zeros((N_LAYERS, 1, 3 * HIDDEN), jnp.float32),
        "wo": stack(lambda: dense((HIDDEN, HIDDEN))).astype(jnp.bfloat16),
        "bo": jnp.zeros((N_LAYERS, 1, HIDDEN), jnp.float32),
        "ln1_g": jnp.ones((N_LAYERS, 1, HIDDEN), jnp.float32),
        "ln1_b": jnp.zeros((N_LAYERS, 1, HIDDEN), jnp.float32),
        "w1": stack(lambda: dense((HIDDEN, FFN))).astype(jnp.bfloat16),
        "b1": jnp.zeros((N_LAYERS, 1, FFN), jnp.float32),
        "w2": stack(lambda: dense((FFN, HIDDEN))).astype(jnp.bfloat16),
        "b2": jnp.zeros((N_LAYERS, 1, HIDDEN), jnp.float32),
        "ln2_g": jnp.ones((N_LAYERS, 1, HIDDEN), jnp.float32),
        "ln2_b": jnp.zeros((N_LAYERS, 1, HIDDEN), jnp.float32),
    }
    # FC head: logical (H, 2); padded to 128 lanes so the kernel's only HBM
    # output store is unmasked / lane-dense.  Real logits are columns [:2].
    fc_w = dense((HIDDEN, 2))
    fc_w_pad = jnp.zeros((HIDDEN, FC_PAD), jnp.float32).at[:, :2].set(fc_w)
    params["fc_w_pad"] = fc_w_pad.astype(jnp.bfloat16)
    params["fc_b_pad"] = jnp.zeros((1, FC_PAD), jnp.float32)
    return params


def ditto_forward(params, x1, x2=None, rng=None):
    """Mirror of DittoModel.forward: encode (x1 ++ x2), take CLS, mixup, fc."""
    if x2 is not None:
        ids = jnp.concatenate([x1, x2], axis=0)
        if rng is None:
            rng = jax.random.PRNGKey(42)
        # fresh Beta(alpha, alpha) draw, kept on device (no host sync)
        lam = jax.random.beta(rng, ALPHA_AUG, ALPHA_AUG).astype(jnp.float32)
    else:
        ids = x1
        lam = jnp.float32(1.0)       # unused on the plain path
    lam = jnp.reshape(lam, (1, 1))

    # token + position embedding (gather is cheap plain-JAX glue);
    # the embedding LayerNorm runs inside the fused kernel.
    # TODO(synk): roberta's padding_idx position offset is not modeled.
    x_emb = params["tok_emb"][ids] + params["pos_emb"][None, :, :]       # (N,S,H)

    logits_pad = _run_ditto_kernel(x_emb.astype(jnp.float32), lam, params,
                                   out_rows=x1.shape[0])
    return logits_pad[:, :2]


# ----------------------------------- main -----------------------------------
if __name__ == "__main__":
    params = init_params(jax.random.PRNGKey(0))

    k1, k2, k3 = jax.random.split(jax.random.PRNGKey(0), 3)
    x1 = jax.random.randint(k1, (2, SEQ), 0, VOCAB, dtype=jnp.int32)
    x2 = jax.random.randint(k2, (2, SEQ), 0, VOCAB, dtype=jnp.int32)

    # exercise the augmented path (x2 given) and the plain path (x2 None)
    out_aug = ditto_forward(params, x1, x2, rng=k3)
    out_plain = ditto_forward(params, x1, None)
    jax.block_until_ready((out_aug, out_plain))

    assert out_aug.shape == (2, 2) and out_plain.shape == (2, 2)
    assert out_aug.dtype == jnp.float32
    assert bool(jnp.all(jnp.isfinite(out_aug))) and bool(jnp.all(jnp.isfinite(out_plain)))
    print("KERNEL_OK")
</pallas_src>

<mosaic_0001>
module attributes {stable_mosaic.version = 11 : i64} {
  func.func @ditto_kernel(%arg0: memref<1x1xf32, #tpu.memory_space<smem>>, %arg1: memref<4x8x32xf32, #tpu.memory_space<vmem>>, %arg2: memref<1x32xf32, #tpu.memory_space<vmem>>, %arg3: memref<1x32xf32, #tpu.memory_space<vmem>>, %arg4: memref<2x32x96xbf16, #tpu.memory_space<vmem>>, %arg5: memref<2x1x96xf32, #tpu.memory_space<vmem>>, %arg6: memref<2x32x32xbf16, #tpu.memory_space<vmem>>, %arg7: memref<2x1x32xf32, #tpu.memory_space<vmem>>, %arg8: memref<2x1x32xf32, #tpu.memory_space<vmem>>, %arg9: memref<2x1x32xf32, #tpu.memory_space<vmem>>, %arg10: memref<2x32x64xbf16, #tpu.memory_space<vmem>>, %arg11: memref<2x1x64xf32, #tpu.memory_space<vmem>>, %arg12: memref<2x64x32xbf16, #tpu.memory_space<vmem>>, %arg13: memref<2x1x32xf32, #tpu.memory_space<vmem>>, %arg14: memref<2x1x32xf32, #tpu.memory_space<vmem>>, %arg15: memref<2x1x32xf32, #tpu.memory_space<vmem>>, %arg16: memref<32x128xbf16, #tpu.memory_space<vmem>>, %arg17: memref<1x128xf32, #tpu.memory_space<vmem>>, %arg18: memref<2x128xf32, #tpu.memory_space<vmem>>) attributes {dimension_semantics = [], scalar_prefetch = 0 : i64, scratch_operands = 0 : i64, tpu.core_type = #tpu.core_type<tc>} {
    %c0 = arith.constant 0 : index
    %c0_0 = arith.constant 0 : index
    %c0_1 = arith.constant 0 : index
    %0 = vector.load %arg1[%c0, %c0_0, %c0_1] : memref<4x8x32xf32, #tpu.memory_space<vmem>>, vector<4x8x32xf32>
    %1 = vector.shape_cast %0 : vector<4x8x32xf32> to vector<32x32xf32>
    %c0_2 = arith.constant 0 : index
    %c0_3 = arith.constant 0 : index
    %2 = vector.load %arg2[%c0_2, %c0_3] : memref<1x32xf32, #tpu.memory_space<vmem>>, vector<1x32xf32>
    %c0_4 = arith.constant 0 : index
    %c0_5 = arith.constant 0 : index
    %3 = vector.load %arg3[%c0_4, %c0_5] : memref<1x32xf32, #tpu.memory_space<vmem>>, vector<1x32xf32>
    %cst = arith.constant dense<0.000000e+00> : vector<32xf32>
    %4 = vector.multi_reduction <add>, %1, %cst [1] : vector<32x32xf32> to vector<32xf32>
    %5 = vector.shape_cast %4 : vector<32xf32> to vector<32x1xf32>
    %cst_6 = arith.constant 3.200000e+01 : f32
    %6 = vector.broadcast %cst_6 : f32 to vector<32x1xf32>
    %7 = arith.divf %5, %6 : vector<32x1xf32>
    %8 = vector.broadcast %7 : vector<32x1xf32> to vector<32x32xf32>
    %9 = arith.subf %1, %8 : vector<32x32xf32>
    %10 = arith.mulf %9, %9 : vector<32x32xf32>
    %cst_7 = arith.constant dense<0.000000e+00> : vector<32xf32>
    %11 = vector.multi_reduction <add>, %10, %cst_7 [1] : vector<32x32xf32> to vector<32xf32>
    %12 = vector.shape_cast %11 : vector<32xf32> to vector<32x1xf32>
    %cst_8 = arith.constant 3.200000e+01 : f32
    %13 = vector.broadcast %cst_8 : f32 to vector<32x1xf32>
    %14 = arith.divf %12, %13 : vector<32x1xf32>
    %15 = vector.broadcast %7 : vector<32x1xf32> to vector<32x32xf32>
    %16 = arith.subf %1, %15 : vector<32x32xf32>
    %cst_9 = arith.constant 9.99999974E-6 : f32
    %17 = vector.broadcast %cst_9 : f32 to vector<32x1xf32>
    %18 = arith.addf %14, %17 : vector<32x1xf32>
    %19 = math.rsqrt %18 : vector<32x1xf32>
    %20 = vector.broadcast %19 : vector<32x1xf32> to vector<32x32xf32>
    %21 = arith.mulf %16, %20 : vector<32x32xf32>
    %22 = vector.broadcast %2 : vector<1x32xf32> to vector<32x32xf32>
    %23 = arith.mulf %21, %22 : vector<32x32xf32>
    %24 = vector.broadcast %3 : vector<1x32xf32> to vector<32x32xf32>
    %25 = arith.addf %23, %24 : vector<32x32xf32>
    %26 = arith.truncf %25 : vector<32x32xf32> to vector<32x32xbf16>
    %c0_10 = arith.constant 0 : index
    %c0_11 = arith.constant 0 : index
    %c0_12 = arith.constant 0 : index
    %27 = vector.load %arg4[%c0_10, %c0_11, %c0_12] : memref<2x32x96xbf16, #tpu.memory_space<vmem>>, vector<1x32x96xbf16>
    %28 = vector.shape_cast %27 : vector<1x32x96xbf16> to vector<32x96xbf16>
    %cst_13 = arith.constant dense<0.000000e+00> : vector<32x96xf32>
    %29 = tpu.matmul %26, %28, %cst_13 {dimension_numbers = #tpu.dot_dimension_numbers<[1], [0], [0], [1], [0, 0, 1, 1], [], []>} : vector<32x32xbf16>, vector<32x96xbf16>, vector<32x96xf32> -> vector<32x96xf32>
    %c0_14 = arith.constant 0 : index
    %c0_15 = arith.constant 0 : index
    %c0_16 = arith.constant 0 : index
    %30 = vector.load %arg5[%c0_14, %c0_15, %c0_16] : memref<2x1x96xf32, #tpu.memory_space<vmem>>, vector<1x1x96xf32>
    %31 = vector.shape_cast %30 : vector<1x1x96xf32> to vector<1x96xf32>
    %32 = vector.broadcast %31 : vector<1x96xf32> to vector<32x96xf32>
    %33 = arith.addf %29, %32 : vector<32x96xf32>
    %34 = vector.extract_strided_slice %33 {offsets = [0, 0], sizes = [32, 32], strides = [1, 1]} : vector<32x96xf32> to vector<32x32xf32>
    %35 = vector.shape_cast %34 : vector<32x32xf32> to vector<4x8x32xf32>
    %36 = arith.truncf %35 : vector<4x8x32xf32> to vector<4x8x32xbf16>
    %37 = vector.extract_strided_slice %33 {offsets = [0, 32], sizes = [32, 32], strides = [1, 1]} : vector<32x96xf32> to vector<32x32xf32>
    %38 = vector.shape_cast %37 : vector<32x32xf32> to vector<4x8x32xf32>
    %39 = arith.truncf %38 : vector<4x8x32xf32> to vector<4x8x32xbf16>
    %40 = vector.extract_strided_slice %33 {offsets = [0, 64], sizes = [32, 32], strides = [1, 1]} : vector<32x96xf32> to vector<32x32xf32>
    %41 = vector.shape_cast %40 : vector<32x32xf32> to vector<4x8x32xf32>
    %42 = arith.truncf %41 : vector<4x8x32xf32> to vector<4x8x32xbf16>
    %43 = vector.extract_strided_slice %36 {offsets = [0, 0, 0], sizes = [4, 8, 8], strides = [1, 1, 1]} : vector<4x8x32xbf16> to vector<4x8x8xbf16>
    %44 = vector.extract_strided_slice %39 {offsets = [0, 0, 0], sizes = [4, 8, 8], strides = [1, 1, 1]} : vector<4x8x32xbf16> to vector<4x8x8xbf16>
    "tpu.trace_start"() <{level = 10 : i32, message = "bqd,bkd->bqk"}> : () -> ()
    %cst_17 = arith.constant dense<0.000000e+00> : vector<4x8x8xf32>
    %45 = tpu.matmul %43, %44, %cst_17 {dimension_numbers = #tpu.dot_dimension_numbers<[2], [2], [1], [1], [0, 0, 0, 1, 1, 1], [0], [0]>} : vector<4x8x8xbf16>, vector<4x8x8xbf16>, vector<4x8x8xf32> -> vector<4x8x8xf32>
    "tpu.trace_stop"() : () -> ()
    %cst_18 = arith.constant 0.353553385 : f32
    %46 = vector.broadcast %cst_18 : f32 to vector<4x8x8xf32>
    %47 = arith.mulf %45, %46 : vector<4x8x8xf32>
    %cst_19 = arith.constant dense<0xFF800000> : vector<4x8xf32>
    %48 = vector.multi_reduction <maximumf>, %47, %cst_19 [2] : vector<4x8x8xf32> to vector<4x8xf32>
    %49 = vector.shape_cast %48 : vector<4x8xf32> to vector<4x8x1xf32>
    %50 = vector.broadcast %49 : vector<4x8x1xf32> to vector<4x8x8xf32>
    %51 = arith.subf %47, %50 : vector<4x8x8xf32>
    %52 = math.exp %51 : vector<4x8x8xf32>
    %cst_20 = arith.constant dense<0.000000e+00> : vector<4x8xf32>
    %53 = vector.multi_reduction <add>, %52, %cst_20 [2] : vector<4x8x8xf32> to vector<4x8xf32>
    %54 = vector.shape_cast %53 : vector<4x8xf32> to vector<4x8x1xf32>
    %55 = tpu.reciprocal %54 {approx = true} : vector<4x8x1xf32> -> vector<4x8x1xf32>
    %56 = vector.broadcast %55 : vector<4x8x1xf32> to vector<4x8x8xf32>
    %57 = arith.mulf %52, %56 : vector<4x8x8xf32>
    %58 = arith.truncf %57 : vector<4x8x8xf32> to vector<4x8x8xbf16>
    %59 = vector.extract_strided_slice %42 {offsets = [0, 0, 0], sizes = [4, 8, 8], strides = [1, 1, 1]} : vector<4x8x32xbf16> to vector<4x8x8xbf16>
    "tpu.trace_start"() <{level = 10 : i32, message = "bqk,bkd->bqd"}> : () -> ()
    %cst_21 = arith.constant dense<0.000000e+00> : vector<4x8x8xf32>
    %60 = tpu.matmul %58, %59, %cst_21 {dimension_numbers = #tpu.dot_dimension_numbers<[2], [1], [1], [2], [0, 0, 0, 1, 1, 2], [0], [0]>} : vector<4x8x8xbf16>, vector<4x8x8xbf16>, vector<4x8x8xf32> -> vector<4x8x8xf32>
    "tpu.trace_stop"() : () -> ()
    %61 = vector.extract_strided_slice %36 {offsets = [0, 0, 8], sizes = [4, 8, 8], strides = [1, 1, 1]} : vector<4x8x32xbf16> to vector<4x8x8xbf16>
    %62 = vector.extract_strided_slice %39 {offsets = [0, 0, 8], sizes = [4, 8, 8], strides = [1, 1, 1]} : vector<4x8x32xbf16> to vector<4x8x8xbf16>
    "tpu.trace_start"() <{level = 10 : i32, message = "bqd,bkd->bqk"}> : () -> ()
    %cst_22 = arith.constant dense<0.000000e+00> : vector<4x8x8xf32>
    %63 = tpu.matmul %61, %62, %cst_22 {dimension_numbers = #tpu.dot_dimension_numbers<[2], [2], [1], [1], [0, 0, 0, 1, 1, 1], [0], [0]>} : vector<4x8x8xbf16>, vector<4x8x8xbf16>, vector<4x8x8xf32> -> vector<4x8x8xf32>
    "tpu.trace_stop"() : () -> ()
    %cst_23 = arith.constant 0.353553385 : f32
    %64 = vector.broadcast %cst_23 : f32 to vector<4x8x8xf32>
    %65 = arith.mulf %63, %64 : vector<4x8x8xf32>
    %cst_24 = arith.constant dense<0xFF800000> : vector<4x8xf32>
    %66 = vector.multi_reduction <maximumf>, %65, %cst_24 [2] : vector<4x8x8xf32> to vector<4x8xf32>
    %67 = vector.shape_cast %66 : vector<4x8xf32> to vector<4x8x1xf32>
    %68 = vector.broadcast %67 : vector<4x8x1xf32> to vector<4x8x8xf32>
    %69 = arith.subf %65, %68 : vector<4x8x8xf32>
    %70 = math.exp %69 : vector<4x8x8xf32>
    %cst_25 = arith.constant dense<0.000000e+00> : vector<4x8xf32>
    %71 = vector.multi_reduction <add>, %70, %cst_25 [2] : vector<4x8x8xf32> to vector<4x8xf32>
    %72 = vector.shape_cast %71 : vector<4x8xf32> to vector<4x8x1xf32>
    %73 = tpu.reciprocal %72 {approx = true} : vector<4x8x1xf32> -> vector<4x8x1xf32>
    %74 = vector.broadcast %73 : vector<4x8x1xf32> to vector<4x8x8xf32>
    %75 = arith.mulf %70, %74 : vector<4x8x8xf32>
    %76 = arith.truncf %75 : vector<4x8x8xf32> to vector<4x8x8xbf16>
    %77 = vector.extract_strided_slice %42 {offsets = [0, 0, 8], sizes = [4, 8, 8], strides = [1, 1, 1]} : vector<4x8x32xbf16> to vector<4x8x8xbf16>
    "tpu.trace_start"() <{level = 10 : i32, message = "bqk,bkd->bqd"}> : () -> ()
    %cst_26 = arith.constant dense<0.000000e+00> : vector<4x8x8xf32>
    %78 = tpu.matmul %76, %77, %cst_26 {dimension_numbers = #tpu.dot_dimension_numbers<[2], [1], [1], [2], [0, 0, 0, 1, 1, 2], [0], [0]>} : vector<4x8x8xbf16>, vector<4x8x8xbf16>, vector<4x8x8xf32> -> vector<4x8x8xf32>
    "tpu.trace_stop"() : () -> ()
    %79 = vector.extract_strided_slice %36 {offsets = [0, 0, 16], sizes = [4, 8, 8], strides = [1, 1, 1]} : vector<4x8x32xbf16> to vector<4x8x8xbf16>
    %80 = vector.extract_strided_slice %39 {offsets = [0, 0, 16], sizes = [4, 8, 8], strides = [1, 1, 1]} : vector<4x8x32xbf16> to vector<4x8x8xbf16>
    "tpu.trace_start"() <{level = 10 : i32, message = "bqd,bkd->bqk"}> : () -> ()
    %cst_27 = arith.constant dense<0.000000e+00> : vector<4x8x8xf32>
    %81 = tpu.matmul %79, %80, %cst_27 {dimension_numbers = #tpu.dot_dimension_numbers<[2], [2], [1], [1], [0, 0, 0, 1, 1, 1], [0], [0]>} : vector<4x8x8xbf16>, vector<4x8x8xbf16>, vector<4x8x8xf32> -> vector<4x8x8xf32>
    "tpu.trace_stop"() : () -> ()
    %cst_28 = arith.constant 0.353553385 : f32
    %82 = vector.broadcast %cst_28 : f32 to vector<4x8x8xf32>
    %83 = arith.mulf %81, %82 : vector<4x8x8xf32>
    %cst_29 = arith.constant dense<0xFF800000> : vector<4x8xf32>
    %84 = vector.multi_reduction <maximumf>, %83, %cst_29 [2] : vector<4x8x8xf32> to vector<4x8xf32>
    %85 = vector.shape_cast %84 : vector<4x8xf32> to vector<4x8x1xf32>
    %86 = vector.broadcast %85 : vector<4x8x1xf32> to vector<4x8x8xf32>
    %87 = arith.subf %83, %86 : vector<4x8x8xf32>
    %88 = math.exp %87 : vector<4x8x8xf32>
    %cst_30 = arith.constant dense<0.000000e+00> : vector<4x8xf32>
    %89 = vector.multi_reduction <add>, %88, %cst_30 [2] : vector<4x8x8xf32> to vector<4x8xf32>
    %90 = vector.shape_cast %89 : vector<4x8xf32> to vector<4x8x1xf32>
    %91 = tpu.reciprocal %90 {approx = true} : vector<4x8x1xf32> -> vector<4x8x1xf32>
    %92 = vector.broadcast %91 : vector<4x8x1xf32> to vector<4x8x8xf32>
    %93 = arith.mulf %88, %92 : vector<4x8x8xf32>
    %94 = arith.truncf %93 : vector<4x8x8xf32> to vector<4x8x8xbf16>
    %95 = vector.extract_strided_slice %42 {offsets = [0, 0, 16], sizes = [4, 8, 8], strides = [1, 1, 1]} : vector<4x8x32xbf16> to vector<4x8x8xbf16>
    "tpu.trace_start"() <{level = 10 : i32, message = "bqk,bkd->bqd"}> : () -> ()
    %cst_31 = arith.constant dense<0.000000e+00> : vector<4x8x8xf32>
    %96 = tpu.matmul %94, %95, %cst_31 {dimension_numbers = #tpu.dot_dimension_numbers<[2], [1], [1], [2], [0, 0, 0, 1, 1, 2], [0], [0]>} : vector<4x8x8xbf16>, vector<4x8x8xbf16>, vector<4x8x8xf32> -> vector<4x8x8xf32>
    "tpu.trace_stop"() : () -> ()
    %97 = vector.extract_strided_slice %36 {offsets = [0, 0, 24], sizes = [4, 8, 8], strides = [1, 1, 1]} : vector<4x8x32xbf16> to vector<4x8x8xbf16>
    %98 = vector.extract_strided_slice %39 {offsets = [0, 0, 24], sizes = [4, 8, 8], strides = [1, 1, 1]} : vector<4x8x32xbf16> to vector<4x8x8xbf16>
    "tpu.trace_start"() <{level = 10 : i32, message = "bqd,bkd->bqk"}> : () -> ()
    %cst_32 = arith.constant dense<0.000000e+00> : vector<4x8x8xf32>
    %99 = tpu.matmul %97, %98, %cst_32 {dimension_numbers = #tpu.dot_dimension_numbers<[2], [2], [1], [1], [0, 0, 0, 1, 1, 1], [0], [0]>} : vector<4x8x8xbf16>, vector<4x8x8xbf16>, vector<4x8x8xf32> -> vector<4x8x8xf32>
    "tpu.trace_stop"() : () -> ()
    %cst_33 = arith.constant 0.353553385 : f32
    %100 = vector.broadcast %cst_33 : f32 to vector<4x8x8xf32>
    %101 = arith.mulf %99, %100 : vector<4x8x8xf32>
    %cst_34 = arith.constant dense<0xFF800000> : vector<4x8xf32>
    %102 = vector.multi_reduction <maximumf>, %101, %cst_34 [2] : vector<4x8x8xf32> to vector<4x8xf32>
    %103 = vector.shape_cast %102 : vector<4x8xf32> to vector<4x8x1xf32>
    %104 = vector.broadcast %103 : vector<4x8x1xf32> to vector<4x8x8xf32>
    %105 = arith.subf %101, %104 : vector<4x8x8xf32>
    %106 = math.exp %105 : vector<4x8x8xf32>
    %cst_35 = arith.constant dense<0.000000e+00> : vector<4x8xf32>
    %107 = vector.multi_reduction <add>, %106, %cst_35 [2] : vector<4x8x8xf32> to vector<4x8xf32>
    %108 = vector.shape_cast %107 : vector<4x8xf32> to vector<4x8x1xf32>
    %109 = tpu.reciprocal %108 {approx = true} : vector<4x8x1xf32> -> vector<4x8x1xf32>
    %110 = vector.broadcast %109 : vector<4x8x1xf32> to vector<4x8x8xf32>
    %111 = arith.mulf %106, %110 : vector<4x8x8xf32>
    %112 = arith.truncf %111 : vector<4x8x8xf32> to vector<4x8x8xbf16>
    %113 = vector.extract_strided_slice %42 {offsets = [0, 0, 24], sizes = [4, 8, 8], strides = [1, 1, 1]} : vector<4x8x32xbf16> to vector<4x8x8xbf16>
    "tpu.trace_start"() <{level = 10 : i32, message = "bqk,bkd->bqd"}> : () -> ()
    %cst_36 = arith.constant dense<0.000000e+00> : vector<4x8x8xf32>
    %114 = tpu.matmul %112, %113, %cst_36 {dimension_numbers = #tpu.dot_dimension_numbers<[2], [1], [1], [2], [0, 0, 0, 1, 1, 2], [0], [0]>} : vector<4x8x8xbf16>, vector<4x8x8xbf16>, vector<4x8x8xf32> -> vector<4x8x8xf32>
    "tpu.trace_stop"() : () -> ()
    %115 = tpu.concatenate %60, %78, %96, %114 in 2 : vector<4x8x8xf32>, vector<4x8x8xf32>, vector<4x8x8xf32>, vector<4x8x8xf32> -> vector<4x8x32xf32>
    %116 = vector.shape_cast %115 : vector<4x8x32xf32> to vector<32x32xf32>
    %117 = arith.truncf %116 : vector<32x32xf32> to vector<32x32xbf16>
    %c0_37 = arith.constant 0 : index
    %c0_38 = arith.constant 0 : index
    %c0_39 = arith.constant 0 : index
    %118 = vector.load %arg6[%c0_37, %c0_38, %c0_39] : memref<2x32x32xbf16, #tpu.memory_space<vmem>>, vector<1x32x32xbf16>
    %119 = vector.shape_cast %118 : vector<1x32x32xbf16> to vector<32x32xbf16>
    %cst_40 = arith.constant dense<0.000000e+00> : vector<32x32xf32>
    %120 = tpu.matmul %117, %119, %cst_40 {dimension_numbers = #tpu.dot_dimension_numbers<[1], [0], [0], [1], [0, 0, 1, 1], [], []>} : vector<32x32xbf16>, vector<32x32xbf16>, vector<32x32xf32> -> vector<32x32xf32>
    %c0_41 = arith.constant 0 : index
    %c0_42 = arith.constant 0 : index
    %c0_43 = arith.constant 0 : index
    %121 = vector.load %arg7[%c0_41, %c0_42, %c0_43] : memref<2x1x32xf32, #tpu.memory_space<vmem>>, vector<1x1x32xf32>
    %122 = vector.shape_cast %121 : vector<1x1x32xf32> to vector<1x32xf32>
    %123 = vector.broadcast %122 : vector<1x32xf32> to vector<32x32xf32>
    %124 = arith.addf %120, %123 : vector<32x32xf32>
    %125 = arith.addf %25, %124 : vector<32x32xf32>
    %c0_44 = arith.constant 0 : index
    %c0_45 = arith.constant 0 : index
    %c0_46 = arith.constant 0 : index
    %126 = vector.load %arg8[%c0_44, %c0_45, %c0_46] : memref<2x1x32xf32, #tpu.memory_space<vmem>>, vector<1x1x32xf32>
    %127 = vector.shape_cast %126 : vector<1x1x32xf32> to vector<1x32xf32>
    %c0_47 = arith.constant 0 : index
    %c0_48 = arith.constant 0 : index
    %c0_49 = arith.constant 0 : index
    %128 = vector.load %arg9[%c0_47, %c0_48, %c0_49] : memref<2x1x32xf32, #tpu.memory_space<vmem>>, vector<1x1x32xf32>
    %129 = vector.shape_cast %128 : vector<1x1x32xf32> to vector<1x32xf32>
    %cst_50 = arith.constant dense<0.000000e+00> : vector<32xf32>
    %130 = vector.multi_reduction <add>, %125, %cst_50 [1] : vector<32x32xf32> to vector<32xf32>
    %131 = vector.shape_cast %130 : vector<32xf32> to vector<32x1xf32>
    %cst_51 = arith.constant 3.200000e+01 : f32
    %132 = vector.broadcast %cst_51 : f32 to vector<32x1xf32>
    %133 = arith.divf %131, %132 : vector<32x1xf32>
    %134 = vector.broadcast %133 : vector<32x1xf32> to vector<32x32xf32>
    %135 = arith.subf %125, %134 : vector<32x32xf32>
    %136 = arith.mulf %135, %135 : vector<32x32xf32>
    %cst_52 = arith.constant dense<0.000000e+00> : vector<32xf32>
    %137 = vector.multi_reduction <add>, %136, %cst_52 [1] : vector<32x32xf32> to vector<32xf32>
    %138 = vector.shape_cast %137 : vector<32xf32> to vector<32x1xf32>
    %cst_53 = arith.constant 3.200000e+01 : f32
    %139 = vector.broadcast %cst_53 : f32 to vector<32x1xf32>
    %140 = arith.divf %138, %139 : vector<32x1xf32>
    %141 = vector.broadcast %133 : vector<32x1xf32> to vector<32x32xf32>
    %142 = arith.subf %125, %141 : vector<32x32xf32>
    %cst_54 = arith.constant 9.99999974E-6 : f32
    %143 = vector.broadcast %cst_54 : f32 to vector<32x1xf32>
    %144 = arith.addf %140, %143 : vector<32x1xf32>
    %145 = math.rsqrt %144 : vector<32x1xf32>
    %146 = vector.broadcast %145 : vector<32x1xf32> to vector<32x32xf32>
    %147 = arith.mulf %142, %146 : vector<32x32xf32>
    %148 = vector.broadcast %127 : vector<1x32xf32> to vector<32x32xf32>
    %149 = arith.mulf %147, %148 : vector<32x32xf32>
    %150 = vector.broadcast %129 : vector<1x32xf32> to vector<32x32xf32>
    %151 = arith.addf %149, %150 : vector<32x32xf32>
    %152 = arith.truncf %151 : vector<32x32xf32> to vector<32x32xbf16>
    %c0_55 = arith.constant 0 : index
    %c0_56 = arith.constant 0 : index
    %c0_57 = arith.constant 0 : index
    %153 = vector.load %arg10[%c0_55, %c0_56, %c0_57] : memref<2x32x64xbf16, #tpu.memory_space<vmem>>, vector<1x32x64xbf16>
    %154 = vector.shape_cast %153 : vector<1x32x64xbf16> to vector<32x64xbf16>
    %cst_58 = arith.constant dense<0.000000e+00> : vector<32x64xf32>
    %155 = tpu.matmul %152, %154, %cst_58 {dimension_numbers = #tpu.dot_dimension_numbers<[1], [0], [0], [1], [0, 0, 1, 1], [], []>} : vector<32x32xbf16>, vector<32x64xbf16>, vector<32x64xf32> -> vector<32x64xf32>
    %c0_59 = arith.constant 0 : index
    %c0_60 = arith.constant 0 : index
    %c0_61 = arith.constant 0 : index
    %156 = vector.load %arg11[%c0_59, %c0_60, %c0_61] : memref<2x1x64xf32, #tpu.memory_space<vmem>>, vector<1x1x64xf32>
    %157 = vector.shape_cast %156 : vector<1x1x64xf32> to vector<1x64xf32>
    %158 = vector.broadcast %157 : vector<1x64xf32> to vector<32x64xf32>
    %159 = arith.addf %155, %158 : vector<32x64xf32>
    %cst_62 = arith.constant 5.000000e-01 : f32
    %160 = vector.broadcast %cst_62 : f32 to vector<32x64xf32>
    %161 = arith.mulf %160, %159 : vector<32x64xf32>
    %cst_63 = arith.constant 4.471500e-02 : f32
    %162 = vector.broadcast %cst_63 : f32 to vector<32x64xf32>
    %163 = arith.mulf %162, %159 : vector<32x64xf32>
    %164 = arith.mulf %163, %159 : vector<32x64xf32>
    %165 = arith.mulf %164, %159 : vector<32x64xf32>
    %166 = arith.addf %159, %165 : vector<32x64xf32>
    %cst_64 = arith.constant 0.797884583 : f32
    %167 = vector.broadcast %cst_64 : f32 to vector<32x64xf32>
    %168 = arith.mulf %167, %166 : vector<32x64xf32>
    %169 = math.tanh %168 : vector<32x64xf32>
    %cst_65 = arith.constant 1.000000e+00 : f32
    %170 = vector.broadcast %cst_65 : f32 to vector<32x64xf32>
    %171 = arith.addf %170, %169 : vector<32x64xf32>
    %172 = arith.mulf %161, %171 : vector<32x64xf32>
    %173 = arith.truncf %172 : vector<32x64xf32> to vector<32x64xbf16>
    %c0_66 = arith.constant 0 : index
    %c0_67 = arith.constant 0 : index
    %c0_68 = arith.constant 0 : index
    %174 = vector.load %arg12[%c0_66, %c0_67, %c0_68] : memref<2x64x32xbf16, #tpu.memory_space<vmem>>, vector<1x64x32xbf16>
    %175 = vector.shape_cast %174 : vector<1x64x32xbf16> to vector<64x32xbf16>
    %cst_69 = arith.constant dense<0.000000e+00> : vector<32x32xf32>
    %176 = tpu.matmul %173, %175, %cst_69 {dimension_numbers = #tpu.dot_dimension_numbers<[1], [0], [0], [1], [0, 0, 1, 1], [], []>} : vector<32x64xbf16>, vector<64x32xbf16>, vector<32x32xf32> -> vector<32x32xf32>
    %c0_70 = arith.constant 0 : index
    %c0_71 = arith.constant 0 : index
    %c0_72 = arith.constant 0 : index
    %177 = vector.load %arg13[%c0_70, %c0_71, %c0_72] : memref<2x1x32xf32, #tpu.memory_space<vmem>>, vector<1x1x32xf32>
    %178 = vector.shape_cast %177 : vector<1x1x32xf32> to vector<1x32xf32>
    %179 = vector.broadcast %178 : vector<1x32xf32> to vector<32x32xf32>
    %180 = arith.addf %176, %179 : vector<32x32xf32>
    %181 = arith.addf %151, %180 : vector<32x32xf32>
    %c0_73 = arith.constant 0 : index
    %c0_74 = arith.constant 0 : index
    %c0_75 = arith.constant 0 : index
    %182 = vector.load %arg14[%c0_73, %c0_74, %c0_75] : memref<2x1x32xf32, #tpu.memory_space<vmem>>, vector<1x1x32xf32>
    %183 = vector.shape_cast %182 : vector<1x1x32xf32> to vector<1x32xf32>
    %c0_76 = arith.constant 0 : index
    %c0_77 = arith.constant 0 : index
    %c0_78 = arith.constant 0 : index
    %184 = vector.load %arg15[%c0_76, %c0_77, %c0_78] : memref<2x1x32xf32, #tpu.memory_space<vmem>>, vector<1x1x32xf32>
    %185 = vector.shape_cast %184 : vector<1x1x32xf32> to vector<1x32xf32>
    %cst_79 = arith.constant dense<0.000000e+00> : vector<32xf32>
    %186 = vector.multi_reduction <add>, %181, %cst_79 [1] : vector<32x32xf32> to vector<32xf32>
    %187 = vector.shape_cast %186 : vector<32xf32> to vector<32x1xf32>
    %cst_80 = arith.constant 3.200000e+01 : f32
    %188 = vector.broadcast %cst_80 : f32 to vector<32x1xf32>
    %189 = arith.divf %187, %188 : vector<32x1xf32>
    %190 = vector.broadcast %189 : vector<32x1xf32> to vector<32x32xf32>
    %191 = arith.subf %181, %190 : vector<32x32xf32>
    %192 = arith.mulf %191, %191 : vector<32x32xf32>
    %cst_81 = arith.constant dense<0.000000e+00> : vector<32xf32>
    %193 = vector.multi_reduction <add>, %192, %cst_81 [1] : vector<32x32xf32> to vector<32xf32>
    %194 = vector.shape_cast %193 : vector<32xf32> to vector<32x1xf32>
    %cst_82 = arith.constant 3.200000e+01 : f32
    %195 = vector.broadcast %cst_82 : f32 to vector<32x1xf32>
    %196 = arith.divf %194, %195 : vector<32x1xf32>
    %197 = vector.broadcast %189 : vector<32x1xf32> to vector<32x32xf32>
    %198 = arith.subf %181, %197 : vector<32x32xf32>
    %cst_83 = arith.constant 9.99999974E-6 : f32
    %199 = vector.broadcast %cst_83 : f32 to vector<32x1xf32>
    %200 = arith.addf %196, %199 : vector<32x1xf32>
    %201 = math.rsqrt %200 : vector<32x1xf32>
    %202 = vector.broadcast %201 : vector<32x1xf32> to vector<32x32xf32>
    %203 = arith.mulf %198, %202 : vector<32x32xf32>
    %204 = vector.broadcast %183 : vector<1x32xf32> to vector<32x32xf32>
    %205 = arith.mulf %203, %204 : vector<32x32xf32>
    %206 = vector.broadcast %185 : vector<1x32xf32> to vector<32x32xf32>
    %207 = arith.addf %205, %206 : vector<32x32xf32>
    %208 = arith.truncf %207 : vector<32x32xf32> to vector<32x32xbf16>
    %c1 = arith.constant 1 : index
    %c0_84 = arith.constant 0 : index
    %c0_85 = arith.constant 0 : index
    %209 = vector.load %arg4[%c1, %c0_84, %c0_85] : memref<2x32x96xbf16, #tpu.memory_space<vmem>>, vector<1x32x96xbf16>
    %210 = vector.shape_cast %209 : vector<1x32x96xbf16> to vector<32x96xbf16>
    %cst_86 = arith.constant dense<0.000000e+00> : vector<32x96xf32>
    %211 = tpu.matmul %208, %210, %cst_86 {dimension_numbers = #tpu.dot_dimension_numbers<[1], [0], [0], [1], [0, 0, 1, 1], [], []>} : vector<32x32xbf16>, vector<32x96xbf16>, vector<32x96xf32> -> vector<32x96xf32>
    %c1_87 = arith.constant 1 : index
    %c0_88 = arith.constant 0 : index
    %c0_89 = arith.constant 0 : index
    %212 = vector.load %arg5[%c1_87, %c0_88, %c0_89] : memref<2x1x96xf32, #tpu.memory_space<vmem>>, vector<1x1x96xf32>
    %213 = vector.shape_cast %212 : vector<1x1x96xf32> to vector<1x96xf32>
    %214 = vector.broadcast %213 : vector<1x96xf32> to vector<32x96xf32>
    %215 = arith.addf %211, %214 : vector<32x96xf32>
    %216 = vector.extract_strided_slice %215 {offsets = [0, 0], sizes = [32, 32], strides = [1, 1]} : vector<32x96xf32> to vector<32x32xf32>
    %217 = vector.shape_cast %216 : vector<32x32xf32> to vector<4x8x32xf32>
    %218 = arith.truncf %217 : vector<4x8x32xf32> to vector<4x8x32xbf16>
    %219 = vector.extract_strided_slice %215 {offsets = [0, 32], sizes = [32, 32], strides = [1, 1]} : vector<32x96xf32> to vector<32x32xf32>
    %220 = vector.shape_cast %219 : vector<32x32xf32> to vector<4x8x32xf32>
    %221 = arith.truncf %220 : vector<4x8x32xf32> to vector<4x8x32xbf16>
    %222 = vector.extract_strided_slice %215 {offsets = [0, 64], sizes = [32, 32], strides = [1, 1]} : vector<32x96xf32> to vector<32x32xf32>
    %223 = vector.shape_cast %222 : vector<32x32xf32> to vector<4x8x32xf32>
    %224 = arith.truncf %223 : vector<4x8x32xf32> to vector<4x8x32xbf16>
    %225 = vector.extract_strided_slice %218 {offsets = [0, 0, 0], sizes = [4, 8, 8], strides = [1, 1, 1]} : vector<4x8x32xbf16> to vector<4x8x8xbf16>
    %226 = vector.extract_strided_slice %221 {offsets = [0, 0, 0], sizes = [4, 8, 8], strides = [1, 1, 1]} : vector<4x8x32xbf16> to vector<4x8x8xbf16>
    "tpu.trace_start"() <{level = 10 : i32, message = "bqd,bkd->bqk"}> : () -> ()
    %cst_90 = arith.constant dense<0.000000e+00> : vector<4x8x8xf32>
    %227 = tpu.matmul %225, %226, %cst_90 {dimension_numbers = #tpu.dot_dimension_numbers<[2], [2], [1], [1], [0, 0, 0, 1, 1, 1], [0], [0]>} : vector<4x8x8xbf16>, vector<4x8x8xbf16>, vector<4x8x8xf32> -> vector<4x8x8xf32>
    "tpu.trace_stop"() : () -> ()
    %cst_91 = arith.constant 0.353553385 : f32
    %228 = vector.broadcast %cst_91 : f32 to vector<4x8x8xf32>
    %229 = arith.mulf %227, %228 : vector<4x8x8xf32>
    %cst_92 = arith.constant dense<0xFF800000> : vector<4x8xf32>
    %230 = vector.multi_reduction <maximumf>, %229, %cst_92 [2] : vector<4x8x8xf32> to vector<4x8xf32>
    %231 = vector.shape_cast %230 : vector<4x8xf32> to vector<4x8x1xf32>
    %232 = vector.broadcast %231 : vector<4x8x1xf32> to vector<4x8x8xf32>
    %233 = arith.subf %229, %232 : vector<4x8x8xf32>
    %234 = math.exp %233 : vector<4x8x8xf32>
    %cst_93 = arith.constant dense<0.000000e+00> : vector<4x8xf32>
    %235 = vector.multi_reduction <add>, %234, %cst_93 [2] : vector<4x8x8xf32> to vector<4x8xf32>
    %236 = vector.shape_cast %235 : vector<4x8xf32> to vector<4x8x1xf32>
    %237 = tpu.reciprocal %236 {approx = true} : vector<4x8x1xf32> -> vector<4x8x1xf32>
    %238 = vector.broadcast %237 : vector<4x8x1xf32> to vector<4x8x8xf32>
    %239 = arith.mulf %234, %238 : vector<4x8x8xf32>
    %240 = arith.truncf %239 : vector<4x8x8xf32> to vector<4x8x8xbf16>
    %241 = vector.extract_strided_slice %224 {offsets = [0, 0, 0], sizes = [4, 8, 8], strides = [1, 1, 1]} : vector<4x8x32xbf16> to vector<4x8x8xbf16>
    "tpu.trace_start"() <{level = 10 : i32, message = "bqk,bkd->bqd"}> : () -> ()
    %cst_94 = arith.constant dense<0.000000e+00> : vector<4x8x8xf32>
    %242 = tpu.matmul %240, %241, %cst_94 {dimension_numbers = #tpu.dot_dimension_numbers<[2], [1], [1], [2], [0, 0, 0, 1, 1, 2], [0], [0]>} : vector<4x8x8xbf16>, vector<4x8x8xbf16>, vector<4x8x8xf32> -> vector<4x8x8xf32>
    "tpu.trace_stop"() : () -> ()
    %243 = vector.extract_strided_slice %218 {offsets = [0, 0, 8], sizes = [4, 8, 8], strides = [1, 1, 1]} : vector<4x8x32xbf16> to vector<4x8x8xbf16>
    %244 = vector.extract_strided_slice %221 {offsets = [0, 0, 8], sizes = [4, 8, 8], strides = [1, 1, 1]} : vector<4x8x32xbf16> to vector<4x8x8xbf16>
    "tpu.trace_start"() <{level = 10 : i32, message = "bqd,bkd->bqk"}> : () -> ()
    %cst_95 = arith.constant dense<0.000000e+00> : vector<4x8x8xf32>
    %245 = tpu.matmul %243, %244, %cst_95 {dimension_numbers = #tpu.dot_dimension_numbers<[2], [2], [1], [1], [0, 0, 0, 1, 1, 1], [0], [0]>} : vector<4x8x8xbf16>, vector<4x8x8xbf16>, vector<4x8x8xf32> -> vector<4x8x8xf32>
    "tpu.trace_stop"() : () -> ()
    %cst_96 = arith.constant 0.353553385 : f32
    %246 = vector.broadcast %cst_96 : f32 to vector<4x8x8xf32>
    %247 = arith.mulf %245, %246 : vector<4x8x8xf32>
    %cst_97 = arith.constant dense<0xFF800000> : vector<4x8xf32>
    %248 = vector.multi_reduction <maximumf>, %247, %cst_97 [2] : vector<4x8x8xf32> to vector<4x8xf32>
    %249 = vector.shape_cast %248 : vector<4x8xf32> to vector<4x8x1xf32>
    %250 = vector.broadcast %249 : vector<4x8x1xf32> to vector<4x8x8xf32>
    %251 = arith.subf %247, %250 : vector<4x8x8xf32>
    %252 = math.exp %251 : vector<4x8x8xf32>
    %cst_98 = arith.constant dense<0.000000e+00> : vector<4x8xf32>
    %253 = vector.multi_reduction <add>, %252, %cst_98 [2] : vector<4x8x8xf32> to vector<4x8xf32>
    %254 = vector.shape_cast %253 : vector<4x8xf32> to vector<4x8x1xf32>
    %255 = tpu.reciprocal %254 {approx = true} : vector<4x8x1xf32> -> vector<4x8x1xf32>
    %256 = vector.broadcast %255 : vector<4x8x1xf32> to vector<4x8x8xf32>
    %257 = arith.mulf %252, %256 : vector<4x8x8xf32>
    %258 = arith.truncf %257 : vector<4x8x8xf32> to vector<4x8x8xbf16>
    %259 = vector.extract_strided_slice %224 {offsets = [0, 0, 8], sizes = [4, 8, 8], strides = [1, 1, 1]} : vector<4x8x32xbf16> to vector<4x8x8xbf16>
    "tpu.trace_start"() <{level = 10 : i32, message = "bqk,bkd->bqd"}> : () -> ()
    %cst_99 = arith.constant dense<0.000000e+00> : vector<4x8x8xf32>
    %260 = tpu.matmul %258, %259, %cst_99 {dimension_numbers = #tpu.dot_dimension_numbers<[2], [1], [1], [2], [0, 0, 0, 1, 1, 2], [0], [0]>} : vector<4x8x8xbf16>, vector<4x8x8xbf16>, vector<4x8x8xf32> -> vector<4x8x8xf32>
    "tpu.trace_stop"() : () -> ()
    %261 = vector.extract_strided_slice %218 {offsets = [0, 0, 16], sizes = [4, 8, 8], strides = [1, 1, 1]} : vector<4x8x32xbf16> to vector<4x8x8xbf16>
    %262 = vector.extract_strided_slice %221 {offsets = [0, 0, 16], sizes = [4, 8, 8], strides = [1, 1, 1]} : vector<4x8x32xbf16> to vector<4x8x8xbf16>
    "tpu.trace_start"() <{level = 10 : i32, message = "bqd,bkd->bqk"}> : () -> ()
    %cst_100 = arith.constant dense<0.000000e+00> : vector<4x8x8xf32>
    %263 = tpu.matmul %261, %262, %cst_100 {dimension_numbers = #tpu.dot_dimension_numbers<[2], [2], [1], [1], [0, 0, 0, 1, 1, 1], [0], [0]>} : vector<4x8x8xbf16>, vector<4x8x8xbf16>, vector<4x8x8xf32> -> vector<4x8x8xf32>
    "tpu.trace_stop"() : () -> ()
    %cst_101 = arith.constant 0.353553385 : f32
    %264 = vector.broadcast %cst_101 : f32 to vector<4x8x8xf32>
    %265 = arith.mulf %263, %264 : vector<4x8x8xf32>
    %cst_102 = arith.constant dense<0xFF800000> : vector<4x8xf32>
    %266 = vector.multi_reduction <maximumf>, %265, %cst_102 [2] : vector<4x8x8xf32> to vector<4x8xf32>
    %267 = vector.shape_cast %266 : vector<4x8xf32> to vector<4x8x1xf32>
    %268 = vector.broadcast %267 : vector<4x8x1xf32> to vector<4x8x8xf32>
    %269 = arith.subf %265, %268 : vector<4x8x8xf32>
    %270 = math.exp %269 : vector<4x8x8xf32>
    %cst_103 = arith.constant dense<0.000000e+00> : vector<4x8xf32>
    %271 = vector.multi_reduction <add>, %270, %cst_103 [2] : vector<4x8x8xf32> to vector<4x8xf32>
    %272 = vector.shape_cast %271 : vector<4x8xf32> to vector<4x8x1xf32>
    %273 = tpu.reciprocal %272 {approx = true} : vector<4x8x1xf32> -> vector<4x8x1xf32>
    %274 = vector.broadcast %273 : vector<4x8x1xf32> to vector<4x8x8xf32>
    %275 = arith.mulf %270, %274 : vector<4x8x8xf32>
    %276 = arith.truncf %275 : vector<4x8x8xf32> to vector<4x8x8xbf16>
    %277 = vector.extract_strided_slice %224 {offsets = [0, 0, 16], sizes = [4, 8, 8], strides = [1, 1, 1]} : vector<4x8x32xbf16> to vector<4x8x8xbf16>
    "tpu.trace_start"() <{level = 10 : i32, message = "bqk,bkd->bqd"}> : () -> ()
    %cst_104 = arith.constant dense<0.000000e+00> : vector<4x8x8xf32>
    %278 = tpu.matmul %276, %277, %cst_104 {dimension_numbers = #tpu.dot_dimension_numbers<[2], [1], [1], [2], [0, 0, 0, 1, 1, 2], [0], [0]>} : vector<4x8x8xbf16>, vector<4x8x8xbf16>, vector<4x8x8xf32> -> vector<4x8x8xf32>
    "tpu.trace_stop"() : () -> ()
    %279 = vector.extract_strided_slice %218 {offsets = [0, 0, 24], sizes = [4, 8, 8], strides = [1, 1, 1]} : vector<4x8x32xbf16> to vector<4x8x8xbf16>
    %280 = vector.extract_strided_slice %221 {offsets = [0, 0, 24], sizes = [4, 8, 8], strides = [1, 1, 1]} : vector<4x8x32xbf16> to vector<4x8x8xbf16>
    "tpu.trace_start"() <{level = 10 : i32, message = "bqd,bkd->bqk"}> : () -> ()
    %cst_105 = arith.constant dense<0.000000e+00> : vector<4x8x8xf32>
    %281 = tpu.matmul %279, %280, %cst_105 {dimension_numbers = #tpu.dot_dimension_numbers<[2], [2], [1], [1], [0, 0, 0, 1, 1, 1], [0], [0]>} : vector<4x8x8xbf16>, vector<4x8x8xbf16>, vector<4x8x8xf32> -> vector<4x8x8xf32>
    "tpu.trace_stop"() : () -> ()
    %cst_106 = arith.constant 0.353553385 : f32
    %282 = vector.broadcast %cst_106 : f32 to vector<4x8x8xf32>
    %283 = arith.mulf %281, %282 : vector<4x8x8xf32>
    %cst_107 = arith.constant dense<0xFF800000> : vector<4x8xf32>
    %284 = vector.multi_reduction <maximumf>, %283, %cst_107 [2] : vector<4x8x8xf32> to vector<4x8xf32>
    %285 = vector.shape_cast %284 : vector<4x8xf32> to vector<4x8x1xf32>
    %286 = vector.broadcast %285 : vector<4x8x1xf32> to vector<4x8x8xf32>
    %287 = arith.subf %283, %286 : vector<4x8x8xf32>
    %288 = math.exp %287 : vector<4x8x8xf32>
    %cst_108 = arith.constant dense<0.000000e+00> : vector<4x8xf32>
    %289 = vector.multi_reduction <add>, %288, %cst_108 [2] : vector<4x8x8xf32> to vector<4x8xf32>
    %290 = vector.shape_cast %289 : vector<4x8xf32> to vector<4x8x1xf32>
    %291 = tpu.reciprocal %290 {approx = true} : vector<4x8x1xf32> -> vector<4x8x1xf32>
    %292 = vector.broadcast %291 : vector<4x8x1xf32> to vector<4x8x8xf32>
    %293 = arith.mulf %288, %292 : vector<4x8x8xf32>
    %294 = arith.truncf %293 : vector<4x8x8xf32> to vector<4x8x8xbf16>
    %295 = vector.extract_strided_slice %224 {offsets = [0, 0, 24], sizes = [4, 8, 8], strides = [1, 1, 1]} : vector<4x8x32xbf16> to vector<4x8x8xbf16>
    "tpu.trace_start"() <{level = 10 : i32, message = "bqk,bkd->bqd"}> : () -> ()
    %cst_109 = arith.constant dense<0.000000e+00> : vector<4x8x8xf32>
    %296 = tpu.matmul %294, %295, %cst_109 {dimension_numbers = #tpu.dot_dimension_numbers<[2], [1], [1], [2], [0, 0, 0, 1, 1, 2], [0], [0]>} : vector<4x8x8xbf16>, vector<4x8x8xbf16>, vector<4x8x8xf32> -> vector<4x8x8xf32>
    "tpu.trace_stop"() : () -> ()
    %297 = tpu.concatenate %242, %260, %278, %296 in 2 : vector<4x8x8xf32>, vector<4x8x8xf32>, vector<4x8x8xf32>, vector<4x8x8xf32> -> vector<4x8x32xf32>
    %298 = vector.shape_cast %297 : vector<4x8x32xf32> to vector<32x32xf32>
    %299 = arith.truncf %298 : vector<32x32xf32> to vector<32x32xbf16>
    %c1_110 = arith.constant 1 : index
    %c0_111 = arith.constant 0 : index
    %c0_112 = arith.constant 0 : index
    %300 = vector.load %arg6[%c1_110, %c0_111, %c0_112] : memref<2x32x32xbf16, #tpu.memory_space<vmem>>, vector<1x32x32xbf16>
    %301 = vector.shape_cast %300 : vector<1x32x32xbf16> to vector<32x32xbf16>
    %cst_113 = arith.constant dense<0.000000e+00> : vector<32x32xf32>
    %302 = tpu.matmul %299, %301, %cst_113 {dimension_numbers = #tpu.dot_dimension_numbers<[1], [0], [0], [1], [0, 0, 1, 1], [], []>} : vector<32x32xbf16>, vector<32x32xbf16>, vector<32x32xf32> -> vector<32x32xf32>
    %c1_114 = arith.constant 1 : index
    %c0_115 = arith.constant 0 : index
    %c0_116 = arith.constant 0 : index
    %303 = vector.load %arg7[%c1_114, %c0_115, %c0_116] : memref<2x1x32xf32, #tpu.memory_space<vmem>>, vector<1x1x32xf32>
    %304 = vector.shape_cast %303 : vector<1x1x32xf32> to vector<1x32xf32>
    %305 = vector.broadcast %304 : vector<1x32xf32> to vector<32x32xf32>
    %306 = arith.addf %302, %305 : vector<32x32xf32>
    %307 = arith.addf %207, %306 : vector<32x32xf32>
    %c1_117 = arith.constant 1 : index
    %c0_118 = arith.constant 0 : index
    %c0_119 = arith.constant 0 : index
    %308 = vector.load %arg8[%c1_117, %c0_118, %c0_119] : memref<2x1x32xf32, #tpu.memory_space<vmem>>, vector<1x1x32xf32>
    %309 = vector.shape_cast %308 : vector<1x1x32xf32> to vector<1x32xf32>
    %c1_120 = arith.constant 1 : index
    %c0_121 = arith.constant 0 : index
    %c0_122 = arith.constant 0 : index
    %310 = vector.load %arg9[%c1_120, %c0_121, %c0_122] : memref<2x1x32xf32, #tpu.memory_space<vmem>>, vector<1x1x32xf32>
    %311 = vector.shape_cast %310 : vector<1x1x32xf32> to vector<1x32xf32>
    %cst_123 = arith.constant dense<0.000000e+00> : vector<32xf32>
    %312 = vector.multi_reduction <add>, %307, %cst_123 [1] : vector<32x32xf32> to vector<32xf32>
    %313 = vector.shape_cast %312 : vector<32xf32> to vector<32x1xf32>
    %cst_124 = arith.constant 3.200000e+01 : f32
    %314 = vector.broadcast %cst_124 : f32 to vector<32x1xf32>
    %315 = arith.divf %313, %314 : vector<32x1xf32>
    %316 = vector.broadcast %315 : vector<32x1xf32> to vector<32x32xf32>
    %317 = arith.subf %307, %316 : vector<32x32xf32>
    %318 = arith.mulf %317, %317 : vector<32x32xf32>
    %cst_125 = arith.constant dense<0.000000e+00> : vector<32xf32>
    %319 = vector.multi_reduction <add>, %318, %cst_125 [1] : vector<32x32xf32> to vector<32xf32>
    %320 = vector.shape_cast %319 : vector<32xf32> to vector<32x1xf32>
    %cst_126 = arith.constant 3.200000e+01 : f32
    %321 = vector.broadcast %cst_126 : f32 to vector<32x1xf32>
    %322 = arith.divf %320, %321 : vector<32x1xf32>
    %323 = vector.broadcast %315 : vector<32x1xf32> to vector<32x32xf32>
    %324 = arith.subf %307, %323 : vector<32x32xf32>
    %cst_127 = arith.constant 9.99999974E-6 : f32
    %325 = vector.broadcast %cst_127 : f32 to vector<32x1xf32>
    %326 = arith.addf %322, %325 : vector<32x1xf32>
    %327 = math.rsqrt %326 : vector<32x1xf32>
    %328 = vector.broadcast %327 : vector<32x1xf32> to vector<32x32xf32>
    %329 = arith.mulf %324, %328 : vector<32x32xf32>
    %330 = vector.broadcast %309 : vector<1x32xf32> to vector<32x32xf32>
    %331 = arith.mulf %329, %330 : vector<32x32xf32>
    %332 = vector.broadcast %311 : vector<1x32xf32> to vector<32x32xf32>
    %333 = arith.addf %331, %332 : vector<32x32xf32>
    %334 = arith.truncf %333 : vector<32x32xf32> to vector<32x32xbf16>
    %c1_128 = arith.constant 1 : index
    %c0_129 = arith.constant 0 : index
    %c0_130 = arith.constant 0 : index
    %335 = vector.load %arg10[%c1_128, %c0_129, %c0_130] : memref<2x32x64xbf16, #tpu.memory_space<vmem>>, vector<1x32x64xbf16>
    %336 = vector.shape_cast %335 : vector<1x32x64xbf16> to vector<32x64xbf16>
    %cst_131 = arith.constant dense<0.000000e+00> : vector<32x64xf32>
    %337 = tpu.matmul %334, %336, %cst_131 {dimension_numbers = #tpu.dot_dimension_numbers<[1], [0], [0], [1], [0, 0, 1, 1], [], []>} : vector<32x32xbf16>, vector<32x64xbf16>, vector<32x64xf32> -> vector<32x64xf32>
    %c1_132 = arith.constant 1 : index
    %c0_133 = arith.constant 0 : index
    %c0_134 = arith.constant 0 : index
    %338 = vector.load %arg11[%c1_132, %c0_133, %c0_134] : memref<2x1x64xf32, #tpu.memory_space<vmem>>, vector<1x1x64xf32>
    %339 = vector.shape_cast %338 : vector<1x1x64xf32> to vector<1x64xf32>
    %340 = vector.broadcast %339 : vector<1x64xf32> to vector<32x64xf32>
    %341 = arith.addf %337, %340 : vector<32x64xf32>
    %cst_135 = arith.constant 5.000000e-01 : f32
    %342 = vector.broadcast %cst_135 : f32 to vector<32x64xf32>
    %343 = arith.mulf %342, %341 : vector<32x64xf32>
    %cst_136 = arith.constant 4.471500e-02 : f32
    %344 = vector.broadcast %cst_136 : f32 to vector<32x64xf32>
    %345 = arith.mulf %344, %341 : vector<32x64xf32>
    %346 = arith.mulf %345, %341 : vector<32x64xf32>
    %347 = arith.mulf %346, %341 : vector<32x64xf32>
    %348 = arith.addf %341, %347 : vector<32x64xf32>
    %cst_137 = arith.constant 0.797884583 : f32
    %349 = vector.broadcast %cst_137 : f32 to vector<32x64xf32>
    %350 = arith.mulf %349, %348 : vector<32x64xf32>
    %351 = math.tanh %350 : vector<32x64xf32>
    %cst_138 = arith.constant 1.000000e+00 : f32
    %352 = vector.broadcast %cst_138 : f32 to vector<32x64xf32>
    %353 = arith.addf %352, %351 : vector<32x64xf32>
    %354 = arith.mulf %343, %353 : vector<32x64xf32>
    %355 = arith.truncf %354 : vector<32x64xf32> to vector<32x64xbf16>
    %c1_139 = arith.constant 1 : index
    %c0_140 = arith.constant 0 : index
    %c0_141 = arith.constant 0 : index
    %356 = vector.load %arg12[%c1_139, %c0_140, %c0_141] : memref<2x64x32xbf16, #tpu.memory_space<vmem>>, vector<1x64x32xbf16>
    %357 = vector.shape_cast %356 : vector<1x64x32xbf16> to vector<64x32xbf16>
    %cst_142 = arith.constant dense<0.000000e+00> : vector<32x32xf32>
    %358 = tpu.matmul %355, %357, %cst_142 {dimension_numbers = #tpu.dot_dimension_numbers<[1], [0], [0], [1], [0, 0, 1, 1], [], []>} : vector<32x64xbf16>, vector<64x32xbf16>, vector<32x32xf32> -> vector<32x32xf32>
    %c1_143 = arith.constant 1 : index
    %c0_144 = arith.constant 0 : index
    %c0_145 = arith.constant 0 : index
    %359 = vector.load %arg13[%c1_143, %c0_144, %c0_145] : memref<2x1x32xf32, #tpu.memory_space<vmem>>, vector<1x1x32xf32>
    %360 = vector.shape_cast %359 : vector<1x1x32xf32> to vector<1x32xf32>
    %361 = vector.broadcast %360 : vector<1x32xf32> to vector<32x32xf32>
    %362 = arith.addf %358, %361 : vector<32x32xf32>
    %363 = arith.addf %333, %362 : vector<32x32xf32>
    %c1_146 = arith.constant 1 : index
    %c0_147 = arith.constant 0 : index
    %c0_148 = arith.constant 0 : index
    %364 = vector.load %arg14[%c1_146, %c0_147, %c0_148] : memref<2x1x32xf32, #tpu.memory_space<vmem>>, vector<1x1x32xf32>
    %365 = vector.shape_cast %364 : vector<1x1x32xf32> to vector<1x32xf32>
    %c1_149 = arith.constant 1 : index
    %c0_150 = arith.constant 0 : index
    %c0_151 = arith.constant 0 : index
    %366 = vector.load %arg15[%c1_149, %c0_150, %c0_151] : memref<2x1x32xf32, #tpu.memory_space<vmem>>, vector<1x1x32xf32>
    %367 = vector.shape_cast %366 : vector<1x1x32xf32> to vector<1x32xf32>
    %cst_152 = arith.constant dense<0.000000e+00> : vector<32xf32>
    %368 = vector.multi_reduction <add>, %363, %cst_152 [1] : vector<32x32xf32> to vector<32xf32>
    %369 = vector.shape_cast %368 : vector<32xf32> to vector<32x1xf32>
    %cst_153 = arith.constant 3.200000e+01 : f32
    %370 = vector.broadcast %cst_153 : f32 to vector<32x1xf32>
    %371 = arith.divf %369, %370 : vector<32x1xf32>
    %372 = vector.broadcast %371 : vector<32x1xf32> to vector<32x32xf32>
    %373 = arith.subf %363, %372 : vector<32x32xf32>
    %374 = arith.mulf %373, %373 : vector<32x32xf32>
    %cst_154 = arith.constant dense<0.000000e+00> : vector<32xf32>
    %375 = vector.multi_reduction <add>, %374, %cst_154 [1] : vector<32x32xf32> to vector<32xf32>
    %376 = vector.shape_cast %375 : vector<32xf32> to vector<32x1xf32>
    %cst_155 = arith.constant 3.200000e+01 : f32
    %377 = vector.broadcast %cst_155 : f32 to vector<32x1xf32>
    %378 = arith.divf %376, %377 : vector<32x1xf32>
    %379 = vector.broadcast %371 : vector<32x1xf32> to vector<32x32xf32>
    %380 = arith.subf %363, %379 : vector<32x32xf32>
    %cst_156 = arith.constant 9.99999974E-6 : f32
    %381 = vector.broadcast %cst_156 : f32 to vector<32x1xf32>
    %382 = arith.addf %378, %381 : vector<32x1xf32>
    %383 = math.rsqrt %382 : vector<32x1xf32>
    %384 = vector.broadcast %383 : vector<32x1xf32> to vector<32x32xf32>
    %385 = arith.mulf %380, %384 : vector<32x32xf32>
    %386 = vector.broadcast %365 : vector<1x32xf32> to vector<32x32xf32>
    %387 = arith.mulf %385, %386 : vector<32x32xf32>
    %388 = vector.broadcast %367 : vector<1x32xf32> to vector<32x32xf32>
    %389 = arith.addf %387, %388 : vector<32x32xf32>
    %390 = vector.shape_cast %389 : vector<32x32xf32> to vector<4x8x32xf32>
    %391 = vector.extract_strided_slice %390 {offsets = [0, 0, 0], sizes = [4, 1, 32], strides = [1, 1, 1]} : vector<4x8x32xf32> to vector<4x1x32xf32>
    %392 = vector.shape_cast %391 : vector<4x1x32xf32> to vector<4x32xf32>
    %c0_157 = arith.constant 0 : index
    %c0_158 = arith.constant 0 : index
    %393 = memref.load %arg0[%c0_157, %c0_158] : memref<1x1xf32, #tpu.memory_space<smem>>
    %394 = vector.extract_strided_slice %392 {offsets = [0, 0], sizes = [2, 32], strides = [1, 1]} : vector<4x32xf32> to vector<2x32xf32>
    %395 = vector.broadcast %393 : f32 to vector<2x32xf32>
    %396 = arith.mulf %394, %395 : vector<2x32xf32>
    %397 = vector.extract_strided_slice %392 {offsets = [2, 0], sizes = [2, 32], strides = [1, 1]} : vector<4x32xf32> to vector<2x32xf32>
    %cst_159 = arith.constant 1.000000e+00 : f32
    %398 = arith.subf %cst_159, %393 : f32
    %399 = vector.broadcast %398 : f32 to vector<2x32xf32>
    %400 = arith.mulf %397, %399 : vector<2x32xf32>
    %401 = arith.addf %396, %400 : vector<2x32xf32>
    %402 = arith.truncf %401 : vector<2x32xf32> to vector<2x32xbf16>
    %c0_160 = arith.constant 0 : index
    %c0_161 = arith.constant 0 : index
    %403 = vector.load %arg16[%c0_160, %c0_161] : memref<32x128xbf16, #tpu.memory_space<vmem>>, vector<32x128xbf16>
    %cst_162 = arith.constant dense<0.000000e+00> : vector<2x128xf32>
    %404 = tpu.matmul %402, %403, %cst_162 {dimension_numbers = #tpu.dot_dimension_numbers<[1], [0], [0], [1], [0, 0, 1, 1], [], []>} : vector<2x32xbf16>, vector<32x128xbf16>, vector<2x128xf32> -> vector<2x128xf32>
    %c0_163 = arith.constant 0 : index
    %c0_164 = arith.constant 0 : index
    %405 = vector.load %arg17[%c0_163, %c0_164] : memref<1x128xf32, #tpu.memory_space<vmem>>, vector<1x128xf32>
    %406 = vector.broadcast %405 : vector<1x128xf32> to vector<2x128xf32>
    %407 = arith.addf %404, %406 : vector<2x128xf32>
    %c0_165 = arith.constant 0 : index
    %c0_166 = arith.constant 0 : index
    %408 = vector.load %arg18[%c0_165, %c0_166] : memref<2x128xf32, #tpu.memory_space<vmem>>, vector<2x128xf32>
    tpu.vector_store %arg18[%c0_165, %c0_166], %407 {strides = array<i32>} : memref<2x128xf32, #tpu.memory_space<vmem>>, vector<2x128xf32>,
    return
  }
}

</mosaic_0001>

<llo_original>
// kernel: tpu_custom_call.1
$region0: #{tpu_custom_call.1}
  #allocation0 [shape = 'u32[]', space=smem, size = 0x4, offset = 0x4, fixed_abs, tag = 'smem constant byte address 0x4 - core index']
  #allocation1 [shape = 'u32[144,128]{1,0:T(1,128)}', space=vmem, size = 0x12000, scoped, tag = 'internal scratch']
  #allocation2 [shape = 'f32[1,1]{1,0:T(1,128)S(6)}', space=smem, size = 0x200, scoped, tag = 'scoped memory for tpu_custom_call.1']
  %s0 = inlined_call_operand.<no memory space> [shape: f32[1,1], index: 0, kind: input, shape index: {}]
  %s1 = inlined_call_operand.vmem [shape: f32[4,8,32], index: 1, kind: input, shape index: {}]
  %s2 = inlined_call_operand.hbm [shape: f32[1,32], index: 2, kind: input, shape index: {}]
  %s3 = inlined_call_operand.hbm [shape: f32[1,32], index: 3, kind: input, shape index: {}]
  %s4 = inlined_call_operand.vmem [shape: bf16[2,32,96], index: 4, kind: input, shape index: {}]
  %s5 = inlined_call_operand.hbm [shape: f32[2,1,96], index: 5, kind: input, shape index: {}]
  %s6 = inlined_call_operand.vmem [shape: bf16[2,32,32], index: 6, kind: input, shape index: {}]
  %s7 = inlined_call_operand.hbm [shape: f32[2,1,32], index: 7, kind: input, shape index: {}]
  %s8 = inlined_call_operand.hbm [shape: f32[2,1,32], index: 8, kind: input, shape index: {}]
  %s9 = inlined_call_operand.hbm [shape: f32[2,1,32], index: 9, kind: input, shape index: {}]
  %s10 = inlined_call_operand.hbm [shape: bf16[2,32,64], index: 10, kind: input, shape index: {}]
  %s11 = inlined_call_operand.vmem [shape: f32[2,1,64], index: 11, kind: input, shape index: {}]
  %s12 = inlined_call_operand.vmem [shape: bf16[2,64,32], index: 12, kind: input, shape index: {}]
  %s13 = inlined_call_operand.vmem [shape: f32[2,1,32], index: 13, kind: input, shape index: {}]
  %s14 = inlined_call_operand.vmem [shape: f32[2,1,32], index: 14, kind: input, shape index: {}]
  %s15 = inlined_call_operand.vmem [shape: f32[2,1,32], index: 15, kind: input, shape index: {}]
  %s16 = inlined_call_operand.vmem [shape: bf16[32,128], index: 16, kind: input, shape index: {}]
  %s17 = inlined_call_operand.vmem [shape: f32[1,128], index: 17, kind: input, shape index: {}]
  %s18 = inlined_call_operand.hbm [shape: f32[2,128], index: 18, kind: output, shape index: {}]
  %s19 = sld [smem:[#allocation0]]
  $region110: #{tpu_custom_call.1} parent=0
    _
  %s21 = ssub.s32 1, %s19
  %s22 = scalar_select 0, %s21, %s19
  %23 = sst [smem:[#allocation2]] %s0
  $region1: #{tpu_custom_call.1} parent=0
    #allocation3 [shape = 'u8[512]{0}', space=vmem, size = 0x400, scoped, tag = 'input window, operand 2, single buffered']
    #allocation4 [shape = 's32[1]{0}', space=sflag, size = 0x4, scoped, tag = 'scoped memory for tpu_custom_call.1']
    #allocation5 [shape = 's32[1]{0}', space=sflag, size = 0x4, scoped, tag = 'scoped memory for tpu_custom_call.1']
    #allocation6 [shape = 'u8[512]{0}', space=vmem, size = 0x400, scoped, tag = 'input window, operand 3, single buffered']
    #allocation7 [shape = 's32[1]{0}', space=sflag, size = 0x4, scoped, tag = 'scoped memory for tpu_custom_call.1']
    #allocation8 [shape = 'u8[1024]{0}', space=vmem, size = 0x400, scoped, tag = 'input window, operand 5, single buffered']
    #allocation9 [shape = 'u8[1024]{0}', space=vmem, size = 0x400, scoped, tag = 'input window, operand 7, single buffered']
    #allocation10 [shape = 's32[1]{0}', space=sflag, size = 0x4, scoped, tag = 'scoped memory for tpu_custom_call.1']
    #allocation11 [shape = 'u8[1024]{0}', space=vmem, size = 0x400, scoped, tag = 'input window, operand 8, single buffered']
    #allocation12 [shape = 'u8[1024]{0}', space=vmem, size = 0x400, scoped, tag = 'input window, operand 9, single buffered']
    #allocation13 [shape = 's32[1]{0}', space=sflag, size = 0x4, scoped, tag = 'scoped memory for tpu_custom_call.1']
    #allocation14 [shape = 'u8[16384]{0}', space=vmem, size = 0x4000, scoped, tag = 'input window, operand 10, single buffered']
    #allocation15 [shape = 'u8[1024]{0}', space=vmem, size = 0x400, scoped, tag = 'output window, operand 0, single buffered']
    %24 = vsyncpa [#allocation4], 0
    %25 = vsyncpa [#allocation7], 0
    %26 = vsyncpa [#allocation10], 0
    %27 = vsyncpa [#allocation13], 0
    %28 = vsyncpa [#allocation5], 0
    // Predicated region
    $region2: #{tpu_custom_call.1} parent=1 // pred_check
      _
    $region3: #{tpu_custom_call.1} parent=1 // pred_check_branch
      %30 = sbr.rel (0) target = $region5
    $region4: #{tpu_custom_call.1} parent=1 // pred_region
      _
    $region5: #{tpu_custom_call.1} parent=1 // pred_fallthru
      _
    // Predicated region
    $region6: #{tpu_custom_call.1} parent=1 // pred_check
      _
    $region7: #{tpu_custom_call.1} parent=1 // pred_check_branch
      %32 = sbr.rel (0) target = $region9
    $region8: #{tpu_custom_call.1} parent=1 // pred_region
      _
    $region9: #{tpu_custom_call.1} parent=1 // pred_fallthru
      _
    // Predicated region
    $region10: #{tpu_custom_call.1} parent=1 // pred_check
      _
    $region11: #{tpu_custom_call.1} parent=1 // pred_check_branch
      %34 = sbr.rel (0) target = $region13
    $region12: #{tpu_custom_call.1} parent=1 // pred_region
      %s36 = ssub.s32 16, 16
      %37 = vsyncadd [#allocation4], %s36
      %s39 = sshll.u32 [#allocation3], 4
      %s40 = int_to_ptr.vmem [resolvable:$true] %s39
      %42 = dma.hbm_to_vmem [thread:$0]  %s2, 16, %s40, [#allocation4]
    $region13: #{tpu_custom_call.1} parent=1 // pred_fallthru
      _
    // Predicated region
    $region14: #{tpu_custom_call.1} parent=1 // pred_check
      _
    $region15: #{tpu_custom_call.1} parent=1 // pred_check_branch
      %44 = sbr.rel (0) target = $region17
    $region16: #{tpu_custom_call.1} parent=1 // pred_region
      %s46 = ssub.s32 16, 16
      %47 = vsyncadd [#allocation7], %s46
      %s49 = sshll.u32 [#allocation6], 4
      %s50 = int_to_ptr.vmem [resolvable:$true] %s49
      %52 = dma.hbm_to_vmem [thread:$0]  %s3, 16, %s50, [#allocation7]
    $region17: #{tpu_custom_call.1} parent=1 // pred_fallthru
      _
    // Predicated region
    $region18: #{tpu_custom_call.1} parent=1 // pred_check
      _
    $region19: #{tpu_custom_call.1} parent=1 // pred_check_branch
      %54 = sbr.rel (0) target = $region21
    $region20: #{tpu_custom_call.1} parent=1 // pred_region
      _
    $region21: #{tpu_custom_call.1} parent=1 // pred_fallthru
      _
    // Predicated region
    $region22: #{tpu_custom_call.1} parent=1 // pred_check
      _
    $region23: #{tpu_custom_call.1} parent=1 // pred_check_branch
      %56 = sbr.rel (0) target = $region25
    $region24: #{tpu_custom_call.1} parent=1 // pred_region
      %s58 = ssub.s32 32, 32
      %59 = vsyncadd [#allocation7], %s58
      %s60 = sshll.u32 [#allocation8], 4
      %s61 = int_to_ptr.vmem [resolvable:$true] %s60
      %66 = dma.hbm_to_vmem [thread:$0]  %s5, 32, %s61, [#allocation7], 16, 16, 1
    $region25: #{tpu_custom_call.1} parent=1 // pred_fallthru
      _
    // Predicated region
    $region26: #{tpu_custom_call.1} parent=1 // pred_check
      _
    $region27: #{tpu_custom_call.1} parent=1 // pred_check_branch
      %68 = sbr.rel (0) target = $region29
    $region28: #{tpu_custom_call.1} parent=1 // pred_region
      _
    $region29: #{tpu_custom_call.1} parent=1 // pred_fallthru
      _
    // Predicated region
    $region30: #{tpu_custom_call.1} parent=1 // pred_check
      _
    $region31: #{tpu_custom_call.1} parent=1 // pred_check_branch
      %70 = sbr.rel (0) target = $region33
    $region32: #{tpu_custom_call.1} parent=1 // pred_region
      %s72 = ssub.s32 32, 32
      %73 = vsyncadd [#allocation10], %s72
      %s74 = sshll.u32 [#allocation9], 4
      %s75 = int_to_ptr.vmem [resolvable:$true] %s74
      %80 = dma.hbm_to_vmem [thread:$0]  %s7, 32, %s75, [#allocation10], 16, 16, 1
    $region33: #{tpu_custom_call.1} parent=1 // pred_fallthru
      _
    // Predicated region
    $region34: #{tpu_custom_call.1} parent=1 // pred_check
      _
    $region35: #{tpu_custom_call.1} parent=1 // pred_check_branch
      %82 = sbr.rel (0) target = $region37
    $region36: #{tpu_custom_call.1} parent=1 // pred_region
      %s84 = ssub.s32 32, 32
      %85 = vsyncadd [#allocation10], %s84
      %s86 = sshll.u32 [#allocation11], 4
      %s87 = int_to_ptr.vmem [resolvable:$true] %s86
      %92 = dma.hbm_to_vmem [thread:$0]  %s8, 32, %s87, [#allocation10], 16, 16, 1
    $region37: #{tpu_custom_call.1} parent=1 // pred_fallthru
      _
    // Predicated region
    $region38: #{tpu_custom_call.1} parent=1 // pred_check
      _
    $region39: #{tpu_custom_call.1} parent=1 // pred_check_branch
      %94 = sbr.rel (0) target = $region41
    $region40: #{tpu_custom_call.1} parent=1 // pred_region
      %s96 = ssub.s32 32, 32
      %97 = vsyncadd [#allocation13], %s96
      %s98 = sshll.u32 [#allocation12], 4
      %s99 = int_to_ptr.vmem [resolvable:$true] %s98
      %104 = dma.hbm_to_vmem [thread:$0]  %s9, 32, %s99, [#allocation13], 16, 16, 1
    $region41: #{tpu_custom_call.1} parent=1 // pred_fallthru
      _
    // Predicated region
    $region42: #{tpu_custom_call.1} parent=1 // pred_check
      _
    $region43: #{tpu_custom_call.1} parent=1 // pred_check_branch
      %106 = sbr.rel (0) target = $region45
    $region44: #{tpu_custom_call.1} parent=1 // pred_region
      %s108 = ssub.s32 512, 512
      %109 = vsyncadd [#allocation13], %s108
      %s110 = sshll.u32 [#allocation14], 4
      %s111 = int_to_ptr.vmem [resolvable:$true] %s110
      %116 = dma.hbm_to_vmem [thread:$0]  %s10, 512, %s111, [#allocation13], 64, 64, 4
    $region45: #{tpu_custom_call.1} parent=1 // pred_fallthru
      _
    // Predicated region
    $region46: #{tpu_custom_call.1} parent=1 // pred_check
      _
    $region47: #{tpu_custom_call.1} parent=1 // pred_check_branch
      %118 = sbr.rel (0) target = $region49
    $region48: #{tpu_custom_call.1} parent=1 // pred_region
      _
    $region49: #{tpu_custom_call.1} parent=1 // pred_fallthru
      _
    // Predicated region
    $region50: #{tpu_custom_call.1} parent=1 // pred_check
      _
    $region51: #{tpu_custom_call.1} parent=1 // pred_check_branch
      %120 = sbr.rel (0) target = $region53
    $region52: #{tpu_custom_call.1} parent=1 // pred_region
      _
    $region53: #{tpu_custom_call.1} parent=1 // pred_fallthru
      _
    // Predicated region
    $region54: #{tpu_custom_call.1} parent=1 // pred_check
      _
    $region55: #{tpu_custom_call.1} parent=1 // pred_check_branch
      %122 = sbr.rel (0) target = $region57
    $region56: #{tpu_custom_call.1} parent=1 // pred_region
      _
    $region57: #{tpu_custom_call.1} parent=1 // pred_fallthru
      _
    // Predicated region
    $region58: #{tpu_custom_call.1} parent=1 // pred_check
      _
    $region59: #{tpu_custom_call.1} parent=1 // pred_check_branch
      %124 = sbr.rel (0) target = $region61
    $region60: #{tpu_custom_call.1} parent=1 // pred_region
      _
    $region61: #{tpu_custom_call.1} parent=1 // pred_fallthru
      _
    // Predicated region
    $region62: #{tpu_custom_call.1} parent=1 // pred_check
      _
    $region63: #{tpu_custom_call.1} parent=1 // pred_check_branch
      %126 = sbr.rel (0) target = $region65
    $region64: #{tpu_custom_call.1} parent=1 // pred_region
      _
    $region65: #{tpu_custom_call.1} parent=1 // pred_fallthru
      _
    // Predicated region
    $region66: #{tpu_custom_call.1} parent=1 // pred_check
      _
    $region67: #{tpu_custom_call.1} parent=1 // pred_check_branch
      %128 = sbr.rel (0) target = $region69
    $region68: #{tpu_custom_call.1} parent=1 // pred_region
      _
    $region69: #{tpu_custom_call.1} parent=1 // pred_fallthru
      _
    // Predicated region
    $region70: #{tpu_custom_call.1} parent=1 // pred_check
      _
    $region71: #{tpu_custom_call.1} parent=1 // pred_check_branch
      %130 = sbr.rel (0) target = $region73
    $region72: #{tpu_custom_call.1} parent=1 // pred_region
      _
    $region73: #{tpu_custom_call.1} parent=1 // pred_fallthru
      _
    // Predicated region
    $region74: #{tpu_custom_call.1} parent=1 // pred_check
      _
    $region75: #{tpu_custom_call.1} parent=1 // pred_check_branch
      %132 = sbr.rel (0) target = $region77
    $region76: #{tpu_custom_call.1} parent=1 // pred_region
      %133 = dma.done [#allocation4], 16
    $region77: #{tpu_custom_call.1} parent=1 // pred_fallthru
      _
    // Predicated region
    $region78: #{tpu_custom_call.1} parent=1 // pred_check
      _
    $region79: #{tpu_custom_call.1} parent=1 // pred_check_branch
      %135 = sbr.rel (0) target = $region81
    $region80: #{tpu_custom_call.1} parent=1 // pred_region
      %136 = dma.done [#allocation7], 16
    $region81: #{tpu_custom_call.1} parent=1 // pred_fallthru
      _
    // Predicated region
    $region82: #{tpu_custom_call.1} parent=1 // pred_check
      _
    $region83: #{tpu_custom_call.1} parent=1 // pred_check_branch
      %138 = sbr.rel (0) target = $region85
    $region84: #{tpu_custom_call.1} parent=1 // pred_region
      %139 = dma.done [#allocation7], 32
    $region85: #{tpu_custom_call.1} parent=1 // pred_fallthru
      _
    // Predicated region
    $region86: #{tpu_custom_call.1} parent=1 // pred_check
      _
    $region87: #{tpu_custom_call.1} parent=1 // pred_check_branch
      %141 = sbr.rel (0) target = $region89
    $region88: #{tpu_custom_call.1} parent=1 // pred_region
      %142 = dma.done [#allocation10], 32
    $region89: #{tpu_custom_call.1} parent=1 // pred_fallthru
      _
    // Predicated region
    $region90: #{tpu_custom_call.1} parent=1 // pred_check
      _
    $region91: #{tpu_custom_call.1} parent=1 // pred_check_branch
      %144 = sbr.rel (0) target = $region93
    $region92: #{tpu_custom_call.1} parent=1 // pred_region
      %145 = dma.done [#allocation10], 32
    $region93: #{tpu_custom_call.1} parent=1 // pred_fallthru
      _
    // Predicated region
    $region94: #{tpu_custom_call.1} parent=1 // pred_check
      _
    $region95: #{tpu_custom_call.1} parent=1 // pred_check_branch
      %147 = sbr.rel (0) target = $region97
    $region96: #{tpu_custom_call.1} parent=1 // pred_region
      %148 = dma.done [#allocation13], 32
    $region97: #{tpu_custom_call.1} parent=1 // pred_fallthru
      _
    // Predicated region
    $region98: #{tpu_custom_call.1} parent=1 // pred_check
      _
    $region99: #{tpu_custom_call.1} parent=1 // pred_check_branch
      %150 = sbr.rel (0) target = $region101
    $region100: #{tpu_custom_call.1} parent=1 // pred_region
      %151 = dma.done [#allocation13], 512
    $region101: #{tpu_custom_call.1} parent=1 // pred_fallthru
      _
    %v153 = vld [vmem:[%s1] sm:$0xff]
    %v154 = vld [vmem:[%s1 + $0x8] sm:$0xff]
    %v155 = vld [vmem:[%s1 + $0x10] sm:$0xff]
    %v156 = vld [vmem:[%s1 + $0x18] sm:$0xff]
    %v157 = vld [vmem:[#allocation3] sm:$0x1]
    %v158 = vld [vmem:[#allocation6] sm:$0x1]
    %vm159 = vcmask 261120
    %v160 = vsel %vm159, %v153, 0.0
    %161 = vadd.xlane.f32.xlu0 %v160
    %v162 = vpop.xlane.xlu0 %161
    %v163 = vsel %vm159, %v154, 0.0
    %164 = vadd.xlane.f32.xlu0 %v163
    %v165 = vpop.xlane.xlu0 %164
    %v166 = vsel %vm159, %v155, 0.0
    %167 = vadd.xlane.f32.xlu0 %v166
    %v168 = vpop.xlane.xlu0 %167
    %v169 = vsel %vm159, %v156, 0.0
    %170 = vadd.xlane.f32.xlu0 %v169
    %v171 = vpop.xlane.xlu0 %170
    %v172 = vrcp.pop 32.0
    %v173 = vmul.f32 %v162, %v172
    %v174 = vmul.f32 %v165, %v172
    %v175 = vmul.f32 %v168, %v172
    %v176 = vmul.f32 %v171, %v172
    %v177 = vsub.f32 %v153, %v173
    %v178 = vsub.f32 %v154, %v174
    %v179 = vsub.f32 %v155, %v175
    %v180 = vsub.f32 %v156, %v176
    %v181 = vmul.f32 %v177, %v177
    %v182 = vmul.f32 %v178, %v178
    %v183 = vmul.f32 %v179, %v179
    %v184 = vmul.f32 %v180, %v180
    %v185 = vsel %vm159, %v181, 0.0
    %186 = vadd.xlane.f32.xlu0 %v185
    %v187 = vpop.xlane.xlu0 %186
    %v188 = vsel %vm159, %v182, 0.0
    %189 = vadd.xlane.f32.xlu0 %v188
    %v190 = vpop.xlane.xlu0 %189
    %v191 = vsel %vm159, %v183, 0.0
    %192 = vadd.xlane.f32.xlu0 %v191
    %v193 = vpop.xlane.xlu0 %192
    %v194 = vsel %vm159, %v184, 0.0
    %195 = vadd.xlane.f32.xlu0 %v194
    %v196 = vpop.xlane.xlu0 %195
    %v197 = vmul.f32 %v187, %v172
    %v198 = vmul.f32 %v190, %v172
    %v199 = vmul.f32 %v193, %v172
    %v200 = vmul.f32 %v196, %v172
    %v201 = vadd.f32 %v197, 1e-05
    %v202 = vadd.f32 %v198, 1e-05
    %v203 = vadd.f32 %v199, 1e-05
    %v204 = vadd.f32 %v200, 1e-05
    %v205 = vrsqrt.pop %v201
    %v206 = vrsqrt.pop %v202
    %v207 = vrsqrt.pop %v203
    %v208 = vrsqrt.pop %v204
    %v209 = vmul.f32 %v177, %v205
    %v210 = vmul.f32 %v178, %v206
    %v211 = vmul.f32 %v179, %v207
    %v212 = vmul.f32 %v180, %v208
    %v214 = vlaneseq
    %v215 = vshrl.u32 %v214, 7
    %v216 = vsub.s32 0, %v215
    %v217 = vrot.slane %v157, %v216
    %v219 = vmul.f32 %v209, %v217
    %v220 = vmul.f32 %v210, %v217
    %v221 = vmul.f32 %v211, %v217
    %v222 = vmul.f32 %v212, %v217
    %v224 = vlaneseq
    %v225 = vshrl.u32 %v224, 7
    %v226 = vsub.s32 0, %v225
    %v227 = vrot.slane %v158, %v226
    %v229 = vadd.f32 %v219, %v227
    %v230 = vadd.f32 %v220, %v227
    %v231 = vadd.f32 %v221, %v227
    %v232 = vadd.f32 %v222, %v227
    %v233 = vpack.c.bf16 %v230, %v229
    %v234 = vpack.c.bf16 %v232, %v231
    %v235 = vld [vmem:[%s4] sm:$0xf]
    %v236 = vld [vmem:[%s4 + $0x4] sm:$0xf]
    %v237 = vld [vmem:[%s4 + $0x8] sm:$0xf]
    %v238 = vld [vmem:[%s4 + $0xc] sm:$0xf]
    %v239 = vld [vmem:[#allocation8] sm:$0x1]
    %v241 = vlaneseq
    %v242 = vshrl.u32 %v241, 7
    %v243 = vsub.s32 0, %v242
    %v244 = vrot.slane %v239, %v243
    %v250 = vunpack.c.l.b16 %v235
    %v251 = vunpack.c.l.b16 %v236
    %v252 = vunpack.c.l.b16 %v237
    %v253 = vunpack.c.l.b16 %v238
    %v254 = vpack.c.b16 %v251, %v250
    %v255 = vpack.c.b16 %v253, %v252
    %v259 = vsel %vm159, %v233, 0
    %v262 = vsel %vm159, %v234, 0
    %264 = vmatprep.subr.bf16.mxu0 0
    %265 = vmatpush1.bf16.msra.mxu0 0
    %266 = vmatprep.subr.bf16.mxu0 0
    %267 = vmatpush1.bf16.msra.mxu0 0
    %268 = vmatprep.subr.bf16.mxu0 0
    %269 = vmatpush1.bf16.msra.mxu0 0
    %270 = vmatprep.subr.bf16.mxu0 0
    %271 = vmatpush1.bf16.msra.mxu0 0
    %272 = vmatprep.subr.bf16.mxu0 0
    %273 = vmatpush1.bf16.msra.mxu0 0
    %274 = vmatprep.subr.bf16.mxu0 0
    %275 = vmatpush1.bf16.msra.mxu0 0
    %276 = vmatprep.subr.bf16.mxu0 0
    %277 = vmatpush1.bf16.msra.mxu0 %v255
    %278 = vmatprep.subr.bf16.mxu0 0
    %279 = vmatpush1.bf16.msra.mxu0 %v254
    %280 = vmatprep.subr.bf16.mxu0 0
    %281 = vmatpush2.bf16.msra.mxu0 0
    %282 = vmatprep.subr.bf16.mxu0 0
    %283 = vmatpush2.bf16.msra.mxu0 0
    %284 = vmatprep.subr.bf16.mxu0 0
    %285 = vmatpush2.bf16.msra.mxu0 0
    %286 = vmatprep.subr.bf16.mxu0 0
    %287 = vmatpush2.bf16.msra.mxu0 0
    %288 = vmatprep.subr.bf16.mxu0 0
    %289 = vmatpush2.bf16.msra.mxu0 0
    %290 = vmatprep.subr.bf16.mxu0 0
    %291 = vmatpush2.bf16.msra.mxu0 0
    %292 = vmatprep.subr.bf16.mxu0 0
    %293 = vmatpush2.bf16.msra.mxu0 0
    %294 = vmatprep.subr.bf16.mxu0 0
    %295 = vmatpush2.bf16.msra.mxu0 0
    %296 = vmatprep.mubr.bf16.mxu0 0
    %297 = vmatmul.mubr.bf16.gmra.mxu0 %v259
    %v298 = vpop.f32.mrf.mxu0
    %v299 = vadd.f32 %v244, %v298
    %v300 = vpop.f32.mrf.mxu0
    %v301 = vpop.f32.mrf.mxu0
    %v302 = vadd.f32 %v244, %v301
    %v303 = vpop.f32.mrf.mxu0
    %304 = vmatprep.mubr.bf16.mxu0 0
    %305 = vmatmul.mubr.bf16.gmra.mxu0 %v262
    %v306 = vpop.f32.mrf.mxu0
    %v307 = vadd.f32 %v244, %v306
    %v308 = vpop.f32.mrf.mxu0
    %v309 = vpop.f32.mrf.mxu0
    %v310 = vadd.f32 %v244, %v309
    %v311 = vpop.f32.mrf.mxu0
    %312 = vdwg.mxu0
    %v313 = vpack.c.bf16 %v299, %v299
    %v314 = vpack.c.bf16 %v302, %v302
    %v315 = vpack.c.bf16 %v307, %v307
    %v316 = vpack.c.bf16 %v310, %v310
    %318 = vrot.lane.b32.xlu0 %v313, 96
    %v319 = vpop.permute.xlu0 %318
    %vm320 = vcmask 64512
    %v322 = vsel %vm320, %v313, 0
    %v325 = vsel %vm320, %v319, 0
    %327 = vmatprep.subr.bf16.mxu0 0
    %328 = vmatpush1.bf16.xpose.msra.mxu0 0
    %329 = vmatprep.subr.bf16.mxu0 0
    %330 = vmatpush1.bf16.xpose.msra.mxu0 0
    %331 = vmatprep.subr.bf16.mxu0 0
    %332 = vmatpush1.bf16.xpose.msra.mxu0 0
    %333 = vmatprep.subr.bf16.mxu0 0
    %334 = vmatpush1.bf16.xpose.msra.mxu0 0
    %335 = vmatprep.subr.bf16.mxu0 0
    %336 = vmatpush1.bf16.xpose.msra.mxu0 0
    %337 = vmatprep.subr.bf16.mxu0 0
    %338 = vmatpush1.bf16.xpose.msra.mxu0 0
    %339 = vmatprep.subr.bf16.mxu0 0
    %340 = vmatpush1.bf16.xpose.msra.mxu0 0
    %341 = vmatprep.subr.bf16.mxu0 0
    %342 = vmatpush1.bf16.xpose.msra.mxu0 %v325
    %343 = vmatprep.subr.bf16.mxu0 0
    %344 = vmatpush2.bf16.xpose.msra.mxu0 0
    %345 = vmatprep.subr.bf16.mxu0 0
    %346 = vmatpush2.bf16.xpose.msra.mxu0 0
    %347 = vmatprep.subr.bf16.mxu0 0
    %348 = vmatpush2.bf16.xpose.msra.mxu0 0
    %349 = vmatprep.subr.bf16.mxu0 0
    %350 = vmatpush2.bf16.xpose.msra.mxu0 0
    %351 = vmatprep.subr.bf16.mxu0 0
    %352 = vmatpush2.bf16.xpose.msra.mxu0 0
    %353 = vmatprep.subr.bf16.mxu0 0
    %354 = vmatpush2.bf16.xpose.msra.mxu0 0
    %355 = vmatprep.subr.bf16.mxu0 0
    %356 = vmatpush2.bf16.xpose.msra.mxu0 0
    %357 = vmatprep.subr.bf16.mxu0 0
    %358 = vmatpush2.bf16.xpose.msra.mxu0 0
    %359 = vmatprep.mubr.bf16.mxu0 0
    %360 = vmatmul.mubr.bf16.gmra.mxu0 %v322
    %v361 = vpop.f32.mrf.mxu0
    %v362 = vadd.f32 0.0, %v361
    %v363 = vpop.f32.mrf.mxu0
    %v364 = vpop.f32.mrf.mxu0
    %v365 = vpop.f32.mrf.mxu0
    %366 = vdwg.mxu0
    %368 = vrot.lane.b32.xlu0 %v314, 96
    %v369 = vpop.permute.xlu0 %368
    %v371 = vsel %vm320, %v314, 0
    %v374 = vsel %vm320, %v369, 0
    %376 = vmatprep.subr.bf16.mxu0 0
    %377 = vmatpush1.bf16.xpose.msra.mxu0 0
    %378 = vmatprep.subr.bf16.mxu0 0
    %379 = vmatpush1.bf16.xpose.msra.mxu0 0
    %380 = vmatprep.subr.bf16.mxu0 0
    %381 = vmatpush1.bf16.xpose.msra.mxu0 0
    %382 = vmatprep.subr.bf16.mxu0 0
    %383 = vmatpush1.bf16.xpose.msra.mxu0 0
    %384 = vmatprep.subr.bf16.mxu0 0
    %385 = vmatpush1.bf16.xpose.msra.mxu0 0
    %386 = vmatprep.subr.bf16.mxu0 0
    %387 = vmatpush1.bf16.xpose.msra.mxu0 0
    %388 = vmatprep.subr.bf16.mxu0 0
    %389 = vmatpush1.bf16.xpose.msra.mxu0 0
    %390 = vmatprep.subr.bf16.mxu0 0
    %391 = vmatpush1.bf16.xpose.msra.mxu0 %v374
    %392 = vmatprep.subr.bf16.mxu0 0
    %393 = vmatpush2.bf16.xpose.msra.mxu0 0
    %394 = vmatprep.subr.bf16.mxu0 0
    %395 = vmatpush2.bf16.xpose.msra.mxu0 0
    %396 = vmatprep.subr.bf16.mxu0 0
    %397 = vmatpush2.bf16.xpose.msra.mxu0 0
    %398 = vmatprep.subr.bf16.mxu0 0
    %399 = vmatpush2.bf16.xpose.msra.mxu0 0
    %400 = vmatprep.subr.bf16.mxu0 0
    %401 = vmatpush2.bf16.xpose.msra.mxu0 0
    %402 = vmatprep.subr.bf16.mxu0 0
    %403 = vmatpush2.bf16.xpose.msra.mxu0 0
    %404 = vmatprep.subr.bf16.mxu0 0
    %405 = vmatpush2.bf16.xpose.msra.mxu0 0
    %406 = vmatprep.subr.bf16.mxu0 0
    %407 = vmatpush2.bf16.xpose.msra.mxu0 0
    %408 = vmatprep.mubr.bf16.mxu0 0
    %409 = vmatmul.mubr.bf16.gmra.mxu0 %v371
    %v410 = vpop.f32.mrf.mxu0
    %v411 = vadd.f32 0.0, %v410
    %v412 = vpop.f32.mrf.mxu0
    %v413 = vpop.f32.mrf.mxu0
    %v414 = vpop.f32.mrf.mxu0
    %415 = vdwg.mxu0
    %417 = vrot.lane.b32.xlu0 %v315, 96
    %v418 = vpop.permute.xlu0 %417
    %v420 = vsel %vm320, %v315, 0
    %v423 = vsel %vm320, %v418, 0
    %425 = vmatprep.subr.bf16.mxu0 0
    %426 = vmatpush1.bf16.xpose.msra.mxu0 0
    %427 = vmatprep.subr.bf16.mxu0 0
    %428 = vmatpush1.bf16.xpose.msra.mxu0 0
    %429 = vmatprep.subr.bf16.mxu0 0
    %430 = vmatpush1.bf16.xpose.msra.mxu0 0
    %431 = vmatprep.subr.bf16.mxu0 0
    %432 = vmatpush1.bf16.xpose.msra.mxu0 0
    %433 = vmatprep.subr.bf16.mxu0 0
    %434 = vmatpush1.bf16.xpose.msra.mxu0 0
    %435 = vmatprep.subr.bf16.mxu0 0
    %436 = vmatpush1.bf16.xpose.msra.mxu0 0
    %437 = vmatprep.subr.bf16.mxu0 0
    %438 = vmatpush1.bf16.xpose.msra.mxu0 0
    %439 = vmatprep.subr.bf16.mxu0 0
    %440 = vmatpush1.bf16.xpose.msra.mxu0 %v423
    %441 = vmatprep.subr.bf16.mxu0 0
    %442 = vmatpush2.bf16.xpose.msra.mxu0 0
    %443 = vmatprep.subr.bf16.mxu0 0
    %444 = vmatpush2.bf16.xpose.msra.mxu0 0
    %445 = vmatprep.subr.bf16.mxu0 0
    %446 = vmatpush2.bf16.xpose.msra.mxu0 0
    %447 = vmatprep.subr.bf16.mxu0 0
    %448 = vmatpush2.bf16.xpose.msra.mxu0 0
    %449 = vmatprep.subr.bf16.mxu0 0
    %450 = vmatpush2.bf16.xpose.msra.mxu0 0
    %451 = vmatprep.subr.bf16.mxu0 0
    %452 = vmatpush2.bf16.xpose.msra.mxu0 0
    %453 = vmatprep.subr.bf16.mxu0 0
    %454 = vmatpush2.bf16.xpose.msra.mxu0 0
    %455 = vmatprep.subr.bf16.mxu0 0
    %456 = vmatpush2.bf16.xpose.msra.mxu0 0
    %457 = vmatprep.mubr.bf16.mxu0 0
    %458 = vmatmul.mubr.bf16.gmra.mxu0 %v420
    %v459 = vpop.f32.mrf.mxu0
    %v460 = vadd.f32 0.0, %v459
    %v461 = vpop.f32.mrf.mxu0
    %v462 = vpop.f32.mrf.mxu0
    %v463 = vpop.f32.mrf.mxu0
    %464 = vdwg.mxu0
    %466 = vrot.lane.b32.xlu0 %v316, 96
    %v467 = vpop.permute.xlu0 %466
    %v469 = vsel %vm320, %v316, 0
    %v472 = vsel %vm320, %v467, 0
    %474 = vmatprep.subr.bf16.mxu0 0
    %475 = vmatpush1.bf16.xpose.msra.mxu0 0
    %476 = vmatprep.subr.bf16.mxu0 0
    %477 = vmatpush1.bf16.xpose.msra.mxu0 0
    %478 = vmatprep.subr.bf16.mxu0 0
    %479 = vmatpush1.bf16.xpose.msra.mxu0 0
    %480 = vmatprep.subr.bf16.mxu0 0
    %481 = vmatpush1.bf16.xpose.msra.mxu0 0
    %482 = vmatprep.subr.bf16.mxu0 0
    %483 = vmatpush1.bf16.xpose.msra.mxu0 0
    %484 = vmatprep.subr.bf16.mxu0 0
    %485 = vmatpush1.bf16.xpose.msra.mxu0 0
    %486 = vmatprep.subr.bf16.mxu0 0
    %487 = vmatpush1.bf16.xpose.msra.mxu0 0
    %488 = vmatprep.subr.bf16.mxu0 0
    %489 = vmatpush1.bf16.xpose.msra.mxu0 %v472
    %490 = vmatprep.subr.bf16.mxu0 0
    %491 = vmatpush2.bf16.xpose.msra.mxu0 0
    %492 = vmatprep.subr.bf16.mxu0 0
    %493 = vmatpush2.bf16.xpose.msra.mxu0 0
    %494 = vmatprep.subr.bf16.mxu0 0
    %495 = vmatpush2.bf16.xpose.msra.mxu0 0
    %496 = vmatprep.subr.bf16.mxu0 0
    %497 = vmatpush2.bf16.xpose.msra.mxu0 0
    %498 = vmatprep.subr.bf16.mxu0 0
    %499 = vmatpush2.bf16.xpose.msra.mxu0 0
    %500 = vmatprep.subr.bf16.mxu0 0
    %501 = vmatpush2.bf16.xpose.msra.mxu0 0
    %502 = vmatprep.subr.bf16.mxu0 0
    %503 = vmatpush2.bf16.xpose.msra.mxu0 0
    %504 = vmatprep.subr.bf16.mxu0 0
    %505 = vmatpush2.bf16.xpose.msra.mxu0 0
    %506 = vmatprep.mubr.bf16.mxu0 0
    %507 = vmatmul.mubr.bf16.gmra.mxu0 %v469
    %v508 = vpop.f32.mrf.mxu0
    %v509 = vadd.f32 0.0, %v508
    %v510 = vpop.f32.mrf.mxu0
    %v511 = vpop.f32.mrf.mxu0
    %v512 = vpop.f32.mrf.mxu0
    %513 = vdwg.mxu0
    %v514 = vmul.f32 %v362, 0.35355338
    %v515 = vmul.f32 %v411, 0.35355338
    %v516 = vmul.f32 %v460, 0.35355338
    %v517 = vmul.f32 %v509, 0.35355338
    %v518 = vsel %vm320, %v514, -inf
    %519 = vmax.xlane.f32.xlu0 %v518
    %v520 = vpop.xlane.xlu0 %519
    %v521 = vsel %vm320, %v515, -inf
    %522 = vmax.xlane.f32.xlu0 %v521
    %v523 = vpop.xlane.xlu0 %522
    %v524 = vsel %vm320, %v516, -inf
    %525 = vmax.xlane.f32.xlu0 %v524
    %v526 = vpop.xlane.xlu0 %525
    %v527 = vsel %vm320, %v517, -inf
    %528 = vmax.xlane.f32.xlu0 %v527
    %v529 = vpop.xlane.xlu0 %528
    %v530 = vsub.f32 %v514, %v520
    %v531 = vsub.f32 %v515, %v523
    %v532 = vsub.f32 %v516, %v526
    %v533 = vsub.f32 %v517, %v529
    %v534 = vmul.f32 %v530, 1.442695
    %v535 = vpow.pop %v534
    %v536 = vmul.f32 %v531, 1.442695
    %v537 = vpow.pop %v536
    %v538 = vmul.f32 %v532, 1.442695
    %v539 = vpow.pop %v538
    %v540 = vmul.f32 %v533, 1.442695
    %v541 = vpow.pop %v540
    %v542 = vsel %vm320, %v535, 0.0
    %543 = vadd.xlane.f32.xlu0 %v542
    %v544 = vpop.xlane.xlu0 %543
    %v545 = vsel %vm320, %v537, 0.0
    %546 = vadd.xlane.f32.xlu0 %v545
    %v547 = vpop.xlane.xlu0 %546
    %v548 = vsel %vm320, %v539, 0.0
    %549 = vadd.xlane.f32.xlu0 %v548
    %v550 = vpop.xlane.xlu0 %549
    %v551 = vsel %vm320, %v541, 0.0
    %552 = vadd.xlane.f32.xlu0 %v551
    %v553 = vpop.xlane.xlu0 %552
    %v554 = vrcp.pop %v544
    %v555 = vrcp.pop %v547
    %v556 = vrcp.pop %v550
    %v557 = vrcp.pop %v553
    %v558 = vmul.f32 %v535, %v554
    %v559 = vmul.f32 %v537, %v555
    %v560 = vmul.f32 %v539, %v556
    %v561 = vmul.f32 %v541, %v557
    %v562 = vpack.c.bf16 %v558, %v558
    %v563 = vpack.c.bf16 %v559, %v559
    %v564 = vpack.c.bf16 %v560, %v560
    %v565 = vpack.c.bf16 %v561, %v561
    %566 = vrot.lane.b32.xlu0 %v313, 64
    %v567 = vpop.permute.xlu0 %566
    %v569 = vsel %vm320, %v562, 0
    %vm571 = vcmask 1043456
    %v573 = vsel %vm571, %v567, 0
    %575 = vmatprep.subr.bf16.mxu0 0
    %576 = vmatpush1.bf16.msra.mxu0 0
    %577 = vmatprep.subr.bf16.mxu0 0
    %578 = vmatpush1.bf16.msra.mxu0 0
    %579 = vmatprep.subr.bf16.mxu0 0
    %580 = vmatpush1.bf16.msra.mxu0 0
    %581 = vmatprep.subr.bf16.mxu0 0
    %582 = vmatpush1.bf16.msra.mxu0 0
    %583 = vmatprep.subr.bf16.mxu0 0
    %584 = vmatpush1.bf16.msra.mxu0 0
    %585 = vmatprep.subr.bf16.mxu0 0
    %586 = vmatpush1.bf16.msra.mxu0 0
    %587 = vmatprep.subr.bf16.mxu0 0
    %588 = vmatpush1.bf16.msra.mxu0 0
    %589 = vmatprep.subr.bf16.mxu0 0
    %590 = vmatpush1.bf16.msra.mxu0 %v573
    %591 = vmatprep.subr.bf16.mxu0 0
    %592 = vmatpush2.bf16.msra.mxu0 0
    %593 = vmatprep.subr.bf16.mxu0 0
    %594 = vmatpush2.bf16.msra.mxu0 0
    %595 = vmatprep.subr.bf16.mxu0 0
    %596 = vmatpush2.bf16.msra.mxu0 0
    %597 = vmatprep.subr.bf16.mxu0 0
    %598 = vmatpush2.bf16.msra.mxu0 0
    %599 = vmatprep.subr.bf16.mxu0 0
    %600 = vmatpush2.bf16.msra.mxu0 0
    %601 = vmatprep.subr.bf16.mxu0 0
    %602 = vmatpush2.bf16.msra.mxu0 0
    %603 = vmatprep.subr.bf16.mxu0 0
    %604 = vmatpush2.bf16.msra.mxu0 0
    %605 = vmatprep.subr.bf16.mxu0 0
    %606 = vmatpush2.bf16.msra.mxu0 0
    %607 = vmatprep.mubr.bf16.mxu0 0
    %608 = vmatmul.mubr.bf16.gmra.mxu0 %v569
    %v609 = vpop.f32.mrf.mxu0
    %v610 = vadd.f32 0.0, %v609
    %v611 = vpop.f32.mrf.mxu0
    %v612 = vpop.f32.mrf.mxu0
    %v613 = vpop.f32.mrf.mxu0
    %614 = vdwg.mxu0
    %615 = vrot.lane.b32.xlu0 %v314, 64
    %v616 = vpop.permute.xlu0 %615
    %v618 = vsel %vm320, %v563, 0
    %v621 = vsel %vm571, %v616, 0
    %623 = vmatprep.subr.bf16.mxu0 0
    %624 = vmatpush1.bf16.msra.mxu0 0
    %625 = vmatprep.subr.bf16.mxu0 0
    %626 = vmatpush1.bf16.msra.mxu0 0
    %627 = vmatprep.subr.bf16.mxu0 0
    %628 = vmatpush1.bf16.msra.mxu0 0
    %629 = vmatprep.subr.bf16.mxu0 0
    %630 = vmatpush1.bf16.msra.mxu0 0
    %631 = vmatprep.subr.bf16.mxu0 0
    %632 = vmatpush1.bf16.msra.mxu0 0
    %633 = vmatprep.subr.bf16.mxu0 0
    %634 = vmatpush1.bf16.msra.mxu0 0
    %635 = vmatprep.subr.bf16.mxu0 0
    %636 = vmatpush1.bf16.msra.mxu0 0
    %637 = vmatprep.subr.bf16.mxu0 0
    %638 = vmatpush1.bf16.msra.mxu0 %v621
    %639 = vmatprep.subr.bf16.mxu0 0
    %640 = vmatpush2.bf16.msra.mxu0 0
    %641 = vmatprep.subr.bf16.mxu0 0
    %642 = vmatpush2.bf16.msra.mxu0 0
    %643 = vmatprep.subr.bf16.mxu0 0
    %644 = vmatpush2.bf16.msra.mxu0 0
    %645 = vmatprep.subr.bf16.mxu0 0
    %646 = vmatpush2.bf16.msra.mxu0 0
    %647 = vmatprep.subr.bf16.mxu0 0
    %648 = vmatpush2.bf16.msra.mxu0 0
    %649 = vmatprep.subr.bf16.mxu0 0
    %650 = vmatpush2.bf16.msra.mxu0 0
    %651 = vmatprep.subr.bf16.mxu0 0
    %652 = vmatpush2.bf16.msra.mxu0 0
    %653 = vmatprep.subr.bf16.mxu0 0
    %654 = vmatpush2.bf16.msra.mxu0 0
    %655 = vmatprep.mubr.bf16.mxu0 0
    %656 = vmatmul.mubr.bf16.gmra.mxu0 %v618
    %v657 = vpop.f32.mrf.mxu0
    %v658 = vadd.f32 0.0, %v657
    %v659 = vpop.f32.mrf.mxu0
    %v660 = vpop.f32.mrf.mxu0
    %v661 = vpop.f32.mrf.mxu0
    %662 = vdwg.mxu0
    %663 = vrot.lane.b32.xlu0 %v315, 64
    %v664 = vpop.permute.xlu0 %663
    %v666 = vsel %vm320, %v564, 0
    %v669 = vsel %vm571, %v664, 0
    %671 = vmatprep.subr.bf16.mxu0 0
    %672 = vmatpush1.bf16.msra.mxu0 0
    %673 = vmatprep.subr.bf16.mxu0 0
    %674 = vmatpush1.bf16.msra.mxu0 0
    %675 = vmatprep.subr.bf16.mxu0 0
    %676 = vmatpush1.bf16.msra.mxu0 0
    %677 = vmatprep.subr.bf16.mxu0 0
    %678 = vmatpush1.bf16.msra.mxu0 0
    %679 = vmatprep.subr.bf16.mxu0 0
    %680 = vmatpush1.bf16.msra.mxu0 0
    %681 = vmatprep.subr.bf16.mxu0 0
    %682 = vmatpush1.bf16.msra.mxu0 0
    %683 = vmatprep.subr.bf16.mxu0 0
    %684 = vmatpush1.bf16.msra.mxu0 0
    %685 = vmatprep.subr.bf16.mxu0 0
    %686 = vmatpush1.bf16.msra.mxu0 %v669
    %687 = vmatprep.subr.bf16.mxu0 0
    %688 = vmatpush2.bf16.msra.mxu0 0
    %689 = vmatprep.subr.bf16.mxu0 0
    %690 = vmatpush2.bf16.msra.mxu0 0
    %691 = vmatprep.subr.bf16.mxu0 0
    %692 = vmatpush2.bf16.msra.mxu0 0
    %693 = vmatprep.subr.bf16.mxu0 0
    %694 = vmatpush2.bf16.msra.mxu0 0
    %695 = vmatprep.subr.bf16.mxu0 0
    %696 = vmatpush2.bf16.msra.mxu0 0
    %697 = vmatprep.subr.bf16.mxu0 0
    %698 = vmatpush2.bf16.msra.mxu0 0
    %699 = vmatprep.subr.bf16.mxu0 0
    %700 = vmatpush2.bf16.msra.mxu0 0
    %701 = vmatprep.subr.bf16.mxu0 0
    %702 = vmatpush2.bf16.msra.mxu0 0
    %703 = vmatprep.mubr.bf16.mxu0 0
    %704 = vmatmul.mubr.bf16.gmra.mxu0 %v666
    %v705 = vpop.f32.mrf.mxu0
    %v706 = vadd.f32 0.0, %v705
    %v707 = vpop.f32.mrf.mxu0
    %v708 = vpop.f32.mrf.mxu0
    %v709 = vpop.f32.mrf.mxu0
    %710 = vdwg.mxu0
    %711 = vrot.lane.b32.xlu0 %v316, 64
    %v712 = vpop.permute.xlu0 %711
    %v714 = vsel %vm320, %v565, 0
    %v717 = vsel %vm571, %v712, 0
    %719 = vmatprep.subr.bf16.mxu0 0
    %720 = vmatpush1.bf16.msra.mxu0 0
    %721 = vmatprep.subr.bf16.mxu0 0
    %722 = vmatpush1.bf16.msra.mxu0 0
    %723 = vmatprep.subr.bf16.mxu0 0
    %724 = vmatpush1.bf16.msra.mxu0 0
    %725 = vmatprep.subr.bf16.mxu0 0
    %726 = vmatpush1.bf16.msra.mxu0 0
    %727 = vmatprep.subr.bf16.mxu0 0
    %728 = vmatpush1.bf16.msra.mxu0 0
    %729 = vmatprep.subr.bf16.mxu0 0
    %730 = vmatpush1.bf16.msra.mxu0 0
    %731 = vmatprep.subr.bf16.mxu0 0
    %732 = vmatpush1.bf16.msra.mxu0 0
    %733 = vmatprep.subr.bf16.mxu0 0
    %734 = vmatpush1.bf16.msra.mxu0 %v717
    %735 = vmatprep.subr.bf16.mxu0 0
    %736 = vmatpush2.bf16.msra.mxu0 0
    %737 = vmatprep.subr.bf16.mxu0 0
    %738 = vmatpush2.bf16.msra.mxu0 0
    %739 = vmatprep.subr.bf16.mxu0 0
    %740 = vmatpush2.bf16.msra.mxu0 0
    %741 = vmatprep.subr.bf16.mxu0 0
    %742 = vmatpush2.bf16.msra.mxu0 0
    %743 = vmatprep.subr.bf16.mxu0 0
    %744 = vmatpush2.bf16.msra.mxu0 0
    %745 = vmatprep.subr.bf16.mxu0 0
    %746 = vmatpush2.bf16.msra.mxu0 0
    %747 = vmatprep.subr.bf16.mxu0 0
    %748 = vmatpush2.bf16.msra.mxu0 0
    %749 = vmatprep.subr.bf16.mxu0 0
    %750 = vmatpush2.bf16.msra.mxu0 0
    %751 = vmatprep.mubr.bf16.mxu0 0
    %752 = vmatmul.mubr.bf16.gmra.mxu0 %v714
    %v753 = vpop.f32.mrf.mxu0
    %v754 = vadd.f32 0.0, %v753
    %v755 = vpop.f32.mrf.mxu0
    %v756 = vpop.f32.mrf.mxu0
    %v757 = vpop.f32.mrf.mxu0
    %758 = vdwg.mxu0
    %759 = vrot.lane.b32.xlu0 %v313, 120
    %v760 = vpop.permute.xlu0 %759
    %761 = vrot.lane.b32.xlu0 %v313, 88
    %v762 = vpop.permute.xlu0 %761
    %v764 = vsel %vm320, %v760, 0
    %v767 = vsel %vm320, %v762, 0
    %769 = vmatprep.subr.bf16.mxu0 0
    %770 = vmatpush1.bf16.xpose.msra.mxu0 0
    %771 = vmatprep.subr.bf16.mxu0 0
    %772 = vmatpush1.bf16.xpose.msra.mxu0 0
    %773 = vmatprep.subr.bf16.mxu0 0
    %774 = vmatpush1.bf16.xpose.msra.mxu0 0
    %775 = vmatprep.subr.bf16.mxu0 0
    %776 = vmatpush1.bf16.xpose.msra.mxu0 0
    %777 = vmatprep.subr.bf16.mxu0 0
    %778 = vmatpush1.bf16.xpose.msra.mxu0 0
    %779 = vmatprep.subr.bf16.mxu0 0
    %780 = vmatpush1.bf16.xpose.msra.mxu0 0
    %781 = vmatprep.subr.bf16.mxu0 0
    %782 = vmatpush1.bf16.xpose.msra.mxu0 0
    %783 = vmatprep.subr.bf16.mxu0 0
    %784 = vmatpush1.bf16.xpose.msra.mxu0 %v767
    %785 = vmatprep.subr.bf16.mxu0 0
    %786 = vmatpush2.bf16.xpose.msra.mxu0 0
    %787 = vmatprep.subr.bf16.mxu0 0
    %788 = vmatpush2.bf16.xpose.msra.mxu0 0
    %789 = vmatprep.subr.bf16.mxu0 0
    %790 = vmatpush2.bf16.xpose.msra.mxu0 0
    %791 = vmatprep.subr.bf16.mxu0 0
    %792 = vmatpush2.bf16.xpose.msra.mxu0 0
    %793 = vmatprep.subr.bf16.mxu0 0
    %794 = vmatpush2.bf16.xpose.msra.mxu0 0
    %795 = vmatprep.subr.bf16.mxu0 0
    %796 = vmatpush2.bf16.xpose.msra.mxu0 0
    %797 = vmatprep.subr.bf16.mxu0 0
    %798 = vmatpush2.bf16.xpose.msra.mxu0 0
    %799 = vmatprep.subr.bf16.mxu0 0
    %800 = vmatpush2.bf16.xpose.msra.mxu0 0
    %801 = vmatprep.mubr.bf16.mxu0 0
    %802 = vmatmul.mubr.bf16.gmra.mxu0 %v764
    %v803 = vpop.f32.mrf.mxu0
    %v804 = vadd.f32 0.0, %v803
    %v805 = vpop.f32.mrf.mxu0
    %v806 = vpop.f32.mrf.mxu0
    %v807 = vpop.f32.mrf.mxu0
    %808 = vdwg.mxu0
    %809 = vrot.lane.b32.xlu0 %v314, 120
    %v810 = vpop.permute.xlu0 %809
    %811 = vrot.lane.b32.xlu0 %v314, 88
    %v812 = vpop.permute.xlu0 %811
    %v814 = vsel %vm320, %v810, 0
    %v817 = vsel %vm320, %v812, 0
    %819 = vmatprep.subr.bf16.mxu0 0
    %820 = vmatpush1.bf16.xpose.msra.mxu0 0
    %821 = vmatprep.subr.bf16.mxu0 0
    %822 = vmatpush1.bf16.xpose.msra.mxu0 0
    %823 = vmatprep.subr.bf16.mxu0 0
    %824 = vmatpush1.bf16.xpose.msra.mxu0 0
    %825 = vmatprep.subr.bf16.mxu0 0
    %826 = vmatpush1.bf16.xpose.msra.mxu0 0
    %827 = vmatprep.subr.bf16.mxu0 0
    %828 = vmatpush1.bf16.xpose.msra.mxu0 0
    %829 = vmatprep.subr.bf16.mxu0 0
    %830 = vmatpush1.bf16.xpose.msra.mxu0 0
    %831 = vmatprep.subr.bf16.mxu0 0
    %832 = vmatpush1.bf16.xpose.msra.mxu0 0
    %833 = vmatprep.subr.bf16.mxu0 0
    %834 = vmatpush1.bf16.xpose.msra.mxu0 %v817
    %835 = vmatprep.subr.bf16.mxu0 0
    %836 = vmatpush2.bf16.xpose.msra.mxu0 0
    %837 = vmatprep.subr.bf16.mxu0 0
    %838 = vmatpush2.bf16.xpose.msra.mxu0 0
    %839 = vmatprep.subr.bf16.mxu0 0
    %840 = vmatpush2.bf16.xpose.msra.mxu0 0
    %841 = vmatprep.subr.bf16.mxu0 0
    %842 = vmatpush2.bf16.xpose.msra.mxu0 0
    %843 = vmatprep.subr.bf16.mxu0 0
    %844 = vmatpush2.bf16.xpose.msra.mxu0 0
    %845 = vmatprep.subr.bf16.mxu0 0
    %846 = vmatpush2.bf16.xpose.msra.mxu0 0
    %847 = vmatprep.subr.bf16.mxu0 0
    %848 = vmatpush2.bf16.xpose.msra.mxu0 0
    %849 = vmatprep.subr.bf16.mxu0 0
    %850 = vmatpush2.bf16.xpose.msra.mxu0 0
    %851 = vmatprep.mubr.bf16.mxu0 0
    %852 = vmatmul.mubr.bf16.gmra.mxu0 %v814
    %v853 = vpop.f32.mrf.mxu0
    %v854 = vadd.f32 0.0, %v853
    %v855 = vpop.f32.mrf.mxu0
    %v856 = vpop.f32.mrf.mxu0
    %v857 = vpop.f32.mrf.mxu0
    %858 = vdwg.mxu0
    %859 = vrot.lane.b32.xlu0 %v315, 120
    %v860 = vpop.permute.xlu0 %859
    %861 = vrot.lane.b32.xlu0 %v315, 88
    %v862 = vpop.permute.xlu0 %861
    %v864 = vsel %vm320, %v860, 0
    %v867 = vsel %vm320, %v862, 0
    %869 = vmatprep.subr.bf16.mxu0 0
    %870 = vmatpush1.bf16.xpose.msra.mxu0 0
    %871 = vmatprep.subr.bf16.mxu0 0
    %872 = vmatpush1.bf16.xpose.msra.mxu0 0
    %873 = vmatprep.subr.bf16.mxu0 0
    %874 = vmatpush1.bf16.xpose.msra.mxu0 0
    %875 = vmatprep.subr.bf16.mxu0 0
    %876 = vmatpush1.bf16.xpose.msra.mxu0 0
    %877 = vmatprep.subr.bf16.mxu0 0
    %878 = vmatpush1.bf16.xpose.msra.mxu0 0
    %879 = vmatprep.subr.bf16.mxu0 0
    %880 = vmatpush1.bf16.xpose.msra.mxu0 0
    %881 = vmatprep.subr.bf16.mxu0 0
    %882 = vmatpush1.bf16.xpose.msra.mxu0 0
    %883 = vmatprep.subr.bf16.mxu0 0
    %884 = vmatpush1.bf16.xpose.msra.mxu0 %v867
    %885 = vmatprep.subr.bf16.mxu0 0
    %886 = vmatpush2.bf16.xpose.msra.mxu0 0
    %887 = vmatprep.subr.bf16.mxu0 0
    %888 = vmatpush2.bf16.xpose.msra.mxu0 0
    %889 = vmatprep.subr.bf16.mxu0 0
    %890 = vmatpush2.bf16.xpose.msra.mxu0 0
    %891 = vmatprep.subr.bf16.mxu0 0
    %892 = vmatpush2.bf16.xpose.msra.mxu0 0
    %893 = vmatprep.subr.bf16.mxu0 0
    %894 = vmatpush2.bf16.xpose.msra.mxu0 0
    %895 = vmatprep.subr.bf16.mxu0 0
    %896 = vmatpush2.bf16.xpose.msra.mxu0 0
    %897 = vmatprep.subr.bf16.mxu0 0
    %898 = vmatpush2.bf16.xpose.msra.mxu0 0
    %899 = vmatprep.subr.bf16.mxu0 0
    %900 = vmatpush2.bf16.xpose.msra.mxu0 0
    %901 = vmatprep.mubr.bf16.mxu0 0
    %902 = vmatmul.mubr.bf16.gmra.mxu0 %v864
    %v903 = vpop.f32.mrf.mxu0
    %v904 = vadd.f32 0.0, %v903
    %v905 = vpop.f32.mrf.mxu0
    %v906 = vpop.f32.mrf.mxu0
    %v907 = vpop.f32.mrf.mxu0
    %908 = vdwg.mxu0
    %909 = vrot.lane.b32.xlu0 %v316, 120
    %v910 = vpop.permute.xlu0 %909
    %911 = vrot.lane.b32.xlu0 %v316, 88
    %v912 = vpop.permute.xlu0 %911
    %v914 = vsel %vm320, %v910, 0
    %v917 = vsel %vm320, %v912, 0
    %919 = vmatprep.subr.bf16.mxu0 0
    %920 = vmatpush1.bf16.xpose.msra.mxu0 0
    %921 = vmatprep.subr.bf16.mxu0 0
    %922 = vmatpush1.bf16.xpose.msra.mxu0 0
    %923 = vmatprep.subr.bf16.mxu0 0
    %924 = vmatpush1.bf16.xpose.msra.mxu0 0
    %925 = vmatprep.subr.bf16.mxu0 0
    %926 = vmatpush1.bf16.xpose.msra.mxu0 0
    %927 = vmatprep.subr.bf16.mxu0 0
    %928 = vmatpush1.bf16.xpose.msra.mxu0 0
    %929 = vmatprep.subr.bf16.mxu0 0
    %930 = vmatpush1.bf16.xpose.msra.mxu0 0
    %931 = vmatprep.subr.bf16.mxu0 0
    %932 = vmatpush1.bf16.xpose.msra.mxu0 0
    %933 = vmatprep.subr.bf16.mxu0 0
    %934 = vmatpush1.bf16.xpose.msra.mxu0 %v917
    %935 = vmatprep.subr.bf16.mxu0 0
    %936 = vmatpush2.bf16.xpose.msra.mxu0 0
    %937 = vmatprep.subr.bf16.mxu0 0
    %938 = vmatpush2.bf16.xpose.msra.mxu0 0
    %939 = vmatprep.subr.bf16.mxu0 0
    %940 = vmatpush2.bf16.xpose.msra.mxu0 0
    %941 = vmatprep.subr.bf16.mxu0 0
    %942 = vmatpush2.bf16.xpose.msra.mxu0 0
    %943 = vmatprep.subr.bf16.mxu0 0
    %944 = vmatpush2.bf16.xpose.msra.mxu0 0
    %945 = vmatprep.subr.bf16.mxu0 0
    %946 = vmatpush2.bf16.xpose.msra.mxu0 0
    %947 = vmatprep.subr.bf16.mxu0 0
    %948 = vmatpush2.bf16.xpose.msra.mxu0 0
    %949 = vmatprep.subr.bf16.mxu0 0
    %950 = vmatpush2.bf16.xpose.msra.mxu0 0
    %951 = vmatprep.mubr.bf16.mxu0 0
    %952 = vmatmul.mubr.bf16.gmra.mxu0 %v914
    %v953 = vpop.f32.mrf.mxu0
    %v954 = vadd.f32 0.0, %v953
    %v955 = vpop.f32.mrf.mxu0
    %v956 = vpop.f32.mrf.mxu0
    %v957 = vpop.f32.mrf.mxu0
    %958 = vdwg.mxu0
    %v959 = vmul.f32 %v804, 0.35355338
    %v960 = vmul.f32 %v854, 0.35355338
    %v961 = vmul.f32 %v904, 0.35355338
    %v962 = vmul.f32 %v954, 0.35355338
    %v963 = vsel %vm320, %v959, -inf
    %964 = vmax.xlane.f32.xlu0 %v963
    %v965 = vpop.xlane.xlu0 %964
    %v966 = vsel %vm320, %v960, -inf
    %967 = vmax.xlane.f32.xlu0 %v966
    %v968 = vpop.xlane.xlu0 %967
    %v969 = vsel %vm320, %v961, -inf
    %970 = vmax.xlane.f32.xlu0 %v969
    %v971 = vpop.xlane.xlu0 %970
    %v972 = vsel %vm320, %v962, -inf
    %973 = vmax.xlane.f32.xlu0 %v972
    %v974 = vpop.xlane.xlu0 %973
    %v975 = vsub.f32 %v959, %v965
    %v976 = vsub.f32 %v960, %v968
    %v977 = vsub.f32 %v961, %v971
    %v978 = vsub.f32 %v962, %v974
    %v979 = vmul.f32 %v975, 1.442695
    %v980 = vpow.pop %v979
    %v981 = vmul.f32 %v976, 1.442695
    %v982 = vpow.pop %v981
    %v983 = vmul.f32 %v977, 1.442695
    %v984 = vpow.pop %v983
    %v985 = vmul.f32 %v978, 1.442695
    %v986 = vpow.pop %v985
    %v987 = vsel %vm320, %v980, 0.0
    %988 = vadd.xlane.f32.xlu0 %v987
    %v989 = vpop.xlane.xlu0 %988
    %v990 = vsel %vm320, %v982, 0.0
    %991 = vadd.xlane.f32.xlu0 %v990
    %v992 = vpop.xlane.xlu0 %991
    %v993 = vsel %vm320, %v984, 0.0
    %994 = vadd.xlane.f32.xlu0 %v993
    %v995 = vpop.xlane.xlu0 %994
    %v996 = vsel %vm320, %v986, 0.0
    %997 = vadd.xlane.f32.xlu0 %v996
    %v998 = vpop.xlane.xlu0 %997
    %v999 = vrcp.pop %v989
    %v1000 = vrcp.pop %v992
    %v1001 = vrcp.pop %v995
    %v1002 = vrcp.pop %v998
    %v1003 = vmul.f32 %v980, %v999
    %v1004 = vmul.f32 %v982, %v1000
    %v1005 = vmul.f32 %v984, %v1001
    %v1006 = vmul.f32 %v986, %v1002
    %v1007 = vpack.c.bf16 %v1003, %v1003
    %v1008 = vpack.c.bf16 %v1004, %v1004
    %v1009 = vpack.c.bf16 %v1005, %v1005
    %v1010 = vpack.c.bf16 %v1006, %v1006
    %1011 = vrot.lane.b32.xlu0 %v313, 56
    %v1012 = vpop.permute.xlu0 %1011
    %v1014 = vsel %vm320, %v1007, 0
    %v1017 = vsel %vm571, %v1012, 0
    %1019 = vmatprep.subr.bf16.mxu0 0
    %1020 = vmatpush1.bf16.msra.mxu0 0
    %1021 = vmatprep.subr.bf16.mxu0 0
    %1022 = vmatpush1.bf16.msra.mxu0 0
    %1023 = vmatprep.subr.bf16.mxu0 0
    %1024 = vmatpush1.bf16.msra.mxu0 0
    %1025 = vmatprep.subr.bf16.mxu0 0
    %1026 = vmatpush1.bf16.msra.mxu0 0
    %1027 = vmatprep.subr.bf16.mxu0 0
    %1028 = vmatpush1.bf16.msra.mxu0 0
    %1029 = vmatprep.subr.bf16.mxu0 0
    %1030 = vmatpush1.bf16.msra.mxu0 0
    %1031 = vmatprep.subr.bf16.mxu0 0
    %1032 = vmatpush1.bf16.msra.mxu0 0
    %1033 = vmatprep.subr.bf16.mxu0 0
    %1034 = vmatpush1.bf16.msra.mxu0 %v1017
    %1035 = vmatprep.subr.bf16.mxu0 0
    %1036 = vmatpush2.bf16.msra.mxu0 0
    %1037 = vmatprep.subr.bf16.mxu0 0
    %1038 = vmatpush2.bf16.msra.mxu0 0
    %1039 = vmatprep.subr.bf16.mxu0 0
    %1040 = vmatpush2.bf16.msra.mxu0 0
    %1041 = vmatprep.subr.bf16.mxu0 0
    %1042 = vmatpush2.bf16.msra.mxu0 0
    %1043 = vmatprep.subr.bf16.mxu0 0
    %1044 = vmatpush2.bf16.msra.mxu0 0
    %1045 = vmatprep.subr.bf16.mxu0 0
    %1046 = vmatpush2.bf16.msra.mxu0 0
    %1047 = vmatprep.subr.bf16.mxu0 0
    %1048 = vmatpush2.bf16.msra.mxu0 0
    %1049 = vmatprep.subr.bf16.mxu0 0
    %1050 = vmatpush2.bf16.msra.mxu0 0
    %1051 = vmatprep.mubr.bf16.mxu0 0
    %1052 = vmatmul.mubr.bf16.gmra.mxu0 %v1014
    %v1053 = vpop.f32.mrf.mxu0
    %v1054 = vadd.f32 0.0, %v1053
    %v1055 = vpop.f32.mrf.mxu0
    %v1056 = vpop.f32.mrf.mxu0
    %v1057 = vpop.f32.mrf.mxu0
    %1058 = vdwg.mxu0
    %1059 = vrot.lane.b32.xlu0 %v314, 56
    %v1060 = vpop.permute.xlu0 %1059
    %v1062 = vsel %vm320, %v1008, 0
    %v1065 = vsel %vm571, %v1060, 0
    %1067 = vmatprep.subr.bf16.mxu0 0
    %1068 = vmatpush1.bf16.msra.mxu0 0
    %1069 = vmatprep.subr.bf16.mxu0 0
    %1070 = vmatpush1.bf16.msra.mxu0 0
    %1071 = vmatprep.subr.bf16.mxu0 0
    %1072 = vmatpush1.bf16.msra.mxu0 0
    %1073 = vmatprep.subr.bf16.mxu0 0
    %1074 = vmatpush1.bf16.msra.mxu0 0
    %1075 = vmatprep.subr.bf16.mxu0 0
    %1076 = vmatpush1.bf16.msra.mxu0 0
    %1077 = vmatprep.subr.bf16.mxu0 0
    %1078 = vmatpush1.bf16.msra.mxu0 0
    %1079 = vmatprep.subr.bf16.mxu0 0
    %1080 = vmatpush1.bf16.msra.mxu0 0
    %1081 = vmatprep.subr.bf16.mxu0 0
    %1082 = vmatpush1.bf16.msra.mxu0 %v1065
    %1083 = vmatprep.subr.bf16.mxu0 0
    %1084 = vmatpush2.bf16.msra.mxu0 0
    %1085 = vmatprep.subr.bf16.mxu0 0
    %1086 = vmatpush2.bf16.msra.mxu0 0
    %1087 = vmatprep.subr.bf16.mxu0 0
    %1088 = vmatpush2.bf16.msra.mxu0 0
    %1089 = vmatprep.subr.bf16.mxu0 0
    %1090 = vmatpush2.bf16.msra.mxu0 0
    %1091 = vmatprep.subr.bf16.mxu0 0
    %1092 = vmatpush2.bf16.msra.mxu0 0
    %1093 = vmatprep.subr.bf16.mxu0 0
    %1094 = vmatpush2.bf16.msra.mxu0 0
    %1095 = vmatprep.subr.bf16.mxu0 0
    %1096 = vmatpush2.bf16.msra.mxu0 0
    %1097 = vmatprep.subr.bf16.mxu0 0
    %1098 = vmatpush2.bf16.msra.mxu0 0
    %1099 = vmatprep.mubr.bf16.mxu0 0
    %1100 = vmatmul.mubr.bf16.gmra.mxu0 %v1062
    %v1101 = vpop.f32.mrf.mxu0
    %v1102 = vadd.f32 0.0, %v1101
    %v1103 = vpop.f32.mrf.mxu0
    %v1104 = vpop.f32.mrf.mxu0
    %v1105 = vpop.f32.mrf.mxu0
    %1106 = vdwg.mxu0
    %1107 = vrot.lane.b32.xlu0 %v315, 56
    %v1108 = vpop.permute.xlu0 %1107
    %v1110 = vsel %vm320, %v1009, 0
    %v1113 = vsel %vm571, %v1108, 0
    %1115 = vmatprep.subr.bf16.mxu0 0
    %1116 = vmatpush1.bf16.msra.mxu0 0
    %1117 = vmatprep.subr.bf16.mxu0 0
    %1118 = vmatpush1.bf16.msra.mxu0 0
    %1119 = vmatprep.subr.bf16.mxu0 0
    %1120 = vmatpush1.bf16.msra.mxu0 0
    %1121 = vmatprep.subr.bf16.mxu0 0
    %1122 = vmatpush1.bf16.msra.mxu0 0
    %1123 = vmatprep.subr.bf16.mxu0 0
    %1124 = vmatpush1.bf16.msra.mxu0 0
    %1125 = vmatprep.subr.bf16.mxu0 0
    %1126 = vmatpush1.bf16.msra.mxu0 0
    %1127 = vmatprep.subr.bf16.mxu0 0
    %1128 = vmatpush1.bf16.msra.mxu0 0
    %1129 = vmatprep.subr.bf16.mxu0 0
    %1130 = vmatpush1.bf16.msra.mxu0 %v1113
    %1131 = vmatprep.subr.bf16.mxu0 0
    %1132 = vmatpush2.bf16.msra.mxu0 0
    %1133 = vmatprep.subr.bf16.mxu0 0
    %1134 = vmatpush2.bf16.msra.mxu0 0
    %1135 = vmatprep.subr.bf16.mxu0 0
    %1136 = vmatpush2.bf16.msra.mxu0 0
    %1137 = vmatprep.subr.bf16.mxu0 0
    %1138 = vmatpush2.bf16.msra.mxu0 0
    %1139 = vmatprep.subr.bf16.mxu0 0
    %1140 = vmatpush2.bf16.msra.mxu0 0
    %1141 = vmatprep.subr.bf16.mxu0 0
    %1142 = vmatpush2.bf16.msra.mxu0 0
    %1143 = vmatprep.subr.bf16.mxu0 0
    %1144 = vmatpush2.bf16.msra.mxu0 0
    %1145 = vmatprep.subr.bf16.mxu0 0
    %1146 = vmatpush2.bf16.msra.mxu0 0
    %1147 = vmatprep.mubr.bf16.mxu0 0
    %1148 = vmatmul.mubr.bf16.gmra.mxu0 %v1110
    %v1149 = vpop.f32.mrf.mxu0
    %v1150 = vadd.f32 0.0, %v1149
    %v1151 = vpop.f32.mrf.mxu0
    %v1152 = vpop.f32.mrf.mxu0
    %v1153 = vpop.f32.mrf.mxu0
    %1154 = vdwg.mxu0
    %1155 = vrot.lane.b32.xlu0 %v316, 56
    %v1156 = vpop.permute.xlu0 %1155
    %v1158 = vsel %vm320, %v1010, 0
    %v1161 = vsel %vm571, %v1156, 0
    %1163 = vmatprep.subr.bf16.mxu0 0
    %1164 = vmatpush1.bf16.msra.mxu0 0
    %1165 = vmatprep.subr.bf16.mxu0 0
    %1166 = vmatpush1.bf16.msra.mxu0 0
    %1167 = vmatprep.subr.bf16.mxu0 0
    %1168 = vmatpush1.bf16.msra.mxu0 0
    %1169 = vmatprep.subr.bf16.mxu0 0
    %1170 = vmatpush1.bf16.msra.mxu0 0
    %1171 = vmatprep.subr.bf16.mxu0 0
    %1172 = vmatpush1.bf16.msra.mxu0 0
    %1173 = vmatprep.subr.bf16.mxu0 0
    %1174 = vmatpush1.bf16.msra.mxu0 0
    %1175 = vmatprep.subr.bf16.mxu0 0
    %1176 = vmatpush1.bf16.msra.mxu0 0
    %1177 = vmatprep.subr.bf16.mxu0 0
    %1178 = vmatpush1.bf16.msra.mxu0 %v1161
    %1179 = vmatprep.subr.bf16.mxu0 0
    %1180 = vmatpush2.bf16.msra.mxu0 0
    %1181 = vmatprep.subr.bf16.mxu0 0
    %1182 = vmatpush2.bf16.msra.mxu0 0
    %1183 = vmatprep.subr.bf16.mxu0 0
    %1184 = vmatpush2.bf16.msra.mxu0 0
    %1185 = vmatprep.subr.bf16.mxu0 0
    %1186 = vmatpush2.bf16.msra.mxu0 0
    %1187 = vmatprep.subr.bf16.mxu0 0
    %1188 = vmatpush2.bf16.msra.mxu0 0
    %1189 = vmatprep.subr.bf16.mxu0 0
    %1190 = vmatpush2.bf16.msra.mxu0 0
    %1191 = vmatprep.subr.bf16.mxu0 0
    %1192 = vmatpush2.bf16.msra.mxu0 0
    %1193 = vmatprep.subr.bf16.mxu0 0
    %1194 = vmatpush2.bf16.msra.mxu0 0
    %1195 = vmatprep.mubr.bf16.mxu0 0
    %1196 = vmatmul.mubr.bf16.gmra.mxu0 %v1158
    %v1197 = vpop.f32.mrf.mxu0
    %v1198 = vadd.f32 0.0, %v1197
    %v1199 = vpop.f32.mrf.mxu0
    %v1200 = vpop.f32.mrf.mxu0
    %v1201 = vpop.f32.mrf.mxu0
    %1202 = vdwg.mxu0
    %1203 = vrot.lane.b32.xlu0 %v313, 112
    %v1204 = vpop.permute.xlu0 %1203
    %1205 = vrot.lane.b32.xlu0 %v313, 80
    %v1206 = vpop.permute.xlu0 %1205
    %v1208 = vsel %vm320, %v1204, 0
    %v1211 = vsel %vm320, %v1206, 0
    %1213 = vmatprep.subr.bf16.mxu0 0
    %1214 = vmatpush1.bf16.xpose.msra.mxu0 0
    %1215 = vmatprep.subr.bf16.mxu0 0
    %1216 = vmatpush1.bf16.xpose.msra.mxu0 0
    %1217 = vmatprep.subr.bf16.mxu0 0
    %1218 = vmatpush1.bf16.xpose.msra.mxu0 0
    %1219 = vmatprep.subr.bf16.mxu0 0
    %1220 = vmatpush1.bf16.xpose.msra.mxu0 0
    %1221 = vmatprep.subr.bf16.mxu0 0
    %1222 = vmatpush1.bf16.xpose.msra.mxu0 0
    %1223 = vmatprep.subr.bf16.mxu0 0
    %1224 = vmatpush1.bf16.xpose.msra.mxu0 0
    %1225 = vmatprep.subr.bf16.mxu0 0
    %1226 = vmatpush1.bf16.xpose.msra.mxu0 0
    %1227 = vmatprep.subr.bf16.mxu0 0
    %1228 = vmatpush1.bf16.xpose.msra.mxu0 %v1211
    %1229 = vmatprep.subr.bf16.mxu0 0
    %1230 = vmatpush2.bf16.xpose.msra.mxu0 0
    %1231 = vmatprep.subr.bf16.mxu0 0
    %1232 = vmatpush2.bf16.xpose.msra.mxu0 0
    %1233 = vmatprep.subr.bf16.mxu0 0
    %1234 = vmatpush2.bf16.xpose.msra.mxu0 0
    %1235 = vmatprep.subr.bf16.mxu0 0
    %1236 = vmatpush2.bf16.xpose.msra.mxu0 0
    %1237 = vmatprep.subr.bf16.mxu0 0
    %1238 = vmatpush2.bf16.xpose.msra.mxu0 0
    %1239 = vmatprep.subr.bf16.mxu0 0
    %1240 = vmatpush2.bf16.xpose.msra.mxu0 0
    %1241 = vmatprep.subr.bf16.mxu0 0
    %1242 = vmatpush2.bf16.xpose.msra.mxu0 0
    %1243 = vmatprep.subr.bf16.mxu0 0
    %1244 = vmatpush2.bf16.xpose.msra.mxu0 0
    %1245 = vmatprep.mubr.bf16.mxu0 0
    %1246 = vmatmul.mubr.bf16.gmra.mxu0 %v1208
    %v1247 = vpop.f32.mrf.mxu0
    %v1248 = vadd.f32 0.0, %v1247
    %v1249 = vpop.f32.mrf.mxu0
    %v1250 = vpop.f32.mrf.mxu0
    %v1251 = vpop.f32.mrf.mxu0
    %1252 = vdwg.mxu0
    %1253 = vrot.lane.b32.xlu0 %v314, 112
    %v1254 = vpop.permute.xlu0 %1253
    %1255 = vrot.lane.b32.xlu0 %v314, 80
    %v1256 = vpop.permute.xlu0 %1255
    %v1258 = vsel %vm320, %v1254, 0
    %v1261 = vsel %vm320, %v1256, 0
    %1263 = vmatprep.subr.bf16.mxu0 0
    %1264 = vmatpush1.bf16.xpose.msra.mxu0 0
    %1265 = vmatprep.subr.bf16.mxu0 0
    %1266 = vmatpush1.bf16.xpose.msra.mxu0 0
    %1267 = vmatprep.subr.bf16.mxu0 0
    %1268 = vmatpush1.bf16.xpose.msra.mxu0 0
    %1269 = vmatprep.subr.bf16.mxu0 0
    %1270 = vmatpush1.bf16.xpose.msra.mxu0 0
    %1271 = vmatprep.subr.bf16.mxu0 0
    %1272 = vmatpush1.bf16.xpose.msra.mxu0 0
    %1273 = vmatprep.subr.bf16.mxu0 0
    %1274 = vmatpush1.bf16.xpose.msra.mxu0 0
    %1275 = vmatprep.subr.bf16.mxu0 0
    %1276 = vmatpush1.bf16.xpose.msra.mxu0 0
    %1277 = vmatprep.subr.bf16.mxu0 0
    %1278 = vmatpush1.bf16.xpose.msra.mxu0 %v1261
    %1279 = vmatprep.subr.bf16.mxu0 0
    %1280 = vmatpush2.bf16.xpose.msra.mxu0 0
    %1281 = vmatprep.subr.bf16.mxu0 0
    %1282 = vmatpush2.bf16.xpose.msra.mxu0 0
    %1283 = vmatprep.subr.bf16.mxu0 0
    %1284 = vmatpush2.bf16.xpose.msra.mxu0 0
    %1285 = vmatprep.subr.bf16.mxu0 0
    %1286 = vmatpush2.bf16.xpose.msra.mxu0 0
    %1287 = vmatprep.subr.bf16.mxu0 0
    %1288 = vmatpush2.bf16.xpose.msra.mxu0 0
    %1289 = vmatprep.subr.bf16.mxu0 0
    %1290 = vmatpush2.bf16.xpose.msra.mxu0 0
    %1291 = vmatprep.subr.bf16.mxu0 0
    %1292 = vmatpush2.bf16.xpose.msra.mxu0 0
    %1293 = vmatprep.subr.bf16.mxu0 0
    %1294 = vmatpush2.bf16.xpose.msra.mxu0 0
    %1295 = vmatprep.mubr.bf16.mxu0 0
    %1296 = vmatmul.mubr.bf16.gmra.mxu0 %v1258
    %v1297 = vpop.f32.mrf.mxu0
    %v1298 = vadd.f32 0.0, %v1297
    %v1299 = vpop.f32.mrf.mxu0
    %v1300 = vpop.f32.mrf.mxu0
    %v1301 = vpop.f32.mrf.mxu0
    %1302 = vdwg.mxu0
    %1303 = vrot.lane.b32.xlu0 %v315, 112
    %v1304 = vpop.permute.xlu0 %1303
    %1305 = vrot.lane.b32.xlu0 %v315, 80
    %v1306 = vpop.permute.xlu0 %1305
    %v1308 = vsel %vm320, %v1304, 0
    %v1311 = vsel %vm320, %v1306, 0
    %1313 = vmatprep.subr.bf16.mxu0 0
    %1314 = vmatpush1.bf16.xpose.msra.mxu0 0
    %1315 = vmatprep.subr.bf16.mxu0 0
    %1316 = vmatpush1.bf16.xpose.msra.mxu0 0
    %1317 = vmatprep.subr.bf16.mxu0 0
    %1318 = vmatpush1.bf16.xpose.msra.mxu0 0
    %1319 = vmatprep.subr.bf16.mxu0 0
    %1320 = vmatpush1.bf16.xpose.msra.mxu0 0
    %1321 = vmatprep.subr.bf16.mxu0 0
    %1322 = vmatpush1.bf16.xpose.msra.mxu0 0
    %1323 = vmatprep.subr.bf16.mxu0 0
    %1324 = vmatpush1.bf16.xpose.msra.mxu0 0
    %1325 = vmatprep.subr.bf16.mxu0 0
    %1326 = vmatpush1.bf16.xpose.msra.mxu0 0
    %1327 = vmatprep.subr.bf16.mxu0 0
    %1328 = vmatpush1.bf16.xpose.msra.mxu0 %v1311
    %1329 = vmatprep.subr.bf16.mxu0 0
    %1330 = vmatpush2.bf16.xpose.msra.mxu0 0
    %1331 = vmatprep.subr.bf16.mxu0 0
    %1332 = vmatpush2.bf16.xpose.msra.mxu0 0
    %1333 = vmatprep.subr.bf16.mxu0 0
    %1334 = vmatpush2.bf16.xpose.msra.mxu0 0
    %1335 = vmatprep.subr.bf16.mxu0 0
    %1336 = vmatpush2.bf16.xpose.msra.mxu0 0
    %1337 = vmatprep.subr.bf16.mxu0 0
    %1338 = vmatpush2.bf16.xpose.msra.mxu0 0
    %1339 = vmatprep.subr.bf16.mxu0 0
    %1340 = vmatpush2.bf16.xpose.msra.mxu0 0
    %1341 = vmatprep.subr.bf16.mxu0 0
    %1342 = vmatpush2.bf16.xpose.msra.mxu0 0
    %1343 = vmatprep.subr.bf16.mxu0 0
    %1344 = vmatpush2.bf16.xpose.msra.mxu0 0
    %1345 = vmatprep.mubr.bf16.mxu0 0
    %1346 = vmatmul.mubr.bf16.gmra.mxu0 %v1308
    %v1347 = vpop.f32.mrf.mxu0
    %v1348 = vadd.f32 0.0, %v1347
    %v1349 = vpop.f32.mrf.mxu0
    %v1350 = vpop.f32.mrf.mxu0
    %v1351 = vpop.f32.mrf.mxu0
    %1352 = vdwg.mxu0
    %1353 = vrot.lane.b32.xlu0 %v316, 112
    %v1354 = vpop.permute.xlu0 %1353
    %1355 = vrot.lane.b32.xlu0 %v316, 80
    %v1356 = vpop.permute.xlu0 %1355
    %v1358 = vsel %vm320, %v1354, 0
    %v1361 = vsel %vm320, %v1356, 0
    %1363 = vmatprep.subr.bf16.mxu0 0
    %1364 = vmatpush1.bf16.xpose.msra.mxu0 0
    %1365 = vmatprep.subr.bf16.mxu0 0
    %1366 = vmatpush1.bf16.xpose.msra.mxu0 0
    %1367 = vmatprep.subr.bf16.mxu0 0
    %1368 = vmatpush1.bf16.xpose.msra.mxu0 0
    %1369 = vmatprep.subr.bf16.mxu0 0
    %1370 = vmatpush1.bf16.xpose.msra.mxu0 0
    %1371 = vmatprep.subr.bf16.mxu0 0
    %1372 = vmatpush1.bf16.xpose.msra.mxu0 0
    %1373 = vmatprep.subr.bf16.mxu0 0
    %1374 = vmatpush1.bf16.xpose.msra.mxu0 0
    %1375 = vmatprep.subr.bf16.mxu0 0
    %1376 = vmatpush1.bf16.xpose.msra.mxu0 0
    %1377 = vmatprep.subr.bf16.mxu0 0
    %1378 = vmatpush1.bf16.xpose.msra.mxu0 %v1361
    %1379 = vmatprep.subr.bf16.mxu0 0
    %1380 = vmatpush2.bf16.xpose.msra.mxu0 0
    %1381 = vmatprep.subr.bf16.mxu0 0
    %1382 = vmatpush2.bf16.xpose.msra.mxu0 0
    %1383 = vmatprep.subr.bf16.mxu0 0
    %1384 = vmatpush2.bf16.xpose.msra.mxu0 0
    %1385 = vmatprep.subr.bf16.mxu0 0
    %1386 = vmatpush2.bf16.xpose.msra.mxu0 0
    %1387 = vmatprep.subr.bf16.mxu0 0
    %1388 = vmatpush2.bf16.xpose.msra.mxu0 0
    %1389 = vmatprep.subr.bf16.mxu0 0
    %1390 = vmatpush2.bf16.xpose.msra.mxu0 0
    %1391 = vmatprep.subr.bf16.mxu0 0
    %1392 = vmatpush2.bf16.xpose.msra.mxu0 0
    %1393 = vmatprep.subr.bf16.mxu0 0
    %1394 = vmatpush2.bf16.xpose.msra.mxu0 0
    %1395 = vmatprep.mubr.bf16.mxu0 0
    %1396 = vmatmul.mubr.bf16.gmra.mxu0 %v1358
    %v1397 = vpop.f32.mrf.mxu0
    %v1398 = vadd.f32 0.0, %v1397
    %v1399 = vpop.f32.mrf.mxu0
    %v1400 = vpop.f32.mrf.mxu0
    %v1401 = vpop.f32.mrf.mxu0
    %1402 = vdwg.mxu0
    %v1403 = vmul.f32 %v1248, 0.35355338
    %v1404 = vmul.f32 %v1298, 0.35355338
    %v1405 = vmul.f32 %v1348, 0.35355338
    %v1406 = vmul.f32 %v1398, 0.35355338
    %v1407 = vsel %vm320, %v1403, -inf
    %1408 = vmax.xlane.f32.xlu0 %v1407
    %v1409 = vpop.xlane.xlu0 %1408
    %v1410 = vsel %vm320, %v1404, -inf
    %1411 = vmax.xlane.f32.xlu0 %v1410
    %v1412 = vpop.xlane.xlu0 %1411
    %v1413 = vsel %vm320, %v1405, -inf
    %1414 = vmax.xlane.f32.xlu0 %v1413
    %v1415 = vpop.xlane.xlu0 %1414
    %v1416 = vsel %vm320, %v1406, -inf
    %1417 = vmax.xlane.f32.xlu0 %v1416
    %v1418 = vpop.xlane.xlu0 %1417
    %v1419 = vsub.f32 %v1403, %v1409
    %v1420 = vsub.f32 %v1404, %v1412
    %v1421 = vsub.f32 %v1405, %v1415
    %v1422 = vsub.f32 %v1406, %v1418
    %v1423 = vmul.f32 %v1419, 1.442695
    %v1424 = vpow.pop %v1423
    %v1425 = vmul.f32 %v1420, 1.442695
    %v1426 = vpow.pop %v1425
    %v1427 = vmul.f32 %v1421, 1.442695
    %v1428 = vpow.pop %v1427
    %v1429 = vmul.f32 %v1422, 1.442695
    %v1430 = vpow.pop %v1429
    %v1431 = vsel %vm320, %v1424, 0.0
    %1432 = vadd.xlane.f32.xlu0 %v1431
    %v1433 = vpop.xlane.xlu0 %1432
    %v1434 = vsel %vm320, %v1426, 0.0
    %1435 = vadd.xlane.f32.xlu0 %v1434
    %v1436 = vpop.xlane.xlu0 %1435
    %v1437 = vsel %vm320, %v1428, 0.0
    %1438 = vadd.xlane.f32.xlu0 %v1437
    %v1439 = vpop.xlane.xlu0 %1438
    %v1440 = vsel %vm320, %v1430, 0.0
    %1441 = vadd.xlane.f32.xlu0 %v1440
    %v1442 = vpop.xlane.xlu0 %1441
    %v1443 = vrcp.pop %v1433
    %v1444 = vrcp.pop %v1436
    %v1445 = vrcp.pop %v1439
    %v1446 = vrcp.pop %v1442
    %v1447 = vmul.f32 %v1424, %v1443
    %v1448 = vmul.f32 %v1426, %v1444
    %v1449 = vmul.f32 %v1428, %v1445
    %v1450 = vmul.f32 %v1430, %v1446
    %v1451 = vpack.c.bf16 %v1447, %v1447
    %v1452 = vpack.c.bf16 %v1448, %v1448
    %v1453 = vpack.c.bf16 %v1449, %v1449
    %v1454 = vpack.c.bf16 %v1450, %v1450
    %1455 = vrot.lane.b32.xlu0 %v313, 48
    %v1456 = vpop.permute.xlu0 %1455
    %v1458 = vsel %vm320, %v1451, 0
    %v1461 = vsel %vm571, %v1456, 0
    %1463 = vmatprep.subr.bf16.mxu0 0
    %1464 = vmatpush1.bf16.msra.mxu0 0
    %1465 = vmatprep.subr.bf16.mxu0 0
    %1466 = vmatpush1.bf16.msra.mxu0 0
    %1467 = vmatprep.subr.bf16.mxu0 0
    %1468 = vmatpush1.bf16.msra.mxu0 0
    %1469 = vmatprep.subr.bf16.mxu0 0
    %1470 = vmatpush1.bf16.msra.mxu0 0
    %1471 = vmatprep.subr.bf16.mxu0 0
    %1472 = vmatpush1.bf16.msra.mxu0 0
    %1473 = vmatprep.subr.bf16.mxu0 0
    %1474 = vmatpush1.bf16.msra.mxu0 0
    %1475 = vmatprep.subr.bf16.mxu0 0
    %1476 = vmatpush1.bf16.msra.mxu0 0
    %1477 = vmatprep.subr.bf16.mxu0 0
    %1478 = vmatpush1.bf16.msra.mxu0 %v1461
    %1479 = vmatprep.subr.bf16.mxu0 0
    %1480 = vmatpush2.bf16.msra.mxu0 0
    %1481 = vmatprep.subr.bf16.mxu0 0
    %1482 = vmatpush2.bf16.msra.mxu0 0
    %1483 = vmatprep.subr.bf16.mxu0 0
    %1484 = vmatpush2.bf16.msra.mxu0 0
    %1485 = vmatprep.subr.bf16.mxu0 0
    %1486 = vmatpush2.bf16.msra.mxu0 0
    %1487 = vmatprep.subr.bf16.mxu0 0
    %1488 = vmatpush2.bf16.msra.mxu0 0
    %1489 = vmatprep.subr.bf16.mxu0 0
    %1490 = vmatpush2.bf16.msra.mxu0 0
    %1491 = vmatprep.subr.bf16.mxu0 0
    %1492 = vmatpush2.bf16.msra.mxu0 0
    %1493 = vmatprep.subr.bf16.mxu0 0
    %1494 = vmatpush2.bf16.msra.mxu0 0
    %1495 = vmatprep.mubr.bf16.mxu0 0
    %1496 = vmatmul.mubr.bf16.gmra.mxu0 %v1458
    %v1497 = vpop.f32.mrf.mxu0
    %v1498 = vadd.f32 0.0, %v1497
    %v1499 = vpop.f32.mrf.mxu0
    %v1500 = vpop.f32.mrf.mxu0
    %v1501 = vpop.f32.mrf.mxu0
    %1502 = vdwg.mxu0
    %1503 = vrot.lane.b32.xlu0 %v314, 48
    %v1504 = vpop.permute.xlu0 %1503
    %v1506 = vsel %vm320, %v1452, 0
    %v1509 = vsel %vm571, %v1504, 0
    %1511 = vmatprep.subr.bf16.mxu0 0
    %1512 = vmatpush1.bf16.msra.mxu0 0
    %1513 = vmatprep.subr.bf16.mxu0 0
    %1514 = vmatpush1.bf16.msra.mxu0 0
    %1515 = vmatprep.subr.bf16.mxu0 0
    %1516 = vmatpush1.bf16.msra.mxu0 0
    %1517 = vmatprep.subr.bf16.mxu0 0
    %1518 = vmatpush1.bf16.msra.mxu0 0
    %1519 = vmatprep.subr.bf16.mxu0 0
    %1520 = vmatpush1.bf16.msra.mxu0 0
    %1521 = vmatprep.subr.bf16.mxu0 0
    %1522 = vmatpush1.bf16.msra.mxu0 0
    %1523 = vmatprep.subr.bf16.mxu0 0
    %1524 = vmatpush1.bf16.msra.mxu0 0
    %1525 = vmatprep.subr.bf16.mxu0 0
    %1526 = vmatpush1.bf16.msra.mxu0 %v1509
    %1527 = vmatprep.subr.bf16.mxu0 0
    %1528 = vmatpush2.bf16.msra.mxu0 0
    %1529 = vmatprep.subr.bf16.mxu0 0
    %1530 = vmatpush2.bf16.msra.mxu0 0
    %1531 = vmatprep.subr.bf16.mxu0 0
    %1532 = vmatpush2.bf16.msra.mxu0 0
    %1533 = vmatprep.subr.bf16.mxu0 0
    %1534 = vmatpush2.bf16.msra.mxu0 0
    %1535 = vmatprep.subr.bf16.mxu0 0
    %1536 = vmatpush2.bf16.msra.mxu0 0
    %1537 = vmatprep.subr.bf16.mxu0 0
    %1538 = vmatpush2.bf16.msra.mxu0 0
    %1539 = vmatprep.subr.bf16.mxu0 0
    %1540 = vmatpush2.bf16.msra.mxu0 0
    %1541 = vmatprep.subr.bf16.mxu0 0
    %1542 = vmatpush2.bf16.msra.mxu0 0
    %1543 = vmatprep.mubr.bf16.mxu0 0
    %1544 = vmatmul.mubr.bf16.gmra.mxu0 %v1506
    %v1545 = vpop.f32.mrf.mxu0
    %v1546 = vadd.f32 0.0, %v1545
    %v1547 = vpop.f32.mrf.mxu0
    %v1548 = vpop.f32.mrf.mxu0
    %v1549 = vpop.f32.mrf.mxu0
    %1550 = vdwg.mxu0
    %1551 = vrot.lane.b32.xlu0 %v315, 48
    %v1552 = vpop.permute.xlu0 %1551
    %v1554 = vsel %vm320, %v1453, 0
    %v1557 = vsel %vm571, %v1552, 0
    %1559 = vmatprep.subr.bf16.mxu0 0
    %1560 = vmatpush1.bf16.msra.mxu0 0
    %1561 = vmatprep.subr.bf16.mxu0 0
    %1562 = vmatpush1.bf16.msra.mxu0 0
    %1563 = vmatprep.subr.bf16.mxu0 0
    %1564 = vmatpush1.bf16.msra.mxu0 0
    %1565 = vmatprep.subr.bf16.mxu0 0
    %1566 = vmatpush1.bf16.msra.mxu0 0
    %1567 = vmatprep.subr.bf16.mxu0 0
    %1568 = vmatpush1.bf16.msra.mxu0 0
    %1569 = vmatprep.subr.bf16.mxu0 0
    %1570 = vmatpush1.bf16.msra.mxu0 0
    %1571 = vmatprep.subr.bf16.mxu0 0
    %1572 = vmatpush1.bf16.msra.mxu0 0
    %1573 = vmatprep.subr.bf16.mxu0 0
    %1574 = vmatpush1.bf16.msra.mxu0 %v1557
    %1575 = vmatprep.subr.bf16.mxu0 0
    %1576 = vmatpush2.bf16.msra.mxu0 0
    %1577 = vmatprep.subr.bf16.mxu0 0
    %1578 = vmatpush2.bf16.msra.mxu0 0
    %1579 = vmatprep.subr.bf16.mxu0 0
    %1580 = vmatpush2.bf16.msra.mxu0 0
    %1581 = vmatprep.subr.bf16.mxu0 0
    %1582 = vmatpush2.bf16.msra.mxu0 0
    %1583 = vmatprep.subr.bf16.mxu0 0
    %1584 = vmatpush2.bf16.msra.mxu0 0
    %1585 = vmatprep.subr.bf16.mxu0 0
    %1586 = vmatpush2.bf16.msra.mxu0 0
    %1587 = vmatprep.subr.bf16.mxu0 0
    %1588 = vmatpush2.bf16.msra.mxu0 0
    %1589 = vmatprep.subr.bf16.mxu0 0
    %1590 = vmatpush2.bf16.msra.mxu0 0
    %1591 = vmatprep.mubr.bf16.mxu0 0
    %1592 = vmatmul.mubr.bf16.gmra.mxu0 %v1554
    %v1593 = vpop.f32.mrf.mxu0
    %v1594 = vadd.f32 0.0, %v1593
    %v1595 = vpop.f32.mrf.mxu0
    %v1596 = vpop.f32.mrf.mxu0
    %v1597 = vpop.f32.mrf.mxu0
    %1598 = vdwg.mxu0
    %1599 = vrot.lane.b32.xlu0 %v316, 48
    %v1600 = vpop.permute.xlu0 %1599
    %v1602 = vsel %vm320, %v1454, 0
    %v1605 = vsel %vm571, %v1600, 0
    %1607 = vmatprep.subr.bf16.mxu0 0
    %1608 = vmatpush1.bf16.msra.mxu0 0
    %1609 = vmatprep.subr.bf16.mxu0 0
    %1610 = vmatpush1.bf16.msra.mxu0 0
    %1611 = vmatprep.subr.bf16.mxu0 0
    %1612 = vmatpush1.bf16.msra.mxu0 0
    %1613 = vmatprep.subr.bf16.mxu0 0
    %1614 = vmatpush1.bf16.msra.mxu0 0
    %1615 = vmatprep.subr.bf16.mxu0 0
    %1616 = vmatpush1.bf16.msra.mxu0 0
    %1617 = vmatprep.subr.bf16.mxu0 0
    %1618 = vmatpush1.bf16.msra.mxu0 0
    %1619 = vmatprep.subr.bf16.mxu0 0
    %1620 = vmatpush1.bf16.msra.mxu0 0
    %1621 = vmatprep.subr.bf16.mxu0 0
    %1622 = vmatpush1.bf16.msra.mxu0 %v1605
    %1623 = vmatprep.subr.bf16.mxu0 0
    %1624 = vmatpush2.bf16.msra.mxu0 0
    %1625 = vmatprep.subr.bf16.mxu0 0
    %1626 = vmatpush2.bf16.msra.mxu0 0
    %1627 = vmatprep.subr.bf16.mxu0 0
    %1628 = vmatpush2.bf16.msra.mxu0 0
    %1629 = vmatprep.subr.bf16.mxu0 0
    %1630 = vmatpush2.bf16.msra.mxu0 0
    %1631 = vmatprep.subr.bf16.mxu0 0
    %1632 = vmatpush2.bf16.msra.mxu0 0
    %1633 = vmatprep.subr.bf16.mxu0 0
    %1634 = vmatpush2.bf16.msra.mxu0 0
    %1635 = vmatprep.subr.bf16.mxu0 0
    %1636 = vmatpush2.bf16.msra.mxu0 0
    %1637 = vmatprep.subr.bf16.mxu0 0
    %1638 = vmatpush2.bf16.msra.mxu0 0
    %1639 = vmatprep.mubr.bf16.mxu0 0
    %1640 = vmatmul.mubr.bf16.gmra.mxu0 %v1602
    %v1641 = vpop.f32.mrf.mxu0
    %v1642 = vadd.f32 0.0, %v1641
    %v1643 = vpop.f32.mrf.mxu0
    %v1644 = vpop.f32.mrf.mxu0
    %v1645 = vpop.f32.mrf.mxu0
    %1646 = vdwg.mxu0
    %1647 = vrot.lane.b32.xlu0 %v313, 104
    %v1648 = vpop.permute.xlu0 %1647
    %1649 = vrot.lane.b32.xlu0 %v313, 72
    %v1650 = vpop.permute.xlu0 %1649
    %v1652 = vsel %vm320, %v1648, 0
    %v1655 = vsel %vm320, %v1650, 0
    %1657 = vmatprep.subr.bf16.mxu0 0
    %1658 = vmatpush1.bf16.xpose.msra.mxu0 0
    %1659 = vmatprep.subr.bf16.mxu0 0
    %1660 = vmatpush1.bf16.xpose.msra.mxu0 0
    %1661 = vmatprep.subr.bf16.mxu0 0
    %1662 = vmatpush1.bf16.xpose.msra.mxu0 0
    %1663 = vmatprep.subr.bf16.mxu0 0
    %1664 = vmatpush1.bf16.xpose.msra.mxu0 0
    %1665 = vmatprep.subr.bf16.mxu0 0
    %1666 = vmatpush1.bf16.xpose.msra.mxu0 0
    %1667 = vmatprep.subr.bf16.mxu0 0
    %1668 = vmatpush1.bf16.xpose.msra.mxu0 0
    %1669 = vmatprep.subr.bf16.mxu0 0
    %1670 = vmatpush1.bf16.xpose.msra.mxu0 0
    %1671 = vmatprep.subr.bf16.mxu0 0
    %1672 = vmatpush1.bf16.xpose.msra.mxu0 %v1655
    %1673 = vmatprep.subr.bf16.mxu0 0
    %1674 = vmatpush2.bf16.xpose.msra.mxu0 0
    %1675 = vmatprep.subr.bf16.mxu0 0
    %1676 = vmatpush2.bf16.xpose.msra.mxu0 0
    %1677 = vmatprep.subr.bf16.mxu0 0
    %1678 = vmatpush2.bf16.xpose.msra.mxu0 0
    %1679 = vmatprep.subr.bf16.mxu0 0
    %1680 = vmatpush2.bf16.xpose.msra.mxu0 0
    %1681 = vmatprep.subr.bf16.mxu0 0
    %1682 = vmatpush2.bf16.xpose.msra.mxu0 0
    %1683 = vmatprep.subr.bf16.mxu0 0
    %1684 = vmatpush2.bf16.xpose.msra.mxu0 0
    %1685 = vmatprep.subr.bf16.mxu0 0
    %1686 = vmatpush2.bf16.xpose.msra.mxu0 0
    %1687 = vmatprep.subr.bf16.mxu0 0
    %1688 = vmatpush2.bf16.xpose.msra.mxu0 0
    %1689 = vmatprep.mubr.bf16.mxu0 0
    %1690 = vmatmul.mubr.bf16.gmra.mxu0 %v1652
    %v1691 = vpop.f32.mrf.mxu0
    %v1692 = vadd.f32 0.0, %v1691
    %v1693 = vpop.f32.mrf.mxu0
    %v1694 = vpop.f32.mrf.mxu0
    %v1695 = vpop.f32.mrf.mxu0
    %1696 = vdwg.mxu0
    %1697 = vrot.lane.b32.xlu0 %v314, 104
    %v1698 = vpop.permute.xlu0 %1697
    %1699 = vrot.lane.b32.xlu0 %v314, 72
    %v1700 = vpop.permute.xlu0 %1699
    %v1702 = vsel %vm320, %v1698, 0
    %v1705 = vsel %vm320, %v1700, 0
    %1707 = vmatprep.subr.bf16.mxu0 0
    %1708 = vmatpush1.bf16.xpose.msra.mxu0 0
    %1709 = vmatprep.subr.bf16.mxu0 0
    %1710 = vmatpush1.bf16.xpose.msra.mxu0 0
    %1711 = vmatprep.subr.bf16.mxu0 0
    %1712 = vmatpush1.bf16.xpose.msra.mxu0 0
    %1713 = vmatprep.subr.bf16.mxu0 0
    %1714 = vmatpush1.bf16.xpose.msra.mxu0 0
    %1715 = vmatprep.subr.bf16.mxu0 0
    %1716 = vmatpush1.bf16.xpose.msra.mxu0 0
    %1717 = vmatprep.subr.bf16.mxu0 0
    %1718 = vmatpush1.bf16.xpose.msra.mxu0 0
    %1719 = vmatprep.subr.bf16.mxu0 0
    %1720 = vmatpush1.bf16.xpose.msra.mxu0 0
    %1721 = vmatprep.subr.bf16.mxu0 0
    %1722 = vmatpush1.bf16.xpose.msra.mxu0 %v1705
    %1723 = vmatprep.subr.bf16.mxu0 0
    %1724 = vmatpush2.bf16.xpose.msra.mxu0 0
    %1725 = vmatprep.subr.bf16.mxu0 0
    %1726 = vmatpush2.bf16.xpose.msra.mxu0 0
    %1727 = vmatprep.subr.bf16.mxu0 0
    %1728 = vmatpush2.bf16.xpose.msra.mxu0 0
    %1729 = vmatprep.subr.bf16.mxu0 0
    %1730 = vmatpush2.bf16.xpose.msra.mxu0 0
    %1731 = vmatprep.subr.bf16.mxu0 0
    %1732 = vmatpush2.bf16.xpose.msra.mxu0 0
    %1733 = vmatprep.subr.bf16.mxu0 0
    %1734 = vmatpush2.bf16.xpose.msra.mxu0 0
    %1735 = vmatprep.subr.bf16.mxu0 0
    %1736 = vmatpush2.bf16.xpose.msra.mxu0 0
    %1737 = vmatprep.subr.bf16.mxu0 0
    %1738 = vmatpush2.bf16.xpose.msra.mxu0 0
    %1739 = vmatprep.mubr.bf16.mxu0 0
    %1740 = vmatmul.mubr.bf16.gmra.mxu0 %v1702
    %v1741 = vpop.f32.mrf.mxu0
    %v1742 = vadd.f32 0.0, %v1741
    %v1743 = vpop.f32.mrf.mxu0
    %v1744 = vpop.f32.mrf.mxu0
    %v1745 = vpop.f32.mrf.mxu0
    %1746 = vdwg.mxu0
    %1747 = vrot.lane.b32.xlu0 %v315, 104
    %v1748 = vpop.permute.xlu0 %1747
    %1749 = vrot.lane.b32.xlu0 %v315, 72
    %v1750 = vpop.permute.xlu0 %1749
    %v1752 = vsel %vm320, %v1748, 0
    %v1755 = vsel %vm320, %v1750, 0
    %1757 = vmatprep.subr.bf16.mxu0 0
    %1758 = vmatpush1.bf16.xpose.msra.mxu0 0
    %1759 = vmatprep.subr.bf16.mxu0 0
    %1760 = vmatpush1.bf16.xpose.msra.mxu0 0
    %1761 = vmatprep.subr.bf16.mxu0 0
    %1762 = vmatpush1.bf16.xpose.msra.mxu0 0
    %1763 = vmatprep.subr.bf16.mxu0 0
    %1764 = vmatpush1.bf16.xpose.msra.mxu0 0
    %1765 = vmatprep.subr.bf16.mxu0 0
    %1766 = vmatpush1.bf16.xpose.msra.mxu0 0
    %1767 = vmatprep.subr.bf16.mxu0 0
    %1768 = vmatpush1.bf16.xpose.msra.mxu0 0
    %1769 = vmatprep.subr.bf16.mxu0 0
    %1770 = vmatpush1.bf16.xpose.msra.mxu0 0
    %1771 = vmatprep.subr.bf16.mxu0 0
    %1772 = vmatpush1.bf16.xpose.msra.mxu0 %v1755
    %1773 = vmatprep.subr.bf16.mxu0 0
    %1774 = vmatpush2.bf16.xpose.msra.mxu0 0
    %1775 = vmatprep.subr.bf16.mxu0 0
    %1776 = vmatpush2.bf16.xpose.msra.mxu0 0
    %1777 = vmatprep.subr.bf16.mxu0 0
    %1778 = vmatpush2.bf16.xpose.msra.mxu0 0
    %1779 = vmatprep.subr.bf16.mxu0 0
    %1780 = vmatpush2.bf16.xpose.msra.mxu0 0
    %1781 = vmatprep.subr.bf16.mxu0 0
    %1782 = vmatpush2.bf16.xpose.msra.mxu0 0
    %1783 = vmatprep.subr.bf16.mxu0 0
    %1784 = vmatpush2.bf16.xpose.msra.mxu0 0
    %1785 = vmatprep.subr.bf16.mxu0 0
    %1786 = vmatpush2.bf16.xpose.msra.mxu0 0
    %1787 = vmatprep.subr.bf16.mxu0 0
    %1788 = vmatpush2.bf16.xpose.msra.mxu0 0
    %1789 = vmatprep.mubr.bf16.mxu0 0
    %1790 = vmatmul.mubr.bf16.gmra.mxu0 %v1752
    %v1791 = vpop.f32.mrf.mxu0
    %v1792 = vadd.f32 0.0, %v1791
    %v1793 = vpop.f32.mrf.mxu0
    %v1794 = vpop.f32.mrf.mxu0
    %v1795 = vpop.f32.mrf.mxu0
    %1796 = vdwg.mxu0
    %1797 = vrot.lane.b32.xlu0 %v316, 104
    %v1798 = vpop.permute.xlu0 %1797
    %1799 = vrot.lane.b32.xlu0 %v316, 72
    %v1800 = vpop.permute.xlu0 %1799
    %v1802 = vsel %vm320, %v1798, 0
    %v1805 = vsel %vm320, %v1800, 0
    %1807 = vmatprep.subr.bf16.mxu0 0
    %1808 = vmatpush1.bf16.xpose.msra.mxu0 0
    %1809 = vmatprep.subr.bf16.mxu0 0
    %1810 = vmatpush1.bf16.xpose.msra.mxu0 0
    %1811 = vmatprep.subr.bf16.mxu0 0
    %1812 = vmatpush1.bf16.xpose.msra.mxu0 0
    %1813 = vmatprep.subr.bf16.mxu0 0
    %1814 = vmatpush1.bf16.xpose.msra.mxu0 0
    %1815 = vmatprep.subr.bf16.mxu0 0
    %1816 = vmatpush1.bf16.xpose.msra.mxu0 0
    %1817 = vmatprep.subr.bf16.mxu0 0
    %1818 = vmatpush1.bf16.xpose.msra.mxu0 0
    %1819 = vmatprep.subr.bf16.mxu0 0
    %1820 = vmatpush1.bf16.xpose.msra.mxu0 0
    %1821 = vmatprep.subr.bf16.mxu0 0
    %1822 = vmatpush1.bf16.xpose.msra.mxu0 %v1805
    %1823 = vmatprep.subr.bf16.mxu0 0
    %1824 = vmatpush2.bf16.xpose.msra.mxu0 0
    %1825 = vmatprep.subr.bf16.mxu0 0
    %1826 = vmatpush2.bf16.xpose.msra.mxu0 0
    %1827 = vmatprep.subr.bf16.mxu0 0
    %1828 = vmatpush2.bf16.xpose.msra.mxu0 0
    %1829 = vmatprep.subr.bf16.mxu0 0
    %1830 = vmatpush2.bf16.xpose.msra.mxu0 0
    %1831 = vmatprep.subr.bf16.mxu0 0
    %1832 = vmatpush2.bf16.xpose.msra.mxu0 0
    %1833 = vmatprep.subr.bf16.mxu0 0
    %1834 = vmatpush2.bf16.xpose.msra.mxu0 0
    %1835 = vmatprep.subr.bf16.mxu0 0
    %1836 = vmatpush2.bf16.xpose.msra.mxu0 0
    %1837 = vmatprep.subr.bf16.mxu0 0
    %1838 = vmatpush2.bf16.xpose.msra.mxu0 0
    %1839 = vmatprep.mubr.bf16.mxu0 0
    %1840 = vmatmul.mubr.bf16.gmra.mxu0 %v1802
    %v1841 = vpop.f32.mrf.mxu0
    %v1842 = vadd.f32 0.0, %v1841
    %v1843 = vpop.f32.mrf.mxu0
    %v1844 = vpop.f32.mrf.mxu0
    %v1845 = vpop.f32.mrf.mxu0
    %1846 = vdwg.mxu0
    %v1847 = vmul.f32 %v1692, 0.35355338
    %v1848 = vmul.f32 %v1742, 0.35355338
    %v1849 = vmul.f32 %v1792, 0.35355338
    %v1850 = vmul.f32 %v1842, 0.35355338
    %v1851 = vsel %vm320, %v1847, -inf
    %1852 = vmax.xlane.f32.xlu0 %v1851
    %v1853 = vpop.xlane.xlu0 %1852
    %v1854 = vsel %vm320, %v1848, -inf
    %1855 = vmax.xlane.f32.xlu0 %v1854
    %v1856 = vpop.xlane.xlu0 %1855
    %v1857 = vsel %vm320, %v1849, -inf
    %1858 = vmax.xlane.f32.xlu0 %v1857
    %v1859 = vpop.xlane.xlu0 %1858
    %v1860 = vsel %vm320, %v1850, -inf
    %1861 = vmax.xlane.f32.xlu0 %v1860
    %v1862 = vpop.xlane.xlu0 %1861
    %v1863 = vsub.f32 %v1847, %v1853
    %v1864 = vsub.f32 %v1848, %v1856
    %v1865 = vsub.f32 %v1849, %v1859
    %v1866 = vsub.f32 %v1850, %v1862
    %v1867 = vmul.f32 %v1863, 1.442695
    %v1868 = vpow.pop %v1867
    %v1869 = vmul.f32 %v1864, 1.442695
    %v1870 = vpow.pop %v1869
    %v1871 = vmul.f32 %v1865, 1.442695
    %v1872 = vpow.pop %v1871
    %v1873 = vmul.f32 %v1866, 1.442695
    %v1874 = vpow.pop %v1873
    %v1875 = vsel %vm320, %v1868, 0.0
    %1876 = vadd.xlane.f32.xlu0 %v1875
    %v1877 = vpop.xlane.xlu0 %1876
    %v1878 = vsel %vm320, %v1870, 0.0
    %1879 = vadd.xlane.f32.xlu0 %v1878
    %v1880 = vpop.xlane.xlu0 %1879
    %v1881 = vsel %vm320, %v1872, 0.0
    %1882 = vadd.xlane.f32.xlu0 %v1881
    %v1883 = vpop.xlane.xlu0 %1882
    %v1884 = vsel %vm320, %v1874, 0.0
    %1885 = vadd.xlane.f32.xlu0 %v1884
    %v1886 = vpop.xlane.xlu0 %1885
    %v1887 = vrcp.pop %v1877
    %v1888 = vrcp.pop %v1880
    %v1889 = vrcp.pop %v1883
    %v1890 = vrcp.pop %v1886
    %v1891 = vmul.f32 %v1868, %v1887
    %v1892 = vmul.f32 %v1870, %v1888
    %v1893 = vmul.f32 %v1872, %v1889
    %v1894 = vmul.f32 %v1874, %v1890
    %v1895 = vpack.c.bf16 %v1891, %v1891
    %v1896 = vpack.c.bf16 %v1892, %v1892
    %v1897 = vpack.c.bf16 %v1893, %v1893
    %v1898 = vpack.c.bf16 %v1894, %v1894
    %1899 = vrot.lane.b32.xlu0 %v313, 40
    %v1900 = vpop.permute.xlu0 %1899
    %v1902 = vsel %vm320, %v1895, 0
    %v1905 = vsel %vm571, %v1900, 0
    %1907 = vmatprep.subr.bf16.mxu0 0
    %1908 = vmatpush1.bf16.msra.mxu0 0
    %1909 = vmatprep.subr.bf16.mxu0 0
    %1910 = vmatpush1.bf16.msra.mxu0 0
    %1911 = vmatprep.subr.bf16.mxu0 0
    %1912 = vmatpush1.bf16.msra.mxu0 0
    %1913 = vmatprep.subr.bf16.mxu0 0
    %1914 = vmatpush1.bf16.msra.mxu0 0
    %1915 = vmatprep.subr.bf16.mxu0 0
    %1916 = vmatpush1.bf16.msra.mxu0 0
    %1917 = vmatprep.subr.bf16.mxu0 0
    %1918 = vmatpush1.bf16.msra.mxu0 0
    %1919 = vmatprep.subr.bf16.mxu0 0
    %1920 = vmatpush1.bf16.msra.mxu0 0
    %1921 = vmatprep.subr.bf16.mxu0 0
    %1922 = vmatpush1.bf16.msra.mxu0 %v1905
    %1923 = vmatprep.subr.bf16.mxu0 0
    %1924 = vmatpush2.bf16.msra.mxu0 0
    %1925 = vmatprep.subr.bf16.mxu0 0
    %1926 = vmatpush2.bf16.msra.mxu0 0
    %1927 = vmatprep.subr.bf16.mxu0 0
    %1928 = vmatpush2.bf16.msra.mxu0 0
    %1929 = vmatprep.subr.bf16.mxu0 0
    %1930 = vmatpush2.bf16.msra.mxu0 0
    %1931 = vmatprep.subr.bf16.mxu0 0
    %1932 = vmatpush2.bf16.msra.mxu0 0
    %1933 = vmatprep.subr.bf16.mxu0 0
    %1934 = vmatpush2.bf16.msra.mxu0 0
    %1935 = vmatprep.subr.bf16.mxu0 0
    %1936 = vmatpush2.bf16.msra.mxu0 0
    %1937 = vmatprep.subr.bf16.mxu0 0
    %1938 = vmatpush2.bf16.msra.mxu0 0
    %1939 = vmatprep.mubr.bf16.mxu0 0
    %1940 = vmatmul.mubr.bf16.gmra.mxu0 %v1902
    %v1941 = vpop.f32.mrf.mxu0
    %v1942 = vadd.f32 0.0, %v1941
    %v1943 = vpop.f32.mrf.mxu0
    %v1944 = vpop.f32.mrf.mxu0
    %v1945 = vpop.f32.mrf.mxu0
    %1946 = vdwg.mxu0
    %1947 = vrot.lane.b32.xlu0 %v314, 40
    %v1948 = vpop.permute.xlu0 %1947
    %v1950 = vsel %vm320, %v1896, 0
    %v1953 = vsel %vm571, %v1948, 0
    %1955 = vmatprep.subr.bf16.mxu0 0
    %1956 = vmatpush1.bf16.msra.mxu0 0
    %1957 = vmatprep.subr.bf16.mxu0 0
    %1958 = vmatpush1.bf16.msra.mxu0 0
    %1959 = vmatprep.subr.bf16.mxu0 0
    %1960 = vmatpush1.bf16.msra.mxu0 0
    %1961 = vmatprep.subr.bf16.mxu0 0
    %1962 = vmatpush1.bf16.msra.mxu0 0
    %1963 = vmatprep.subr.bf16.mxu0 0
    %1964 = vmatpush1.bf16.msra.mxu0 0
    %1965 = vmatprep.subr.bf16.mxu0 0
    %1966 = vmatpush1.bf16.msra.mxu0 0
    %1967 = vmatprep.subr.bf16.mxu0 0
    %1968 = vmatpush1.bf16.msra.mxu0 0
    %1969 = vmatprep.subr.bf16.mxu0 0
    %1970 = vmatpush1.bf16.msra.mxu0 %v1953
    %1971 = vmatprep.subr.bf16.mxu0 0
    %1972 = vmatpush2.bf16.msra.mxu0 0
    %1973 = vmatprep.subr.bf16.mxu0 0
    %1974 = vmatpush2.bf16.msra.mxu0 0
    %1975 = vmatprep.subr.bf16.mxu0 0
    %1976 = vmatpush2.bf16.msra.mxu0 0
    %1977 = vmatprep.subr.bf16.mxu0 0
    %1978 = vmatpush2.bf16.msra.mxu0 0
    %1979 = vmatprep.subr.bf16.mxu0 0
    %1980 = vmatpush2.bf16.msra.mxu0 0
    %1981 = vmatprep.subr.bf16.mxu0 0
    %1982 = vmatpush2.bf16.msra.mxu0 0
    %1983 = vmatprep.subr.bf16.mxu0 0
    %1984 = vmatpush2.bf16.msra.mxu0 0
    %1985 = vmatprep.subr.bf16.mxu0 0
    %1986 = vmatpush2.bf16.msra.mxu0 0
    %1987 = vmatprep.mubr.bf16.mxu0 0
    %1988 = vmatmul.mubr.bf16.gmra.mxu0 %v1950
    %v1989 = vpop.f32.mrf.mxu0
    %v1990 = vadd.f32 0.0, %v1989
    %v1991 = vpop.f32.mrf.mxu0
    %v1992 = vpop.f32.mrf.mxu0
    %v1993 = vpop.f32.mrf.mxu0
    %1994 = vdwg.mxu0
    %1995 = vrot.lane.b32.xlu0 %v315, 40
    %v1996 = vpop.permute.xlu0 %1995
    %v1998 = vsel %vm320, %v1897, 0
    %v2001 = vsel %vm571, %v1996, 0
    %2003 = vmatprep.subr.bf16.mxu0 0
    %2004 = vmatpush1.bf16.msra.mxu0 0
    %2005 = vmatprep.subr.bf16.mxu0 0
    %2006 = vmatpush1.bf16.msra.mxu0 0
    %2007 = vmatprep.subr.bf16.mxu0 0
    %2008 = vmatpush1.bf16.msra.mxu0 0
    %2009 = vmatprep.subr.bf16.mxu0 0
    %2010 = vmatpush1.bf16.msra.mxu0 0
    %2011 = vmatprep.subr.bf16.mxu0 0
    %2012 = vmatpush1.bf16.msra.mxu0 0
    %2013 = vmatprep.subr.bf16.mxu0 0
    %2014 = vmatpush1.bf16.msra.mxu0 0
    %2015 = vmatprep.subr.bf16.mxu0 0
    %2016 = vmatpush1.bf16.msra.mxu0 0
    %2017 = vmatprep.subr.bf16.mxu0 0
    %2018 = vmatpush1.bf16.msra.mxu0 %v2001
    %2019 = vmatprep.subr.bf16.mxu0 0
    %2020 = vmatpush2.bf16.msra.mxu0 0
    %2021 = vmatprep.subr.bf16.mxu0 0
    %2022 = vmatpush2.bf16.msra.mxu0 0
    %2023 = vmatprep.subr.bf16.mxu0 0
    %2024 = vmatpush2.bf16.msra.mxu0 0
    %2025 = vmatprep.subr.bf16.mxu0 0
    %2026 = vmatpush2.bf16.msra.mxu0 0
    %2027 = vmatprep.subr.bf16.mxu0 0
    %2028 = vmatpush2.bf16.msra.mxu0 0
    %2029 = vmatprep.subr.bf16.mxu0 0
    %2030 = vmatpush2.bf16.msra.mxu0 0
    %2031 = vmatprep.subr.bf16.mxu0 0
    %2032 = vmatpush2.bf16.msra.mxu0 0
    %2033 = vmatprep.subr.bf16.mxu0 0
    %2034 = vmatpush2.bf16.msra.mxu0 0
    %2035 = vmatprep.mubr.bf16.mxu0 0
    %2036 = vmatmul.mubr.bf16.gmra.mxu0 %v1998
    %v2037 = vpop.f32.mrf.mxu0
    %v2038 = vadd.f32 0.0, %v2037
    %v2039 = vpop.f32.mrf.mxu0
    %v2040 = vpop.f32.mrf.mxu0
    %v2041 = vpop.f32.mrf.mxu0
    %2042 = vdwg.mxu0
    %2043 = vrot.lane.b32.xlu0 %v316, 40
    %v2044 = vpop.permute.xlu0 %2043
    %v2046 = vsel %vm320, %v1898, 0
    %v2049 = vsel %vm571, %v2044, 0
    %2051 = vmatprep.subr.bf16.mxu0 0
    %2052 = vmatpush1.bf16.msra.mxu0 0
    %2053 = vmatprep.subr.bf16.mxu0 0
    %2054 = vmatpush1.bf16.msra.mxu0 0
    %2055 = vmatprep.subr.bf16.mxu0 0
    %2056 = vmatpush1.bf16.msra.mxu0 0
    %2057 = vmatprep.subr.bf16.mxu0 0
    %2058 = vmatpush1.bf16.msra.mxu0 0
    %2059 = vmatprep.subr.bf16.mxu0 0
    %2060 = vmatpush1.bf16.msra.mxu0 0
    %2061 = vmatprep.subr.bf16.mxu0 0
    %2062 = vmatpush1.bf16.msra.mxu0 0
    %2063 = vmatprep.subr.bf16.mxu0 0
    %2064 = vmatpush1.bf16.msra.mxu0 0
    %2065 = vmatprep.subr.bf16.mxu0 0
    %2066 = vmatpush1.bf16.msra.mxu0 %v2049
    %2067 = vmatprep.subr.bf16.mxu0 0
    %2068 = vmatpush2.bf16.msra.mxu0 0
    %2069 = vmatprep.subr.bf16.mxu0 0
    %2070 = vmatpush2.bf16.msra.mxu0 0
    %2071 = vmatprep.subr.bf16.mxu0 0
    %2072 = vmatpush2.bf16.msra.mxu0 0
    %2073 = vmatprep.subr.bf16.mxu0 0
    %2074 = vmatpush2.bf16.msra.mxu0 0
    %2075 = vmatprep.subr.bf16.mxu0 0
    %2076 = vmatpush2.bf16.msra.mxu0 0
    %2077 = vmatprep.subr.bf16.mxu0 0
    %2078 = vmatpush2.bf16.msra.mxu0 0
    %2079 = vmatprep.subr.bf16.mxu0 0
    %2080 = vmatpush2.bf16.msra.mxu0 0
    %2081 = vmatprep.subr.bf16.mxu0 0
    %2082 = vmatpush2.bf16.msra.mxu0 0
    %2083 = vmatprep.mubr.bf16.mxu0 0
    %2084 = vmatmul.mubr.bf16.gmra.mxu0 %v2046
    %v2085 = vpop.f32.mrf.mxu0
    %v2086 = vadd.f32 0.0, %v2085
    %v2087 = vpop.f32.mrf.mxu0
    %v2088 = vpop.f32.mrf.mxu0
    %v2089 = vpop.f32.mrf.mxu0
    %2090 = vdwg.mxu0
    %2095 = vrot.lane.b32.xlu0 %v1054, 8
    %v2096 = vpop.permute.xlu0 %2095
    %2097 = vrot.lane.b32.xlu0 %v1102, 8
    %v2098 = vpop.permute.xlu0 %2097
    %2099 = vrot.lane.b32.xlu0 %v1150, 8
    %v2100 = vpop.permute.xlu0 %2099
    %2101 = vrot.lane.b32.xlu0 %v1198, 8
    %v2102 = vpop.permute.xlu0 %2101
    %2111 = vrot.lane.b32.xlu0 %v1498, 16
    %v2112 = vpop.permute.xlu0 %2111
    %2113 = vrot.lane.b32.xlu0 %v1546, 16
    %v2114 = vpop.permute.xlu0 %2113
    %2115 = vrot.lane.b32.xlu0 %v1594, 16
    %v2116 = vpop.permute.xlu0 %2115
    %2117 = vrot.lane.b32.xlu0 %v1642, 16
    %v2118 = vpop.permute.xlu0 %2117
    %2127 = vrot.lane.b32.xlu0 %v1942, 24
    %v2128 = vpop.permute.xlu0 %2127
    %2129 = vrot.lane.b32.xlu0 %v1990, 24
    %v2130 = vpop.permute.xlu0 %2129
    %2131 = vrot.lane.b32.xlu0 %v2038, 24
    %v2132 = vpop.permute.xlu0 %2131
    %2133 = vrot.lane.b32.xlu0 %v2086, 24
    %v2134 = vpop.permute.xlu0 %2133
    %v2139 = vsel %vm320, %v610, %v2096
    %v2140 = vsel %vm320, %v658, %v2098
    %v2141 = vsel %vm320, %v706, %v2100
    %v2142 = vsel %vm320, %v754, %v2102
    %vm2143 = vcmask 130048
    %v2144 = vsel %vm2143, %v2139, %v2112
    %v2145 = vsel %vm2143, %v2140, %v2114
    %v2146 = vsel %vm2143, %v2141, %v2116
    %v2147 = vsel %vm2143, %v2142, %v2118
    %vm2148 = vcmask 195584
    %v2149 = vsel %vm2148, %v2144, %v2128
    %v2150 = vsel %vm2148, %v2145, %v2130
    %v2151 = vsel %vm2148, %v2146, %v2132
    %v2152 = vsel %vm2148, %v2147, %v2134
    %v2153 = vpack.c.bf16 %v2150, %v2149
    %v2154 = vpack.c.bf16 %v2152, %v2151
    %v2155 = vld [vmem:[%s6] sm:$0xf]
    %v2156 = vld [vmem:[%s6 + $0x4] sm:$0xf]
    %v2157 = vld [vmem:[%s6 + $0x8] sm:$0xf]
    %v2158 = vld [vmem:[%s6 + $0xc] sm:$0xf]
    %v2159 = vld [vmem:[#allocation9] sm:$0x1]
    %v2161 = vlaneseq
    %v2162 = vshrl.u32 %v2161, 7
    %v2163 = vsub.s32 0, %v2162
    %v2164 = vrot.slane %v2159, %v2163
    %v2170 = vunpack.c.l.b16 %v2155
    %v2171 = vunpack.c.l.b16 %v2156
    %v2172 = vunpack.c.l.b16 %v2157
    %v2173 = vunpack.c.l.b16 %v2158
    %v2174 = vpack.c.b16 %v2171, %v2170
    %v2175 = vpack.c.b16 %v2173, %v2172
    %v2179 = vsel %vm159, %v2153, 0
    %v2182 = vsel %vm159, %v2154, 0
    %2184 = vmatprep.subr.bf16.mxu0 0
    %2185 = vmatpush1.bf16.msra.mxu0 0
    %2186 = vmatprep.subr.bf16.mxu0 0
    %2187 = vmatpush1.bf16.msra.mxu0 0
    %2188 = vmatprep.subr.bf16.mxu0 0
    %2189 = vmatpush1.bf16.msra.mxu0 0
    %2190 = vmatprep.subr.bf16.mxu0 0
    %2191 = vmatpush1.bf16.msra.mxu0 0
    %2192 = vmatprep.subr.bf16.mxu0 0
    %2193 = vmatpush1.bf16.msra.mxu0 0
    %2194 = vmatprep.subr.bf16.mxu0 0
    %2195 = vmatpush1.bf16.msra.mxu0 0
    %2196 = vmatprep.subr.bf16.mxu0 0
    %2197 = vmatpush1.bf16.msra.mxu0 %v2175
    %2198 = vmatprep.subr.bf16.mxu0 0
    %2199 = vmatpush1.bf16.msra.mxu0 %v2174
    %2200 = vmatprep.subr.bf16.mxu0 0
    %2201 = vmatpush2.bf16.msra.mxu0 0
    %2202 = vmatprep.subr.bf16.mxu0 0
    %2203 = vmatpush2.bf16.msra.mxu0 0
    %2204 = vmatprep.subr.bf16.mxu0 0
    %2205 = vmatpush2.bf16.msra.mxu0 0
    %2206 = vmatprep.subr.bf16.mxu0 0
    %2207 = vmatpush2.bf16.msra.mxu0 0
    %2208 = vmatprep.subr.bf16.mxu0 0
    %2209 = vmatpush2.bf16.msra.mxu0 0
    %2210 = vmatprep.subr.bf16.mxu0 0
    %2211 = vmatpush2.bf16.msra.mxu0 0
    %2212 = vmatprep.subr.bf16.mxu0 0
    %2213 = vmatpush2.bf16.msra.mxu0 0
    %2214 = vmatprep.subr.bf16.mxu0 0
    %2215 = vmatpush2.bf16.msra.mxu0 0
    %2216 = vmatprep.mubr.bf16.mxu0 0
    %2217 = vmatmul.mubr.bf16.gmra.mxu0 %v2179
    %v2218 = vpop.f32.mrf.mxu0
    %v2219 = vadd.f32 %v2164, %v2218
    %v2220 = vpop.f32.mrf.mxu0
    %v2221 = vpop.f32.mrf.mxu0
    %v2222 = vadd.f32 %v2164, %v2221
    %v2223 = vpop.f32.mrf.mxu0
    %2224 = vmatprep.mubr.bf16.mxu0 0
    %2225 = vmatmul.mubr.bf16.gmra.mxu0 %v2182
    %v2226 = vpop.f32.mrf.mxu0
    %v2227 = vadd.f32 %v2164, %v2226
    %v2228 = vpop.f32.mrf.mxu0
    %v2229 = vpop.f32.mrf.mxu0
    %v2230 = vadd.f32 %v2164, %v2229
    %v2231 = vpop.f32.mrf.mxu0
    %2232 = vdwg.mxu0
    %v2233 = vadd.f32 %v229, %v2219
    %v2234 = vadd.f32 %v230, %v2222
    %v2235 = vadd.f32 %v231, %v2227
    %v2236 = vadd.f32 %v232, %v2230
    %v2237 = vld [vmem:[#allocation11] sm:$0x1]
    %v2238 = vld [vmem:[#allocation12] sm:$0x1]
    %v2239 = vsel %vm159, %v2233, 0.0
    %2240 = vadd.xlane.f32.xlu0 %v2239
    %v2241 = vpop.xlane.xlu0 %2240
    %v2242 = vsel %vm159, %v2234, 0.0
    %2243 = vadd.xlane.f32.xlu0 %v2242
    %v2244 = vpop.xlane.xlu0 %2243
    %v2245 = vsel %vm159, %v2235, 0.0
    %2246 = vadd.xlane.f32.xlu0 %v2245
    %v2247 = vpop.xlane.xlu0 %2246
    %v2248 = vsel %vm159, %v2236, 0.0
    %2249 = vadd.xlane.f32.xlu0 %v2248
    %v2250 = vpop.xlane.xlu0 %2249
    %v2251 = vmul.f32 %v2241, %v172
    %v2252 = vmul.f32 %v2244, %v172
    %v2253 = vmul.f32 %v2247, %v172
    %v2254 = vmul.f32 %v2250, %v172
    %v2255 = vsub.f32 %v2233, %v2251
    %v2256 = vsub.f32 %v2234, %v2252
    %v2257 = vsub.f32 %v2235, %v2253
    %v2258 = vsub.f32 %v2236, %v2254
    %v2259 = vmul.f32 %v2255, %v2255
    %v2260 = vmul.f32 %v2256, %v2256
    %v2261 = vmul.f32 %v2257, %v2257
    %v2262 = vmul.f32 %v2258, %v2258
    %v2263 = vsel %vm159, %v2259, 0.0
    %2264 = vadd.xlane.f32.xlu0 %v2263
    %v2265 = vpop.xlane.xlu0 %2264
    %v2266 = vsel %vm159, %v2260, 0.0
    %2267 = vadd.xlane.f32.xlu0 %v2266
    %v2268 = vpop.xlane.xlu0 %2267
    %v2269 = vsel %vm159, %v2261, 0.0
    %2270 = vadd.xlane.f32.xlu0 %v2269
    %v2271 = vpop.xlane.xlu0 %2270
    %v2272 = vsel %vm159, %v2262, 0.0
    %2273 = vadd.xlane.f32.xlu0 %v2272
    %v2274 = vpop.xlane.xlu0 %2273
    %v2275 = vmul.f32 %v2265, %v172
    %v2276 = vmul.f32 %v2268, %v172
    %v2277 = vmul.f32 %v2271, %v172
    %v2278 = vmul.f32 %v2274, %v172
    %v2279 = vadd.f32 %v2275, 1e-05
    %v2280 = vadd.f32 %v2276, 1e-05
    %v2281 = vadd.f32 %v2277, 1e-05
    %v2282 = vadd.f32 %v2278, 1e-05
    %v2283 = vrsqrt.pop %v2279
    %v2284 = vrsqrt.pop %v2280
    %v2285 = vrsqrt.pop %v2281
    %v2286 = vrsqrt.pop %v2282
    %v2287 = vmul.f32 %v2255, %v2283
    %v2288 = vmul.f32 %v2256, %v2284
    %v2289 = vmul.f32 %v2257, %v2285
    %v2290 = vmul.f32 %v2258, %v2286
    %v2292 = vlaneseq
    %v2293 = vshrl.u32 %v2292, 7
    %v2294 = vsub.s32 0, %v2293
    %v2295 = vrot.slane %v2237, %v2294
    %v2297 = vmul.f32 %v2287, %v2295
    %v2298 = vmul.f32 %v2288, %v2295
    %v2299 = vmul.f32 %v2289, %v2295
    %v2300 = vmul.f32 %v2290, %v2295
    %v2302 = vlaneseq
    %v2303 = vshrl.u32 %v2302, 7
    %v2304 = vsub.s32 0, %v2303
    %v2305 = vrot.slane %v2238, %v2304
    %v2307 = vadd.f32 %v2297, %v2305
    %v2308 = vadd.f32 %v2298, %v2305
    %v2309 = vadd.f32 %v2299, %v2305
    %v2310 = vadd.f32 %v2300, %v2305
    %v2311 = vpack.c.bf16 %v2308, %v2307
    %v2312 = vpack.c.bf16 %v2310, %v2309
    %v2313 = vld [vmem:[#allocation14] sm:$0xf]
    %v2314 = vld [vmem:[#allocation14 + $0x4] sm:$0xf]
    %v2315 = vld [vmem:[#allocation14 + $0x8] sm:$0xf]
    %v2316 = vld [vmem:[#allocation14 + $0xc] sm:$0xf]
    %v2317 = vld [vmem:[%s11] sm:$0x1]
    %v2319 = vlaneseq
    %v2320 = vshrl.u32 %v2319, 7
    %v2321 = vsub.s32 0, %v2320
    %v2322 = vrot.slane %v2317, %v2321
    %v2328 = vunpack.c.l.b16 %v2313
    %v2329 = vunpack.c.l.b16 %v2314
    %v2330 = vunpack.c.l.b16 %v2315
    %v2331 = vunpack.c.l.b16 %v2316
    %v2332 = vpack.c.b16 %v2329, %v2328
    %v2333 = vpack.c.b16 %v2331, %v2330
    %v2337 = vsel %vm159, %v2311, 0
    %v2340 = vsel %vm159, %v2312, 0
    %2342 = vmatprep.subr.bf16.mxu0 0
    %2343 = vmatpush1.bf16.msra.mxu0 0
    %2344 = vmatprep.subr.bf16.mxu0 0
    %2345 = vmatpush1.bf16.msra.mxu0 0
    %2346 = vmatprep.subr.bf16.mxu0 0
    %2347 = vmatpush1.bf16.msra.mxu0 0
    %2348 = vmatprep.subr.bf16.mxu0 0
    %2349 = vmatpush1.bf16.msra.mxu0 0
    %2350 = vmatprep.subr.bf16.mxu0 0
    %2351 = vmatpush1.bf16.msra.mxu0 0
    %2352 = vmatprep.subr.bf16.mxu0 0
    %2353 = vmatpush1.bf16.msra.mxu0 0
    %2354 = vmatprep.subr.bf16.mxu0 0
    %2355 = vmatpush1.bf16.msra.mxu0 %v2333
    %2356 = vmatprep.subr.bf16.mxu0 0
    %2357 = vmatpush1.bf16.msra.mxu0 %v2332
    %2358 = vmatprep.subr.bf16.mxu0 0
    %2359 = vmatpush2.bf16.msra.mxu0 0
    %2360 = vmatprep.subr.bf16.mxu0 0
    %2361 = vmatpush2.bf16.msra.mxu0 0
    %2362 = vmatprep.subr.bf16.mxu0 0
    %2363 = vmatpush2.bf16.msra.mxu0 0
    %2364 = vmatprep.subr.bf16.mxu0 0
    %2365 = vmatpush2.bf16.msra.mxu0 0
    %2366 = vmatprep.subr.bf16.mxu0 0
    %2367 = vmatpush2.bf16.msra.mxu0 0
    %2368 = vmatprep.subr.bf16.mxu0 0
    %2369 = vmatpush2.bf16.msra.mxu0 0
    %2370 = vmatprep.subr.bf16.mxu0 0
    %2371 = vmatpush2.bf16.msra.mxu0 0
    %2372 = vmatprep.subr.bf16.mxu0 0
    %2373 = vmatpush2.bf16.msra.mxu0 0
    %2374 = vmatprep.mubr.bf16.mxu0 0
    %2375 = vmatmul.mubr.bf16.gmra.mxu0 %v2337
    %v2376 = vpop.f32.mrf.mxu0
    %v2377 = vadd.f32 %v2322, %v2376
    %v2378 = vpop.f32.mrf.mxu0
    %v2379 = vpop.f32.mrf.mxu0
    %v2380 = vadd.f32 %v2322, %v2379
    %v2381 = vpop.f32.mrf.mxu0
    %2382 = vmatprep.mubr.bf16.mxu0 0
    %2383 = vmatmul.mubr.bf16.gmra.mxu0 %v2340
    %v2384 = vpop.f32.mrf.mxu0
    %v2385 = vadd.f32 %v2322, %v2384
    %v2386 = vpop.f32.mrf.mxu0
    %v2387 = vpop.f32.mrf.mxu0
    %v2388 = vadd.f32 %v2322, %v2387
    %v2389 = vpop.f32.mrf.mxu0
    %2390 = vdwg.mxu0
    %v2391 = vmul.f32 %v2377, 0.5
    %v2392 = vmul.f32 %v2380, 0.5
    %v2393 = vmul.f32 %v2385, 0.5
    %v2394 = vmul.f32 %v2388, 0.5
    %v2395 = vmul.f32 %v2377, 0.044715
    %v2396 = vmul.f32 %v2380, 0.044715
    %v2397 = vmul.f32 %v2385, 0.044715
    %v2398 = vmul.f32 %v2388, 0.044715
    %v2399 = vmul.f32 %v2395, %v2377
    %v2400 = vmul.f32 %v2396, %v2380
    %v2401 = vmul.f32 %v2397, %v2385
    %v2402 = vmul.f32 %v2398, %v2388
    %v2403 = vmul.f32 %v2399, %v2377
    %v2404 = vmul.f32 %v2400, %v2380
    %v2405 = vmul.f32 %v2401, %v2385
    %v2406 = vmul.f32 %v2402, %v2388
    %v2407 = vadd.f32 %v2377, %v2403
    %v2408 = vadd.f32 %v2380, %v2404
    %v2409 = vadd.f32 %v2385, %v2405
    %v2410 = vadd.f32 %v2388, %v2406
    %v2411 = vmul.f32 %v2407, 0.7978846
    %v2412 = vmul.f32 %v2408, 0.7978846
    %v2413 = vmul.f32 %v2409, 0.7978846
    %v2414 = vmul.f32 %v2410, 0.7978846
    %v2415 = vtanh.pop %v2411
    %v2416 = vtanh.pop %v2412
    %v2417 = vtanh.pop %v2413
    %v2418 = vtanh.pop %v2414
    %v2419 = vadd.f32 %v2415, 1.0
    %v2420 = vadd.f32 %v2416, 1.0
    %v2421 = vadd.f32 %v2417, 1.0
    %v2422 = vadd.f32 %v2418, 1.0
    %v2423 = vmul.f32 %v2391, %v2419
    %v2424 = vmul.f32 %v2392, %v2420
    %v2425 = vmul.f32 %v2393, %v2421
    %v2426 = vmul.f32 %v2394, %v2422
    %v2427 = vpack.c.bf16 %v2424, %v2423
    %v2428 = vpack.c.bf16 %v2426, %v2425
    %v2429 = vld [vmem:[%s12] sm:$0xf]
    %v2430 = vld [vmem:[%s12 + $0x4] sm:$0xf]
    %v2431 = vld [vmem:[%s12 + $0x8] sm:$0xf]
    %v2432 = vld [vmem:[%s12 + $0xc] sm:$0xf]
    %v2433 = vld [vmem:[%s12 + $0x10] sm:$0xf]
    %v2434 = vld [vmem:[%s12 + $0x14] sm:$0xf]
    %v2435 = vld [vmem:[%s12 + $0x18] sm:$0xf]
    %v2436 = vld [vmem:[%s12 + $0x1c] sm:$0xf]
    %v2437 = vld [vmem:[%s13] sm:$0x1]
    %v2439 = vlaneseq
    %v2440 = vshrl.u32 %v2439, 7
    %v2441 = vsub.s32 0, %v2440
    %v2442 = vrot.slane %v2437, %v2441
    %v2452 = vunpack.c.l.b16 %v2429
    %v2453 = vunpack.c.l.b16 %v2430
    %v2454 = vunpack.c.l.b16 %v2431
    %v2455 = vunpack.c.l.b16 %v2432
    %v2456 = vunpack.c.l.b16 %v2433
    %v2457 = vunpack.c.l.b16 %v2434
    %v2458 = vunpack.c.l.b16 %v2435
    %v2459 = vunpack.c.l.b16 %v2436
    %v2460 = vpack.c.b16 %v2453, %v2452
    %v2461 = vpack.c.b16 %v2455, %v2454
    %v2462 = vpack.c.b16 %v2457, %v2456
    %v2463 = vpack.c.b16 %v2459, %v2458
    %vm2468 = vcmask 523264
    %v2470 = vsel %vm2468, %v2427, 0
    %v2473 = vsel %vm2468, %v2428, 0
    %2475 = vmatprep.subr.bf16.mxu0 0
    %2476 = vmatpush1.bf16.msra.mxu0 0
    %2477 = vmatprep.subr.bf16.mxu0 0
    %2478 = vmatpush1.bf16.msra.mxu0 0
    %2479 = vmatprep.subr.bf16.mxu0 0
    %2480 = vmatpush1.bf16.msra.mxu0 0
    %2481 = vmatprep.subr.bf16.mxu0 0
    %2482 = vmatpush1.bf16.msra.mxu0 0
    %2483 = vmatprep.subr.bf16.mxu0 0
    %2484 = vmatpush1.bf16.msra.mxu0 %v2463
    %2485 = vmatprep.subr.bf16.mxu0 0
    %2486 = vmatpush1.bf16.msra.mxu0 %v2462
    %2487 = vmatprep.subr.bf16.mxu0 0
    %2488 = vmatpush1.bf16.msra.mxu0 %v2461
    %2489 = vmatprep.subr.bf16.mxu0 0
    %2490 = vmatpush1.bf16.msra.mxu0 %v2460
    %2491 = vmatprep.subr.bf16.mxu0 0
    %2492 = vmatpush2.bf16.msra.mxu0 0
    %2493 = vmatprep.subr.bf16.mxu0 0
    %2494 = vmatpush2.bf16.msra.mxu0 0
    %2495 = vmatprep.subr.bf16.mxu0 0
    %2496 = vmatpush2.bf16.msra.mxu0 0
    %2497 = vmatprep.subr.bf16.mxu0 0
    %2498 = vmatpush2.bf16.msra.mxu0 0
    %2499 = vmatprep.subr.bf16.mxu0 0
    %2500 = vmatpush2.bf16.msra.mxu0 0
    %2501 = vmatprep.subr.bf16.mxu0 0
    %2502 = vmatpush2.bf16.msra.mxu0 0
    %2503 = vmatprep.subr.bf16.mxu0 0
    %2504 = vmatpush2.bf16.msra.mxu0 0
    %2505 = vmatprep.subr.bf16.mxu0 0
    %2506 = vmatpush2.bf16.msra.mxu0 0
    %2507 = vmatprep.mubr.bf16.mxu0 0
    %2508 = vmatmul.mubr.bf16.gmra.mxu0 %v2470
    %v2509 = vpop.f32.mrf.mxu0
    %v2510 = vadd.f32 %v2442, %v2509
    %v2511 = vpop.f32.mrf.mxu0
    %v2512 = vpop.f32.mrf.mxu0
    %v2513 = vadd.f32 %v2442, %v2512
    %v2514 = vpop.f32.mrf.mxu0
    %2515 = vmatprep.mubr.bf16.mxu0 0
    %2516 = vmatmul.mubr.bf16.gmra.mxu0 %v2473
    %v2517 = vpop.f32.mrf.mxu0
    %v2518 = vadd.f32 %v2442, %v2517
    %v2519 = vpop.f32.mrf.mxu0
    %v2520 = vpop.f32.mrf.mxu0
    %v2521 = vadd.f32 %v2442, %v2520
    %v2522 = vpop.f32.mrf.mxu0
    %2523 = vdwg.mxu0
    %v2524 = vadd.f32 %v2307, %v2510
    %v2525 = vadd.f32 %v2308, %v2513
    %v2526 = vadd.f32 %v2309, %v2518
    %v2527 = vadd.f32 %v2310, %v2521
    %v2528 = vld [vmem:[%s14] sm:$0x1]
    %v2529 = vld [vmem:[%s15] sm:$0x1]
    %v2530 = vsel %vm159, %v2524, 0.0
    %2531 = vadd.xlane.f32.xlu0 %v2530
    %v2532 = vpop.xlane.xlu0 %2531
    %v2533 = vsel %vm159, %v2525, 0.0
    %2534 = vadd.xlane.f32.xlu0 %v2533
    %v2535 = vpop.xlane.xlu0 %2534
    %v2536 = vsel %vm159, %v2526, 0.0
    %2537 = vadd.xlane.f32.xlu0 %v2536
    %v2538 = vpop.xlane.xlu0 %2537
    %v2539 = vsel %vm159, %v2527, 0.0
    %2540 = vadd.xlane.f32.xlu0 %v2539
    %v2541 = vpop.xlane.xlu0 %2540
    %v2542 = vmul.f32 %v2532, %v172
    %v2543 = vmul.f32 %v2535, %v172
    %v2544 = vmul.f32 %v2538, %v172
    %v2545 = vmul.f32 %v2541, %v172
    %v2546 = vsub.f32 %v2524, %v2542
    %v2547 = vsub.f32 %v2525, %v2543
    %v2548 = vsub.f32 %v2526, %v2544
    %v2549 = vsub.f32 %v2527, %v2545
    %v2550 = vmul.f32 %v2546, %v2546
    %v2551 = vmul.f32 %v2547, %v2547
    %v2552 = vmul.f32 %v2548, %v2548
    %v2553 = vmul.f32 %v2549, %v2549
    %v2554 = vsel %vm159, %v2550, 0.0
    %2555 = vadd.xlane.f32.xlu0 %v2554
    %v2556 = vpop.xlane.xlu0 %2555
    %v2557 = vsel %vm159, %v2551, 0.0
    %2558 = vadd.xlane.f32.xlu0 %v2557
    %v2559 = vpop.xlane.xlu0 %2558
    %v2560 = vsel %vm159, %v2552, 0.0
    %2561 = vadd.xlane.f32.xlu0 %v2560
    %v2562 = vpop.xlane.xlu0 %2561
    %v2563 = vsel %vm159, %v2553, 0.0
    %2564 = vadd.xlane.f32.xlu0 %v2563
    %v2565 = vpop.xlane.xlu0 %2564
    %v2566 = vmul.f32 %v2556, %v172
    %v2567 = vmul.f32 %v2559, %v172
    %v2568 = vmul.f32 %v2562, %v172
    %v2569 = vmul.f32 %v2565, %v172
    %v2570 = vadd.f32 %v2566, 1e-05
    %v2571 = vadd.f32 %v2567, 1e-05
    %v2572 = vadd.f32 %v2568, 1e-05
    %v2573 = vadd.f32 %v2569, 1e-05
    %v2574 = vrsqrt.pop %v2570
    %v2575 = vrsqrt.pop %v2571
    %v2576 = vrsqrt.pop %v2572
    %v2577 = vrsqrt.pop %v2573
    %v2578 = vmul.f32 %v2546, %v2574
    %v2579 = vmul.f32 %v2547, %v2575
    %v2580 = vmul.f32 %v2548, %v2576
    %v2581 = vmul.f32 %v2549, %v2577
    %v2583 = vlaneseq
    %v2584 = vshrl.u32 %v2583, 7
    %v2585 = vsub.s32 0, %v2584
    %v2586 = vrot.slane %v2528, %v2585
    %v2588 = vmul.f32 %v2578, %v2586
    %v2589 = vmul.f32 %v2579, %v2586
    %v2590 = vmul.f32 %v2580, %v2586
    %v2591 = vmul.f32 %v2581, %v2586
    %v2593 = vlaneseq
    %v2594 = vshrl.u32 %v2593, 7
    %v2595 = vsub.s32 0, %v2594
    %v2596 = vrot.slane %v2529, %v2595
    %v2598 = vadd.f32 %v2588, %v2596
    %v2599 = vadd.f32 %v2589, %v2596
    %v2600 = vadd.f32 %v2590, %v2596
    %v2601 = vadd.f32 %v2591, %v2596
    %v2602 = vpack.c.bf16 %v2599, %v2598
    %v2603 = vpack.c.bf16 %v2601, %v2600
    %s2604 = scalar_lea.vmem %s4, 16
    %v2605 = vld [vmem:[%s2604] sm:$0xf]
    %v2606 = vld [vmem:[%s2604 + $0x4] sm:$0xf]
    %v2607 = vld [vmem:[%s2604 + $0x8] sm:$0xf]
    %v2608 = vld [vmem:[%s2604 + $0xc] sm:$0xf]
    %s2609 = scalar_lea.vmem [#allocation8], 1
    %v2610 = vld [vmem:[%s2609] sm:$0x1]
    %v2612 = vlaneseq
    %v2613 = vshrl.u32 %v2612, 7
    %v2614 = vsub.s32 0, %v2613
    %v2615 = vrot.slane %v2610, %v2614
    %v2621 = vunpack.c.l.b16 %v2605
    %v2622 = vunpack.c.l.b16 %v2606
    %v2623 = vunpack.c.l.b16 %v2607
    %v2624 = vunpack.c.l.b16 %v2608
    %v2625 = vpack.c.b16 %v2622, %v2621
    %v2626 = vpack.c.b16 %v2624, %v2623
    %v2630 = vsel %vm159, %v2602, 0
    %v2633 = vsel %vm159, %v2603, 0
    %2635 = vmatprep.subr.bf16.mxu0 0
    %2636 = vmatpush1.bf16.msra.mxu0 0
    %2637 = vmatprep.subr.bf16.mxu0 0
    %2638 = vmatpush1.bf16.msra.mxu0 0
    %2639 = vmatprep.subr.bf16.mxu0 0
    %2640 = vmatpush1.bf16.msra.mxu0 0
    %2641 = vmatprep.subr.bf16.mxu0 0
    %2642 = vmatpush1.bf16.msra.mxu0 0
    %2643 = vmatprep.subr.bf16.mxu0 0
    %2644 = vmatpush1.bf16.msra.mxu0 0
    %2645 = vmatprep.subr.bf16.mxu0 0
    %2646 = vmatpush1.bf16.msra.mxu0 0
    %2647 = vmatprep.subr.bf16.mxu0 0
    %2648 = vmatpush1.bf16.msra.mxu0 %v2626
    %2649 = vmatprep.subr.bf16.mxu0 0
    %2650 = vmatpush1.bf16.msra.mxu0 %v2625
    %2651 = vmatprep.subr.bf16.mxu0 0
    %2652 = vmatpush2.bf16.msra.mxu0 0
    %2653 = vmatprep.subr.bf16.mxu0 0
    %2654 = vmatpush2.bf16.msra.mxu0 0
    %2655 = vmatprep.subr.bf16.mxu0 0
    %2656 = vmatpush2.bf16.msra.mxu0 0
    %2657 = vmatprep.subr.bf16.mxu0 0
    %2658 = vmatpush2.bf16.msra.mxu0 0
    %2659 = vmatprep.subr.bf16.mxu0 0
    %2660 = vmatpush2.bf16.msra.mxu0 0
    %2661 = vmatprep.subr.bf16.mxu0 0
    %2662 = vmatpush2.bf16.msra.mxu0 0
    %2663 = vmatprep.subr.bf16.mxu0 0
    %2664 = vmatpush2.bf16.msra.mxu0 0
    %2665 = vmatprep.subr.bf16.mxu0 0
    %2666 = vmatpush2.bf16.msra.mxu0 0
    %2667 = vmatprep.mubr.bf16.mxu0 0
    %2668 = vmatmul.mubr.bf16.gmra.mxu0 %v2630
    %v2669 = vpop.f32.mrf.mxu0
    %v2670 = vadd.f32 %v2615, %v2669
    %v2671 = vpop.f32.mrf.mxu0
    %v2672 = vpop.f32.mrf.mxu0
    %v2673 = vadd.f32 %v2615, %v2672
    %v2674 = vpop.f32.mrf.mxu0
    %2675 = vmatprep.mubr.bf16.mxu0 0
    %2676 = vmatmul.mubr.bf16.gmra.mxu0 %v2633
    %v2677 = vpop.f32.mrf.mxu0
    %v2678 = vadd.f32 %v2615, %v2677
    %v2679 = vpop.f32.mrf.mxu0
    %v2680 = vpop.f32.mrf.mxu0
    %v2681 = vadd.f32 %v2615, %v2680
    %v2682 = vpop.f32.mrf.mxu0
    %2683 = vdwg.mxu0
    %v2684 = vpack.c.bf16 %v2670, %v2670
    %v2685 = vpack.c.bf16 %v2673, %v2673
    %v2686 = vpack.c.bf16 %v2678, %v2678
    %v2687 = vpack.c.bf16 %v2681, %v2681
    %2689 = vrot.lane.b32.xlu0 %v2684, 96
    %v2690 = vpop.permute.xlu0 %2689
    %v2692 = vsel %vm320, %v2684, 0
    %v2695 = vsel %vm320, %v2690, 0
    %2697 = vmatprep.subr.bf16.mxu0 0
    %2698 = vmatpush1.bf16.xpose.msra.mxu0 0
    %2699 = vmatprep.subr.bf16.mxu0 0
    %2700 = vmatpush1.bf16.xpose.msra.mxu0 0
    %2701 = vmatprep.subr.bf16.mxu0 0
    %2702 = vmatpush1.bf16.xpose.msra.mxu0 0
    %2703 = vmatprep.subr.bf16.mxu0 0
    %2704 = vmatpush1.bf16.xpose.msra.mxu0 0
    %2705 = vmatprep.subr.bf16.mxu0 0
    %2706 = vmatpush1.bf16.xpose.msra.mxu0 0
    %2707 = vmatprep.subr.bf16.mxu0 0
    %2708 = vmatpush1.bf16.xpose.msra.mxu0 0
    %2709 = vmatprep.subr.bf16.mxu0 0
    %2710 = vmatpush1.bf16.xpose.msra.mxu0 0
    %2711 = vmatprep.subr.bf16.mxu0 0
    %2712 = vmatpush1.bf16.xpose.msra.mxu0 %v2695
    %2713 = vmatprep.subr.bf16.mxu0 0
    %2714 = vmatpush2.bf16.xpose.msra.mxu0 0
    %2715 = vmatprep.subr.bf16.mxu0 0
    %2716 = vmatpush2.bf16.xpose.msra.mxu0 0
    %2717 = vmatprep.subr.bf16.mxu0 0
    %2718 = vmatpush2.bf16.xpose.msra.mxu0 0
    %2719 = vmatprep.subr.bf16.mxu0 0
    %2720 = vmatpush2.bf16.xpose.msra.mxu0 0
    %2721 = vmatprep.subr.bf16.mxu0 0
    %2722 = vmatpush2.bf16.xpose.msra.mxu0 0
    %2723 = vmatprep.subr.bf16.mxu0 0
    %2724 = vmatpush2.bf16.xpose.msra.mxu0 0
    %2725 = vmatprep.subr.bf16.mxu0 0
    %2726 = vmatpush2.bf16.xpose.msra.mxu0 0
    %2727 = vmatprep.subr.bf16.mxu0 0
    %2728 = vmatpush2.bf16.xpose.msra.mxu0 0
    %2729 = vmatprep.mubr.bf16.mxu0 0
    %2730 = vmatmul.mubr.bf16.gmra.mxu0 %v2692
    %v2731 = vpop.f32.mrf.mxu0
    %v2732 = vadd.f32 0.0, %v2731
    %v2733 = vpop.f32.mrf.mxu0
    %v2734 = vpop.f32.mrf.mxu0
    %v2735 = vpop.f32.mrf.mxu0
    %2736 = vdwg.mxu0
    %2738 = vrot.lane.b32.xlu0 %v2685, 96
    %v2739 = vpop.permute.xlu0 %2738
    %v2741 = vsel %vm320, %v2685, 0
    %v2744 = vsel %vm320, %v2739, 0
    %2746 = vmatprep.subr.bf16.mxu0 0
    %2747 = vmatpush1.bf16.xpose.msra.mxu0 0
    %2748 = vmatprep.subr.bf16.mxu0 0
    %2749 = vmatpush1.bf16.xpose.msra.mxu0 0
    %2750 = vmatprep.subr.bf16.mxu0 0
    %2751 = vmatpush1.bf16.xpose.msra.mxu0 0
    %2752 = vmatprep.subr.bf16.mxu0 0
    %2753 = vmatpush1.bf16.xpose.msra.mxu0 0
    %2754 = vmatprep.subr.bf16.mxu0 0
    %2755 = vmatpush1.bf16.xpose.msra.mxu0 0
    %2756 = vmatprep.subr.bf16.mxu0 0
    %2757 = vmatpush1.bf16.xpose.msra.mxu0 0
    %2758 = vmatprep.subr.bf16.mxu0 0
    %2759 = vmatpush1.bf16.xpose.msra.mxu0 0
    %2760 = vmatprep.subr.bf16.mxu0 0
    %2761 = vmatpush1.bf16.xpose.msra.mxu0 %v2744
    %2762 = vmatprep.subr.bf16.mxu0 0
    %2763 = vmatpush2.bf16.xpose.msra.mxu0 0
    %2764 = vmatprep.subr.bf16.mxu0 0
    %2765 = vmatpush2.bf16.xpose.msra.mxu0 0
    %2766 = vmatprep.subr.bf16.mxu0 0
    %2767 = vmatpush2.bf16.xpose.msra.mxu0 0
    %2768 = vmatprep.subr.bf16.mxu0 0
    %2769 = vmatpush2.bf16.xpose.msra.mxu0 0
    %2770 = vmatprep.subr.bf16.mxu0 0
    %2771 = vmatpush2.bf16.xpose.msra.mxu0 0
    %2772 = vmatprep.subr.bf16.mxu0 0
    %2773 = vmatpush2.bf16.xpose.msra.mxu0 0
    %2774 = vmatprep.subr.bf16.mxu0 0
    %2775 = vmatpush2.bf16.xpose.msra.mxu0 0
    %2776 = vmatprep.subr.bf16.mxu0 0
    %2777 = vmatpush2.bf16.xpose.msra.mxu0 0
    %2778 = vmatprep.mubr.bf16.mxu0 0
    %2779 = vmatmul.mubr.bf16.gmra.mxu0 %v2741
    %v2780 = vpop.f32.mrf.mxu0
    %v2781 = vadd.f32 0.0, %v2780
    %v2782 = vpop.f32.mrf.mxu0
    %v2783 = vpop.f32.mrf.mxu0
    %v2784 = vpop.f32.mrf.mxu0
    %2785 = vdwg.mxu0
    %2787 = vrot.lane.b32.xlu0 %v2686, 96
    %v2788 = vpop.permute.xlu0 %2787
    %v2790 = vsel %vm320, %v2686, 0
    %v2793 = vsel %vm320, %v2788, 0
    %2795 = vmatprep.subr.bf16.mxu0 0
    %2796 = vmatpush1.bf16.xpose.msra.mxu0 0
    %2797 = vmatprep.subr.bf16.mxu0 0
    %2798 = vmatpush1.bf16.xpose.msra.mxu0 0
    %2799 = vmatprep.subr.bf16.mxu0 0
    %2800 = vmatpush1.bf16.xpose.msra.mxu0 0
    %2801 = vmatprep.subr.bf16.mxu0 0
    %2802 = vmatpush1.bf16.xpose.msra.mxu0 0
    %2803 = vmatprep.subr.bf16.mxu0 0
    %2804 = vmatpush1.bf16.xpose.msra.mxu0 0
    %2805 = vmatprep.subr.bf16.mxu0 0
    %2806 = vmatpush1.bf16.xpose.msra.mxu0 0
    %2807 = vmatprep.subr.bf16.mxu0 0
    %2808 = vmatpush1.bf16.xpose.msra.mxu0 0
    %2809 = vmatprep.subr.bf16.mxu0 0
    %2810 = vmatpush1.bf16.xpose.msra.mxu0 %v2793
    %2811 = vmatprep.subr.bf16.mxu0 0
    %2812 = vmatpush2.bf16.xpose.msra.mxu0 0
    %2813 = vmatprep.subr.bf16.mxu0 0
    %2814 = vmatpush2.bf16.xpose.msra.mxu0 0
    %2815 = vmatprep.subr.bf16.mxu0 0
    %2816 = vmatpush2.bf16.xpose.msra.mxu0 0
    %2817 = vmatprep.subr.bf16.mxu0 0
    %2818 = vmatpush2.bf16.xpose.msra.mxu0 0
    %2819 = vmatprep.subr.bf16.mxu0 0
    %2820 = vmatpush2.bf16.xpose.msra.mxu0 0
    %2821 = vmatprep.subr.bf16.mxu0 0
    %2822 = vmatpush2.bf16.xpose.msra.mxu0 0
    %2823 = vmatprep.subr.bf16.mxu0 0
    %2824 = vmatpush2.bf16.xpose.msra.mxu0 0
    %2825 = vmatprep.subr.bf16.mxu0 0
    %2826 = vmatpush2.bf16.xpose.msra.mxu0 0
    %2827 = vmatprep.mubr.bf16.mxu0 0
    %2828 = vmatmul.mubr.bf16.gmra.mxu0 %v2790
    %v2829 = vpop.f32.mrf.mxu0
    %v2830 = vadd.f32 0.0, %v2829
    %v2831 = vpop.f32.mrf.mxu0
    %v2832 = vpop.f32.mrf.mxu0
    %v2833 = vpop.f32.mrf.mxu0
    %2834 = vdwg.mxu0
    %2836 = vrot.lane.b32.xlu0 %v2687, 96
    %v2837 = vpop.permute.xlu0 %2836
    %v2839 = vsel %vm320, %v2687, 0
    %v2842 = vsel %vm320, %v2837, 0
    %2844 = vmatprep.subr.bf16.mxu0 0
    %2845 = vmatpush1.bf16.xpose.msra.mxu0 0
    %2846 = vmatprep.subr.bf16.mxu0 0
    %2847 = vmatpush1.bf16.xpose.msra.mxu0 0
    %2848 = vmatprep.subr.bf16.mxu0 0
    %2849 = vmatpush1.bf16.xpose.msra.mxu0 0
    %2850 = vmatprep.subr.bf16.mxu0 0
    %2851 = vmatpush1.bf16.xpose.msra.mxu0 0
    %2852 = vmatprep.subr.bf16.mxu0 0
    %2853 = vmatpush1.bf16.xpose.msra.mxu0 0
    %2854 = vmatprep.subr.bf16.mxu0 0
    %2855 = vmatpush1.bf16.xpose.msra.mxu0 0
    %2856 = vmatprep.subr.bf16.mxu0 0
    %2857 = vmatpush1.bf16.xpose.msra.mxu0 0
    %2858 = vmatprep.subr.bf16.mxu0 0
    %2859 = vmatpush1.bf16.xpose.msra.mxu0 %v2842
    %2860 = vmatprep.subr.bf16.mxu0 0
    %2861 = vmatpush2.bf16.xpose.msra.mxu0 0
    %2862 = vmatprep.subr.bf16.mxu0 0
    %2863 = vmatpush2.bf16.xpose.msra.mxu0 0
    %2864 = vmatprep.subr.bf16.mxu0 0
    %2865 = vmatpush2.bf16.xpose.msra.mxu0 0
    %2866 = vmatprep.subr.bf16.mxu0 0
    %2867 = vmatpush2.bf16.xpose.msra.mxu0 0
    %2868 = vmatprep.subr.bf16.mxu0 0
    %2869 = vmatpush2.bf16.xpose.msra.mxu0 0
    %2870 = vmatprep.subr.bf16.mxu0 0
    %2871 = vmatpush2.bf16.xpose.msra.mxu0 0
    %2872 = vmatprep.subr.bf16.mxu0 0
    %2873 = vmatpush2.bf16.xpose.msra.mxu0 0
    %2874 = vmatprep.subr.bf16.mxu0 0
    %2875 = vmatpush2.bf16.xpose.msra.mxu0 0
    %2876 = vmatprep.mubr.bf16.mxu0 0
    %2877 = vmatmul.mubr.bf16.gmra.mxu0 %v2839
    %v2878 = vpop.f32.mrf.mxu0
    %v2879 = vadd.f32 0.0, %v2878
    %v2880 = vpop.f32.mrf.mxu0
    %v2881 = vpop.f32.mrf.mxu0
    %v2882 = vpop.f32.mrf.mxu0
    %2883 = vdwg.mxu0
    %v2884 = vmul.f32 %v2732, 0.35355338
    %v2885 = vmul.f32 %v2781, 0.35355338
    %v2886 = vmul.f32 %v2830, 0.35355338
    %v2887 = vmul.f32 %v2879, 0.35355338
    %v2888 = vsel %vm320, %v2884, -inf
    %2889 = vmax.xlane.f32.xlu0 %v2888
    %v2890 = vpop.xlane.xlu0 %2889
    %v2891 = vsel %vm320, %v2885, -inf
    %2892 = vmax.xlane.f32.xlu0 %v2891
    %v2893 = vpop.xlane.xlu0 %2892
    %v2894 = vsel %vm320, %v2886, -inf
    %2895 = vmax.xlane.f32.xlu0 %v2894
    %v2896 = vpop.xlane.xlu0 %2895
    %v2897 = vsel %vm320, %v2887, -inf
    %2898 = vmax.xlane.f32.xlu0 %v2897
    %v2899 = vpop.xlane.xlu0 %2898
    %v2900 = vsub.f32 %v2884, %v2890
    %v2901 = vsub.f32 %v2885, %v2893
    %v2902 = vsub.f32 %v2886, %v2896
    %v2903 = vsub.f32 %v2887, %v2899
    %v2904 = vmul.f32 %v2900, 1.442695
    %v2905 = vpow.pop %v2904
    %v2906 = vmul.f32 %v2901, 1.442695
    %v2907 = vpow.pop %v2906
    %v2908 = vmul.f32 %v2902, 1.442695
    %v2909 = vpow.pop %v2908
    %v2910 = vmul.f32 %v2903, 1.442695
    %v2911 = vpow.pop %v2910
    %v2912 = vsel %vm320, %v2905, 0.0
    %2913 = vadd.xlane.f32.xlu0 %v2912
    %v2914 = vpop.xlane.xlu0 %2913
    %v2915 = vsel %vm320, %v2907, 0.0
    %2916 = vadd.xlane.f32.xlu0 %v2915
    %v2917 = vpop.xlane.xlu0 %2916
    %v2918 = vsel %vm320, %v2909, 0.0
    %2919 = vadd.xlane.f32.xlu0 %v2918
    %v2920 = vpop.xlane.xlu0 %2919
    %v2921 = vsel %vm320, %v2911, 0.0
    %2922 = vadd.xlane.f32.xlu0 %v2921
    %v2923 = vpop.xlane.xlu0 %2922
    %v2924 = vrcp.pop %v2914
    %v2925 = vrcp.pop %v2917
    %v2926 = vrcp.pop %v2920
    %v2927 = vrcp.pop %v2923
    %v2928 = vmul.f32 %v2905, %v2924
    %v2929 = vmul.f32 %v2907, %v2925
    %v2930 = vmul.f32 %v2909, %v2926
    %v2931 = vmul.f32 %v2911, %v2927
    %v2932 = vpack.c.bf16 %v2928, %v2928
    %v2933 = vpack.c.bf16 %v2929, %v2929
    %v2934 = vpack.c.bf16 %v2930, %v2930
    %v2935 = vpack.c.bf16 %v2931, %v2931
    %2936 = vrot.lane.b32.xlu0 %v2684, 64
    %v2937 = vpop.permute.xlu0 %2936
    %v2939 = vsel %vm320, %v2932, 0
    %v2942 = vsel %vm571, %v2937, 0
    %2944 = vmatprep.subr.bf16.mxu0 0
    %2945 = vmatpush1.bf16.msra.mxu0 0
    %2946 = vmatprep.subr.bf16.mxu0 0
    %2947 = vmatpush1.bf16.msra.mxu0 0
    %2948 = vmatprep.subr.bf16.mxu0 0
    %2949 = vmatpush1.bf16.msra.mxu0 0
    %2950 = vmatprep.subr.bf16.mxu0 0
    %2951 = vmatpush1.bf16.msra.mxu0 0
    %2952 = vmatprep.subr.bf16.mxu0 0
    %2953 = vmatpush1.bf16.msra.mxu0 0
    %2954 = vmatprep.subr.bf16.mxu0 0
    %2955 = vmatpush1.bf16.msra.mxu0 0
    %2956 = vmatprep.subr.bf16.mxu0 0
    %2957 = vmatpush1.bf16.msra.mxu0 0
    %2958 = vmatprep.subr.bf16.mxu0 0
    %2959 = vmatpush1.bf16.msra.mxu0 %v2942
    %2960 = vmatprep.subr.bf16.mxu0 0
    %2961 = vmatpush2.bf16.msra.mxu0 0
    %2962 = vmatprep.subr.bf16.mxu0 0
    %2963 = vmatpush2.bf16.msra.mxu0 0
    %2964 = vmatprep.subr.bf16.mxu0 0
    %2965 = vmatpush2.bf16.msra.mxu0 0
    %2966 = vmatprep.subr.bf16.mxu0 0
    %2967 = vmatpush2.bf16.msra.mxu0 0
    %2968 = vmatprep.subr.bf16.mxu0 0
    %2969 = vmatpush2.bf16.msra.mxu0 0
    %2970 = vmatprep.subr.bf16.mxu0 0
    %2971 = vmatpush2.bf16.msra.mxu0 0
    %2972 = vmatprep.subr.bf16.mxu0 0
    %2973 = vmatpush2.bf16.msra.mxu0 0
    %2974 = vmatprep.subr.bf16.mxu0 0
    %2975 = vmatpush2.bf16.msra.mxu0 0
    %2976 = vmatprep.mubr.bf16.mxu0 0
    %2977 = vmatmul.mubr.bf16.gmra.mxu0 %v2939
    %v2978 = vpop.f32.mrf.mxu0
    %v2979 = vadd.f32 0.0, %v2978
    %v2980 = vpop.f32.mrf.mxu0
    %v2981 = vpop.f32.mrf.mxu0
    %v2982 = vpop.f32.mrf.mxu0
    %2983 = vdwg.mxu0
    %2984 = vrot.lane.b32.xlu0 %v2685, 64
    %v2985 = vpop.permute.xlu0 %2984
    %v2987 = vsel %vm320, %v2933, 0
    %v2990 = vsel %vm571, %v2985, 0
    %2992 = vmatprep.subr.bf16.mxu0 0
    %2993 = vmatpush1.bf16.msra.mxu0 0
    %2994 = vmatprep.subr.bf16.mxu0 0
    %2995 = vmatpush1.bf16.msra.mxu0 0
    %2996 = vmatprep.subr.bf16.mxu0 0
    %2997 = vmatpush1.bf16.msra.mxu0 0
    %2998 = vmatprep.subr.bf16.mxu0 0
    %2999 = vmatpush1.bf16.msra.mxu0 0
    %3000 = vmatprep.subr.bf16.mxu0 0
    %3001 = vmatpush1.bf16.msra.mxu0 0
    %3002 = vmatprep.subr.bf16.mxu0 0
    %3003 = vmatpush1.bf16.msra.mxu0 0
    %3004 = vmatprep.subr.bf16.mxu0 0
    %3005 = vmatpush1.bf16.msra.mxu0 0
    %3006 = vmatprep.subr.bf16.mxu0 0
    %3007 = vmatpush1.bf16.msra.mxu0 %v2990
    %3008 = vmatprep.subr.bf16.mxu0 0
    %3009 = vmatpush2.bf16.msra.mxu0 0
    %3010 = vmatprep.subr.bf16.mxu0 0
    %3011 = vmatpush2.bf16.msra.mxu0 0
    %3012 = vmatprep.subr.bf16.mxu0 0
    %3013 = vmatpush2.bf16.msra.mxu0 0
    %3014 = vmatprep.subr.bf16.mxu0 0
    %3015 = vmatpush2.bf16.msra.mxu0 0
    %3016 = vmatprep.subr.bf16.mxu0 0
    %3017 = vmatpush2.bf16.msra.mxu0 0
    %3018 = vmatprep.subr.bf16.mxu0 0
    %3019 = vmatpush2.bf16.msra.mxu0 0
    %3020 = vmatprep.subr.bf16.mxu0 0
    %3021 = vmatpush2.bf16.msra.mxu0 0
    %3022 = vmatprep.subr.bf16.mxu0 0
    %3023 = vmatpush2.bf16.msra.mxu0 0
    %3024 = vmatprep.mubr.bf16.mxu0 0
    %3025 = vmatmul.mubr.bf16.gmra.mxu0 %v2987
    %v3026 = vpop.f32.mrf.mxu0
    %v3027 = vadd.f32 0.0, %v3026
    %v3028 = vpop.f32.mrf.mxu0
    %v3029 = vpop.f32.mrf.mxu0
    %v3030 = vpop.f32.mrf.mxu0
    %3031 = vdwg.mxu0
    %3032 = vrot.lane.b32.xlu0 %v2686, 64
    %v3033 = vpop.permute.xlu0 %3032
    %v3035 = vsel %vm320, %v2934, 0
    %v3038 = vsel %vm571, %v3033, 0
    %3040 = vmatprep.subr.bf16.mxu0 0
    %3041 = vmatpush1.bf16.msra.mxu0 0
    %3042 = vmatprep.subr.bf16.mxu0 0
    %3043 = vmatpush1.bf16.msra.mxu0 0
    %3044 = vmatprep.subr.bf16.mxu0 0
    %3045 = vmatpush1.bf16.msra.mxu0 0
    %3046 = vmatprep.subr.bf16.mxu0 0
    %3047 = vmatpush1.bf16.msra.mxu0 0
    %3048 = vmatprep.subr.bf16.mxu0 0
    %3049 = vmatpush1.bf16.msra.mxu0 0
    %3050 = vmatprep.subr.bf16.mxu0 0
    %3051 = vmatpush1.bf16.msra.mxu0 0
    %3052 = vmatprep.subr.bf16.mxu0 0
    %3053 = vmatpush1.bf16.msra.mxu0 0
    %3054 = vmatprep.subr.bf16.mxu0 0
    %3055 = vmatpush1.bf16.msra.mxu0 %v3038
    %3056 = vmatprep.subr.bf16.mxu0 0
    %3057 = vmatpush2.bf16.msra.mxu0 0
    %3058 = vmatprep.subr.bf16.mxu0 0
    %3059 = vmatpush2.bf16.msra.mxu0 0
    %3060 = vmatprep.subr.bf16.mxu0 0
    %3061 = vmatpush2.bf16.msra.mxu0 0
    %3062 = vmatprep.subr.bf16.mxu0 0
    %3063 = vmatpush2.bf16.msra.mxu0 0
    %3064 = vmatprep.subr.bf16.mxu0 0
    %3065 = vmatpush2.bf16.msra.mxu0 0
    %3066 = vmatprep.subr.bf16.mxu0 0
    %3067 = vmatpush2.bf16.msra.mxu0 0
    %3068 = vmatprep.subr.bf16.mxu0 0
    %3069 = vmatpush2.bf16.msra.mxu0 0
    %3070 = vmatprep.subr.bf16.mxu0 0
    %3071 = vmatpush2.bf16.msra.mxu0 0
    %3072 = vmatprep.mubr.bf16.mxu0 0
    %3073 = vmatmul.mubr.bf16.gmra.mxu0 %v3035
    %v3074 = vpop.f32.mrf.mxu0
    %v3075 = vadd.f32 0.0, %v3074
    %v3076 = vpop.f32.mrf.mxu0
    %v3077 = vpop.f32.mrf.mxu0
    %v3078 = vpop.f32.mrf.mxu0
    %3079 = vdwg.mxu0
    %3080 = vrot.lane.b32.xlu0 %v2687, 64
    %v3081 = vpop.permute.xlu0 %3080
    %v3083 = vsel %vm320, %v2935, 0
    %v3086 = vsel %vm571, %v3081, 0
    %3088 = vmatprep.subr.bf16.mxu0 0
    %3089 = vmatpush1.bf16.msra.mxu0 0
    %3090 = vmatprep.subr.bf16.mxu0 0
    %3091 = vmatpush1.bf16.msra.mxu0 0
    %3092 = vmatprep.subr.bf16.mxu0 0
    %3093 = vmatpush1.bf16.msra.mxu0 0
    %3094 = vmatprep.subr.bf16.mxu0 0
    %3095 = vmatpush1.bf16.msra.mxu0 0
    %3096 = vmatprep.subr.bf16.mxu0 0
    %3097 = vmatpush1.bf16.msra.mxu0 0
    %3098 = vmatprep.subr.bf16.mxu0 0
    %3099 = vmatpush1.bf16.msra.mxu0 0
    %3100 = vmatprep.subr.bf16.mxu0 0
    %3101 = vmatpush1.bf16.msra.mxu0 0
    %3102 = vmatprep.subr.bf16.mxu0 0
    %3103 = vmatpush1.bf16.msra.mxu0 %v3086
    %3104 = vmatprep.subr.bf16.mxu0 0
    %3105 = vmatpush2.bf16.msra.mxu0 0
    %3106 = vmatprep.subr.bf16.mxu0 0
    %3107 = vmatpush2.bf16.msra.mxu0 0
    %3108 = vmatprep.subr.bf16.mxu0 0
    %3109 = vmatpush2.bf16.msra.mxu0 0
    %3110 = vmatprep.subr.bf16.mxu0 0
    %3111 = vmatpush2.bf16.msra.mxu0 0
    %3112 = vmatprep.subr.bf16.mxu0 0
    %3113 = vmatpush2.bf16.msra.mxu0 0
    %3114 = vmatprep.subr.bf16.mxu0 0
    %3115 = vmatpush2.bf16.msra.mxu0 0
    %3116 = vmatprep.subr.bf16.mxu0 0
    %3117 = vmatpush2.bf16.msra.mxu0 0
    %3118 = vmatprep.subr.bf16.mxu0 0
    %3119 = vmatpush2.bf16.msra.mxu0 0
    %3120 = vmatprep.mubr.bf16.mxu0 0
    %3121 = vmatmul.mubr.bf16.gmra.mxu0 %v3083
    %v3122 = vpop.f32.mrf.mxu0
    %v3123 = vadd.f32 0.0, %v3122
    %v3124 = vpop.f32.mrf.mxu0
    %v3125 = vpop.f32.mrf.mxu0
    %v3126 = vpop.f32.mrf.mxu0
    %3127 = vdwg.mxu0
    %3128 = vrot.lane.b32.xlu0 %v2684, 120
    %v3129 = vpop.permute.xlu0 %3128
    %3130 = vrot.lane.b32.xlu0 %v2684, 88
    %v3131 = vpop.permute.xlu0 %3130
    %v3133 = vsel %vm320, %v3129, 0
    %v3136 = vsel %vm320, %v3131, 0
    %3138 = vmatprep.subr.bf16.mxu0 0
    %3139 = vmatpush1.bf16.xpose.msra.mxu0 0
    %3140 = vmatprep.subr.bf16.mxu0 0
    %3141 = vmatpush1.bf16.xpose.msra.mxu0 0
    %3142 = vmatprep.subr.bf16.mxu0 0
    %3143 = vmatpush1.bf16.xpose.msra.mxu0 0
    %3144 = vmatprep.subr.bf16.mxu0 0
    %3145 = vmatpush1.bf16.xpose.msra.mxu0 0
    %3146 = vmatprep.subr.bf16.mxu0 0
    %3147 = vmatpush1.bf16.xpose.msra.mxu0 0
    %3148 = vmatprep.subr.bf16.mxu0 0
    %3149 = vmatpush1.bf16.xpose.msra.mxu0 0
    %3150 = vmatprep.subr.bf16.mxu0 0
    %3151 = vmatpush1.bf16.xpose.msra.mxu0 0
    %3152 = vmatprep.subr.bf16.mxu0 0
    %3153 = vmatpush1.bf16.xpose.msra.mxu0 %v3136
    %3154 = vmatprep.subr.bf16.mxu0 0
    %3155 = vmatpush2.bf16.xpose.msra.mxu0 0
    %3156 = vmatprep.subr.bf16.mxu0 0
    %3157 = vmatpush2.bf16.xpose.msra.mxu0 0
    %3158 = vmatprep.subr.bf16.mxu0 0
    %3159 = vmatpush2.bf16.xpose.msra.mxu0 0
    %3160 = vmatprep.subr.bf16.mxu0 0
    %3161 = vmatpush2.bf16.xpose.msra.mxu0 0
    %3162 = vmatprep.subr.bf16.mxu0 0
    %3163 = vmatpush2.bf16.xpose.msra.mxu0 0
    %3164 = vmatprep.subr.bf16.mxu0 0
    %3165 = vmatpush2.bf16.xpose.msra.mxu0 0
    %3166 = vmatprep.subr.bf16.mxu0 0
    %3167 = vmatpush2.bf16.xpose.msra.mxu0 0
    %3168 = vmatprep.subr.bf16.mxu0 0
    %3169 = vmatpush2.bf16.xpose.msra.mxu0 0
    %3170 = vmatprep.mubr.bf16.mxu0 0
    %3171 = vmatmul.mubr.bf16.gmra.mxu0 %v3133
    %v3172 = vpop.f32.mrf.mxu0
    %v3173 = vadd.f32 0.0, %v3172
    %v3174 = vpop.f32.mrf.mxu0
    %v3175 = vpop.f32.mrf.mxu0
    %v3176 = vpop.f32.mrf.mxu0
    %3177 = vdwg.mxu0
    %3178 = vrot.lane.b32.xlu0 %v2685, 120
    %v3179 = vpop.permute.xlu0 %3178
    %3180 = vrot.lane.b32.xlu0 %v2685, 88
    %v3181 = vpop.permute.xlu0 %3180
    %v3183 = vsel %vm320, %v3179, 0
    %v3186 = vsel %vm320, %v3181, 0
    %3188 = vmatprep.subr.bf16.mxu0 0
    %3189 = vmatpush1.bf16.xpose.msra.mxu0 0
    %3190 = vmatprep.subr.bf16.mxu0 0
    %3191 = vmatpush1.bf16.xpose.msra.mxu0 0
    %3192 = vmatprep.subr.bf16.mxu0 0
    %3193 = vmatpush1.bf16.xpose.msra.mxu0 0
    %3194 = vmatprep.subr.bf16.mxu0 0
    %3195 = vmatpush1.bf16.xpose.msra.mxu0 0
    %3196 = vmatprep.subr.bf16.mxu0 0
    %3197 = vmatpush1.bf16.xpose.msra.mxu0 0
    %3198 = vmatprep.subr.bf16.mxu0 0
    %3199 = vmatpush1.bf16.xpose.msra.mxu0 0
    %3200 = vmatprep.subr.bf16.mxu0 0
    %3201 = vmatpush1.bf16.xpose.msra.mxu0 0
    %3202 = vmatprep.subr.bf16.mxu0 0
    %3203 = vmatpush1.bf16.xpose.msra.mxu0 %v3186
    %3204 = vmatprep.subr.bf16.mxu0 0
    %3205 = vmatpush2.bf16.xpose.msra.mxu0 0
    %3206 = vmatprep.subr.bf16.mxu0 0
    %3207 = vmatpush2.bf16.xpose.msra.mxu0 0
    %3208 = vmatprep.subr.bf16.mxu0 0
    %3209 = vmatpush2.bf16.xpose.msra.mxu0 0
    %3210 = vmatprep.subr.bf16.mxu0 0
    %3211 = vmatpush2.bf16.xpose.msra.mxu0 0
    %3212 = vmatprep.subr.bf16.mxu0 0
    %3213 = vmatpush2.bf16.xpose.msra.mxu0 0
    %3214 = vmatprep.subr.bf16.mxu0 0
    %3215 = vmatpush2.bf16.xpose.msra.mxu0 0
    %3216 = vmatprep.subr.bf16.mxu0 0
    %3217 = vmatpush2.bf16.xpose.msra.mxu0 0
    %3218 = vmatprep.subr.bf16.mxu0 0
    %3219 = vmatpush2.bf16.xpose.msra.mxu0 0
    %3220 = vmatprep.mubr.bf16.mxu0 0
    %3221 = vmatmul.mubr.bf16.gmra.mxu0 %v3183
    %v3222 = vpop.f32.mrf.mxu0
    %v3223 = vadd.f32 0.0, %v3222
    %v3224 = vpop.f32.mrf.mxu0
    %v3225 = vpop.f32.mrf.mxu0
    %v3226 = vpop.f32.mrf.mxu0
    %3227 = vdwg.mxu0
    %3228 = vrot.lane.b32.xlu0 %v2686, 120
    %v3229 = vpop.permute.xlu0 %3228
    %3230 = vrot.lane.b32.xlu0 %v2686, 88
    %v3231 = vpop.permute.xlu0 %3230
    %v3233 = vsel %vm320, %v3229, 0
    %v3236 = vsel %vm320, %v3231, 0
    %3238 = vmatprep.subr.bf16.mxu0 0
    %3239 = vmatpush1.bf16.xpose.msra.mxu0 0
    %3240 = vmatprep.subr.bf16.mxu0 0
    %3241 = vmatpush1.bf16.xpose.msra.mxu0 0
    %3242 = vmatprep.subr.bf16.mxu0 0
    %3243 = vmatpush1.bf16.xpose.msra.mxu0 0
    %3244 = vmatprep.subr.bf16.mxu0 0
    %3245 = vmatpush1.bf16.xpose.msra.mxu0 0
    %3246 = vmatprep.subr.bf16.mxu0 0
    %3247 = vmatpush1.bf16.xpose.msra.mxu0 0
    %3248 = vmatprep.subr.bf16.mxu0 0
    %3249 = vmatpush1.bf16.xpose.msra.mxu0 0
    %3250 = vmatprep.subr.bf16.mxu0 0
    %3251 = vmatpush1.bf16.xpose.msra.mxu0 0
    %3252 = vmatprep.subr.bf16.mxu0 0
    %3253 = vmatpush1.bf16.xpose.msra.mxu0 %v3236
    %3254 = vmatprep.subr.bf16.mxu0 0
    %3255 = vmatpush2.bf16.xpose.msra.mxu0 0
    %3256 = vmatprep.subr.bf16.mxu0 0
    %3257 = vmatpush2.bf16.xpose.msra.mxu0 0
    %3258 = vmatprep.subr.bf16.mxu0 0
    %3259 = vmatpush2.bf16.xpose.msra.mxu0 0
    %3260 = vmatprep.subr.bf16.mxu0 0
    %3261 = vmatpush2.bf16.xpose.msra.mxu0 0
    %3262 = vmatprep.subr.bf16.mxu0 0
    %3263 = vmatpush2.bf16.xpose.msra.mxu0 0
    %3264 = vmatprep.subr.bf16.mxu0 0
    %3265 = vmatpush2.bf16.xpose.msra.mxu0 0
    %3266 = vmatprep.subr.bf16.mxu0 0
    %3267 = vmatpush2.bf16.xpose.msra.mxu0 0
    %3268 = vmatprep.subr.bf16.mxu0 0
    %3269 = vmatpush2.bf16.xpose.msra.mxu0 0
    %3270 = vmatprep.mubr.bf16.mxu0 0
    %3271 = vmatmul.mubr.bf16.gmra.mxu0 %v3233
    %v3272 = vpop.f32.mrf.mxu0
    %v3273 = vadd.f32 0.0, %v3272
    %v3274 = vpop.f32.mrf.mxu0
    %v3275 = vpop.f32.mrf.mxu0
    %v3276 = vpop.f32.mrf.mxu0
    %3277 = vdwg.mxu0
    %3278 = vrot.lane.b32.xlu0 %v2687, 120
    %v3279 = vpop.permute.xlu0 %3278
    %3280 = vrot.lane.b32.xlu0 %v2687, 88
    %v3281 = vpop.permute.xlu0 %3280
    %v3283 = vsel %vm320, %v3279, 0
    %v3286 = vsel %vm320, %v3281, 0
    %3288 = vmatprep.subr.bf16.mxu0 0
    %3289 = vmatpush1.bf16.xpose.msra.mxu0 0
    %3290 = vmatprep.subr.bf16.mxu0 0
    %3291 = vmatpush1.bf16.xpose.msra.mxu0 0
    %3292 = vmatprep.subr.bf16.mxu0 0
    %3293 = vmatpush1.bf16.xpose.msra.mxu0 0
    %3294 = vmatprep.subr.bf16.mxu0 0
    %3295 = vmatpush1.bf16.xpose.msra.mxu0 0
    %3296 = vmatprep.subr.bf16.mxu0 0
    %3297 = vmatpush1.bf16.xpose.msra.mxu0 0
    %3298 = vmatprep.subr.bf16.mxu0 0
    %3299 = vmatpush1.bf16.xpose.msra.mxu0 0
    %3300 = vmatprep.subr.bf16.mxu0 0
    %3301 = vmatpush1.bf16.xpose.msra.mxu0 0
    %3302 = vmatprep.subr.bf16.mxu0 0
    %3303 = vmatpush1.bf16.xpose.msra.mxu0 %v3286
    %3304 = vmatprep.subr.bf16.mxu0 0
    %3305 = vmatpush2.bf16.xpose.msra.mxu0 0
    %3306 = vmatprep.subr.bf16.mxu0 0
    %3307 = vmatpush2.bf16.xpose.msra.mxu0 0
    %3308 = vmatprep.subr.bf16.mxu0 0
    %3309 = vmatpush2.bf16.xpose.msra.mxu0 0
    %3310 = vmatprep.subr.bf16.mxu0 0
    %3311 = vmatpush2.bf16.xpose.msra.mxu0 0
    %3312 = vmatprep.subr.bf16.mxu0 0
    %3313 = vmatpush2.bf16.xpose.msra.mxu0 0
    %3314 = vmatprep.subr.bf16.mxu0 0
    %3315 = vmatpush2.bf16.xpose.msra.mxu0 0
    %3316 = vmatprep.subr.bf16.mxu0 0
    %3317 = vmatpush2.bf16.xpose.msra.mxu0 0
    %3318 = vmatprep.subr.bf16.mxu0 0
    %3319 = vmatpush2.bf16.xpose.msra.mxu0 0
    %3320 = vmatprep.mubr.bf16.mxu0 0
    %3321 = vmatmul.mubr.bf16.gmra.mxu0 %v3283
    %v3322 = vpop.f32.mrf.mxu0
    %v3323 = vadd.f32 0.0, %v3322
    %v3324 = vpop.f32.mrf.mxu0
    %v3325 = vpop.f32.mrf.mxu0
    %v3326 = vpop.f32.mrf.mxu0
    %3327 = vdwg.mxu0
    %v3328 = vmul.f32 %v3173, 0.35355338
    %v3329 = vmul.f32 %v3223, 0.35355338
    %v3330 = vmul.f32 %v3273, 0.35355338
    %v3331 = vmul.f32 %v3323, 0.35355338
    %v3332 = vsel %vm320, %v3328, -inf
    %3333 = vmax.xlane.f32.xlu0 %v3332
    %v3334 = vpop.xlane.xlu0 %3333
    %v3335 = vsel %vm320, %v3329, -inf
    %3336 = vmax.xlane.f32.xlu0 %v3335
    %v3337 = vpop.xlane.xlu0 %3336
    %v3338 = vsel %vm320, %v3330, -inf
    %3339 = vmax.xlane.f32.xlu0 %v3338
    %v3340 = vpop.xlane.xlu0 %3339
    %v3341 = vsel %vm320, %v3331, -inf
    %3342 = vmax.xlane.f32.xlu0 %v3341
    %v3343 = vpop.xlane.xlu0 %3342
    %v3344 = vsub.f32 %v3328, %v3334
    %v3345 = vsub.f32 %v3329, %v3337
    %v3346 = vsub.f32 %v3330, %v3340
    %v3347 = vsub.f32 %v3331, %v3343
    %v3348 = vmul.f32 %v3344, 1.442695
    %v3349 = vpow.pop %v3348
    %v3350 = vmul.f32 %v3345, 1.442695
    %v3351 = vpow.pop %v3350
    %v3352 = vmul.f32 %v3346, 1.442695
    %v3353 = vpow.pop %v3352
    %v3354 = vmul.f32 %v3347, 1.442695
    %v3355 = vpow.pop %v3354
    %v3356 = vsel %vm320, %v3349, 0.0
    %3357 = vadd.xlane.f32.xlu0 %v3356
    %v3358 = vpop.xlane.xlu0 %3357
    %v3359 = vsel %vm320, %v3351, 0.0
    %3360 = vadd.xlane.f32.xlu0 %v3359
    %v3361 = vpop.xlane.xlu0 %3360
    %v3362 = vsel %vm320, %v3353, 0.0
    %3363 = vadd.xlane.f32.xlu0 %v3362
    %v3364 = vpop.xlane.xlu0 %3363
    %v3365 = vsel %vm320, %v3355, 0.0
    %3366 = vadd.xlane.f32.xlu0 %v3365
    %v3367 = vpop.xlane.xlu0 %3366
    %v3368 = vrcp.pop %v3358
    %v3369 = vrcp.pop %v3361
    %v3370 = vrcp.pop %v3364
    %v3371 = vrcp.pop %v3367
    %v3372 = vmul.f32 %v3349, %v3368
    %v3373 = vmul.f32 %v3351, %v3369
    %v3374 = vmul.f32 %v3353, %v3370
    %v3375 = vmul.f32 %v3355, %v3371
    %v3376 = vpack.c.bf16 %v3372, %v3372
    %v3377 = vpack.c.bf16 %v3373, %v3373
    %v3378 = vpack.c.bf16 %v3374, %v3374
    %v3379 = vpack.c.bf16 %v3375, %v3375
    %3380 = vrot.lane.b32.xlu0 %v2684, 56
    %v3381 = vpop.permute.xlu0 %3380
    %v3383 = vsel %vm320, %v3376, 0
    %v3386 = vsel %vm571, %v3381, 0
    %3388 = vmatprep.subr.bf16.mxu0 0
    %3389 = vmatpush1.bf16.msra.mxu0 0
    %3390 = vmatprep.subr.bf16.mxu0 0
    %3391 = vmatpush1.bf16.msra.mxu0 0
    %3392 = vmatprep.subr.bf16.mxu0 0
    %3393 = vmatpush1.bf16.msra.mxu0 0
    %3394 = vmatprep.subr.bf16.mxu0 0
    %3395 = vmatpush1.bf16.msra.mxu0 0
    %3396 = vmatprep.subr.bf16.mxu0 0
    %3397 = vmatpush1.bf16.msra.mxu0 0
    %3398 = vmatprep.subr.bf16.mxu0 0
    %3399 = vmatpush1.bf16.msra.mxu0 0
    %3400 = vmatprep.subr.bf16.mxu0 0
    %3401 = vmatpush1.bf16.msra.mxu0 0
    %3402 = vmatprep.subr.bf16.mxu0 0
    %3403 = vmatpush1.bf16.msra.mxu0 %v3386
    %3404 = vmatprep.subr.bf16.mxu0 0
    %3405 = vmatpush2.bf16.msra.mxu0 0
    %3406 = vmatprep.subr.bf16.mxu0 0
    %3407 = vmatpush2.bf16.msra.mxu0 0
    %3408 = vmatprep.subr.bf16.mxu0 0
    %3409 = vmatpush2.bf16.msra.mxu0 0
    %3410 = vmatprep.subr.bf16.mxu0 0
    %3411 = vmatpush2.bf16.msra.mxu0 0
    %3412 = vmatprep.subr.bf16.mxu0 0
    %3413 = vmatpush2.bf16.msra.mxu0 0
    %3414 = vmatprep.subr.bf16.mxu0 0
    %3415 = vmatpush2.bf16.msra.mxu0 0
    %3416 = vmatprep.subr.bf16.mxu0 0
    %3417 = vmatpush2.bf16.msra.mxu0 0
    %3418 = vmatprep.subr.bf16.mxu0 0
    %3419 = vmatpush2.bf16.msra.mxu0 0
    %3420 = vmatprep.mubr.bf16.mxu0 0
    %3421 = vmatmul.mubr.bf16.gmra.mxu0 %v3383
    %v3422 = vpop.f32.mrf.mxu0
    %v3423 = vadd.f32 0.0, %v3422
    %v3424 = vpop.f32.mrf.mxu0
    %v3425 = vpop.f32.mrf.mxu0
    %v3426 = vpop.f32.mrf.mxu0
    %3427 = vdwg.mxu0
    %3428 = vrot.lane.b32.xlu0 %v2685, 56
    %v3429 = vpop.permute.xlu0 %3428
    %v3431 = vsel %vm320, %v3377, 0
    %v3434 = vsel %vm571, %v3429, 0
    %3436 = vmatprep.subr.bf16.mxu0 0
    %3437 = vmatpush1.bf16.msra.mxu0 0
    %3438 = vmatprep.subr.bf16.mxu0 0
    %3439 = vmatpush1.bf16.msra.mxu0 0
    %3440 = vmatprep.subr.bf16.mxu0 0
    %3441 = vmatpush1.bf16.msra.mxu0 0
    %3442 = vmatprep.subr.bf16.mxu0 0
    %3443 = vmatpush1.bf16.msra.mxu0 0
    %3444 = vmatprep.subr.bf16.mxu0 0
    %3445 = vmatpush1.bf16.msra.mxu0 0
    %3446 = vmatprep.subr.bf16.mxu0 0
    %3447 = vmatpush1.bf16.msra.mxu0 0
    %3448 = vmatprep.subr.bf16.mxu0 0
    %3449 = vmatpush1.bf16.msra.mxu0 0
    %3450 = vmatprep.subr.bf16.mxu0 0
    %3451 = vmatpush1.bf16.msra.mxu0 %v3434
    %3452 = vmatprep.subr.bf16.mxu0 0
    %3453 = vmatpush2.bf16.msra.mxu0 0
    %3454 = vmatprep.subr.bf16.mxu0 0
    %3455 = vmatpush2.bf16.msra.mxu0 0
    %3456 = vmatprep.subr.bf16.mxu0 0
    %3457 = vmatpush2.bf16.msra.mxu0 0
    %3458 = vmatprep.subr.bf16.mxu0 0
    %3459 = vmatpush2.bf16.msra.mxu0 0
    %3460 = vmatprep.subr.bf16.mxu0 0
    %3461 = vmatpush2.bf16.msra.mxu0 0
    %3462 = vmatprep.subr.bf16.mxu0 0
    %3463 = vmatpush2.bf16.msra.mxu0 0
    %3464 = vmatprep.subr.bf16.mxu0 0
    %3465 = vmatpush2.bf16.msra.mxu0 0
    %3466 = vmatprep.subr.bf16.mxu0 0
    %3467 = vmatpush2.bf16.msra.mxu0 0
    %3468 = vmatprep.mubr.bf16.mxu0 0
    %3469 = vmatmul.mubr.bf16.gmra.mxu0 %v3431
    %v3470 = vpop.f32.mrf.mxu0
    %v3471 = vadd.f32 0.0, %v3470
    %v3472 = vpop.f32.mrf.mxu0
    %v3473 = vpop.f32.mrf.mxu0
    %v3474 = vpop.f32.mrf.mxu0
    %3475 = vdwg.mxu0
    %3476 = vrot.lane.b32.xlu0 %v2686, 56
    %v3477 = vpop.permute.xlu0 %3476
    %v3479 = vsel %vm320, %v3378, 0
    %v3482 = vsel %vm571, %v3477, 0
    %3484 = vmatprep.subr.bf16.mxu0 0
    %3485 = vmatpush1.bf16.msra.mxu0 0
    %3486 = vmatprep.subr.bf16.mxu0 0
    %3487 = vmatpush1.bf16.msra.mxu0 0
    %3488 = vmatprep.subr.bf16.mxu0 0
    %3489 = vmatpush1.bf16.msra.mxu0 0
    %3490 = vmatprep.subr.bf16.mxu0 0
    %3491 = vmatpush1.bf16.msra.mxu0 0
    %3492 = vmatprep.subr.bf16.mxu0 0
    %3493 = vmatpush1.bf16.msra.mxu0 0
    %3494 = vmatprep.subr.bf16.mxu0 0
    %3495 = vmatpush1.bf16.msra.mxu0 0
    %3496 = vmatprep.subr.bf16.mxu0 0
    %3497 = vmatpush1.bf16.msra.mxu0 0
    %3498 = vmatprep.subr.bf16.mxu0 0
    %3499 = vmatpush1.bf16.msra.mxu0 %v3482
    %3500 = vmatprep.subr.bf16.mxu0 0
    %3501 = vmatpush2.bf16.msra.mxu0 0
    %3502 = vmatprep.subr.bf16.mxu0 0
    %3503 = vmatpush2.bf16.msra.mxu0 0
    %3504 = vmatprep.subr.bf16.mxu0 0
    %3505 = vmatpush2.bf16.msra.mxu0 0
    %3506 = vmatprep.subr.bf16.mxu0 0
    %3507 = vmatpush2.bf16.msra.mxu0 0
    %3508 = vmatprep.subr.bf16.mxu0 0
    %3509 = vmatpush2.bf16.msra.mxu0 0
    %3510 = vmatprep.subr.bf16.mxu0 0
    %3511 = vmatpush2.bf16.msra.mxu0 0
    %3512 = vmatprep.subr.bf16.mxu0 0
    %3513 = vmatpush2.bf16.msra.mxu0 0
    %3514 = vmatprep.subr.bf16.mxu0 0
    %3515 = vmatpush2.bf16.msra.mxu0 0
    %3516 = vmatprep.mubr.bf16.mxu0 0
    %3517 = vmatmul.mubr.bf16.gmra.mxu0 %v3479
    %v3518 = vpop.f32.mrf.mxu0
    %v3519 = vadd.f32 0.0, %v3518
    %v3520 = vpop.f32.mrf.mxu0
    %v3521 = vpop.f32.mrf.mxu0
    %v3522 = vpop.f32.mrf.mxu0
    %3523 = vdwg.mxu0
    %3524 = vrot.lane.b32.xlu0 %v2687, 56
    %v3525 = vpop.permute.xlu0 %3524
    %v3527 = vsel %vm320, %v3379, 0
    %v3530 = vsel %vm571, %v3525, 0
    %3532 = vmatprep.subr.bf16.mxu0 0
    %3533 = vmatpush1.bf16.msra.mxu0 0
    %3534 = vmatprep.subr.bf16.mxu0 0
    %3535 = vmatpush1.bf16.msra.mxu0 0
    %3536 = vmatprep.subr.bf16.mxu0 0
    %3537 = vmatpush1.bf16.msra.mxu0 0
    %3538 = vmatprep.subr.bf16.mxu0 0
    %3539 = vmatpush1.bf16.msra.mxu0 0
    %3540 = vmatprep.subr.bf16.mxu0 0
    %3541 = vmatpush1.bf16.msra.mxu0 0
    %3542 = vmatprep.subr.bf16.mxu0 0
    %3543 = vmatpush1.bf16.msra.mxu0 0
    %3544 = vmatprep.subr.bf16.mxu0 0
    %3545 = vmatpush1.bf16.msra.mxu0 0
    %3546 = vmatprep.subr.bf16.mxu0 0
    %3547 = vmatpush1.bf16.msra.mxu0 %v3530
    %3548 = vmatprep.subr.bf16.mxu0 0
    %3549 = vmatpush2.bf16.msra.mxu0 0
    %3550 = vmatprep.subr.bf16.mxu0 0
    %3551 = vmatpush2.bf16.msra.mxu0 0
    %3552 = vmatprep.subr.bf16.mxu0 0
    %3553 = vmatpush2.bf16.msra.mxu0 0
    %3554 = vmatprep.subr.bf16.mxu0 0
    %3555 = vmatpush2.bf16.msra.mxu0 0
    %3556 = vmatprep.subr.bf16.mxu0 0
    %3557 = vmatpush2.bf16.msra.mxu0 0
    %3558 = vmatprep.subr.bf16.mxu0 0
    %3559 = vmatpush2.bf16.msra.mxu0 0
    %3560 = vmatprep.subr.bf16.mxu0 0
    %3561 = vmatpush2.bf16.msra.mxu0 0
    %3562 = vmatprep.subr.bf16.mxu0 0
    %3563 = vmatpush2.bf16.msra.mxu0 0
    %3564 = vmatprep.mubr.bf16.mxu0 0
    %3565 = vmatmul.mubr.bf16.gmra.mxu0 %v3527
    %v3566 = vpop.f32.mrf.mxu0
    %v3567 = vadd.f32 0.0, %v3566
    %v3568 = vpop.f32.mrf.mxu0
    %v3569 = vpop.f32.mrf.mxu0
    %v3570 = vpop.f32.mrf.mxu0
    %3571 = vdwg.mxu0
    %3572 = vrot.lane.b32.xlu0 %v2684, 112
    %v3573 = vpop.permute.xlu0 %3572
    %3574 = vrot.lane.b32.xlu0 %v2684, 80
    %v3575 = vpop.permute.xlu0 %3574
    %v3577 = vsel %vm320, %v3573, 0
    %v3580 = vsel %vm320, %v3575, 0
    %3582 = vmatprep.subr.bf16.mxu0 0
    %3583 = vmatpush1.bf16.xpose.msra.mxu0 0
    %3584 = vmatprep.subr.bf16.mxu0 0
    %3585 = vmatpush1.bf16.xpose.msra.mxu0 0
    %3586 = vmatprep.subr.bf16.mxu0 0
    %3587 = vmatpush1.bf16.xpose.msra.mxu0 0
    %3588 = vmatprep.subr.bf16.mxu0 0
    %3589 = vmatpush1.bf16.xpose.msra.mxu0 0
    %3590 = vmatprep.subr.bf16.mxu0 0
    %3591 = vmatpush1.bf16.xpose.msra.mxu0 0
    %3592 = vmatprep.subr.bf16.mxu0 0
    %3593 = vmatpush1.bf16.xpose.msra.mxu0 0
    %3594 = vmatprep.subr.bf16.mxu0 0
    %3595 = vmatpush1.bf16.xpose.msra.mxu0 0
    %3596 = vmatprep.subr.bf16.mxu0 0
    %3597 = vmatpush1.bf16.xpose.msra.mxu0 %v3580
    %3598 = vmatprep.subr.bf16.mxu0 0
    %3599 = vmatpush2.bf16.xpose.msra.mxu0 0
    %3600 = vmatprep.subr.bf16.mxu0 0
    %3601 = vmatpush2.bf16.xpose.msra.mxu0 0
    %3602 = vmatprep.subr.bf16.mxu0 0
    %3603 = vmatpush2.bf16.xpose.msra.mxu0 0
    %3604 = vmatprep.subr.bf16.mxu0 0
    %3605 = vmatpush2.bf16.xpose.msra.mxu0 0
    %3606 = vmatprep.subr.bf16.mxu0 0
    %3607 = vmatpush2.bf16.xpose.msra.mxu0 0
    %3608 = vmatprep.subr.bf16.mxu0 0
    %3609 = vmatpush2.bf16.xpose.msra.mxu0 0
    %3610 = vmatprep.subr.bf16.mxu0 0
    %3611 = vmatpush2.bf16.xpose.msra.mxu0 0
    %3612 = vmatprep.subr.bf16.mxu0 0
    %3613 = vmatpush2.bf16.xpose.msra.mxu0 0
    %3614 = vmatprep.mubr.bf16.mxu0 0
    %3615 = vmatmul.mubr.bf16.gmra.mxu0 %v3577
    %v3616 = vpop.f32.mrf.mxu0
    %v3617 = vadd.f32 0.0, %v3616
    %v3618 = vpop.f32.mrf.mxu0
    %v3619 = vpop.f32.mrf.mxu0
    %v3620 = vpop.f32.mrf.mxu0
    %3621 = vdwg.mxu0
    %3622 = vrot.lane.b32.xlu0 %v2685, 112
    %v3623 = vpop.permute.xlu0 %3622
    %3624 = vrot.lane.b32.xlu0 %v2685, 80
    %v3625 = vpop.permute.xlu0 %3624
    %v3627 = vsel %vm320, %v3623, 0
    %v3630 = vsel %vm320, %v3625, 0
    %3632 = vmatprep.subr.bf16.mxu0 0
    %3633 = vmatpush1.bf16.xpose.msra.mxu0 0
    %3634 = vmatprep.subr.bf16.mxu0 0
    %3635 = vmatpush1.bf16.xpose.msra.mxu0 0
    %3636 = vmatprep.subr.bf16.mxu0 0
    %3637 = vmatpush1.bf16.xpose.msra.mxu0 0
    %3638 = vmatprep.subr.bf16.mxu0 0
    %3639 = vmatpush1.bf16.xpose.msra.mxu0 0
    %3640 = vmatprep.subr.bf16.mxu0 0
    %3641 = vmatpush1.bf16.xpose.msra.mxu0 0
    %3642 = vmatprep.subr.bf16.mxu0 0
    %3643 = vmatpush1.bf16.xpose.msra.mxu0 0
    %3644 = vmatprep.subr.bf16.mxu0 0
    %3645 = vmatpush1.bf16.xpose.msra.mxu0 0
    %3646 = vmatprep.subr.bf16.mxu0 0
    %3647 = vmatpush1.bf16.xpose.msra.mxu0 %v3630
    %3648 = vmatprep.subr.bf16.mxu0 0
    %3649 = vmatpush2.bf16.xpose.msra.mxu0 0
    %3650 = vmatprep.subr.bf16.mxu0 0
    %3651 = vmatpush2.bf16.xpose.msra.mxu0 0
    %3652 = vmatprep.subr.bf16.mxu0 0
    %3653 = vmatpush2.bf16.xpose.msra.mxu0 0
    %3654 = vmatprep.subr.bf16.mxu0 0
    %3655 = vmatpush2.bf16.xpose.msra.mxu0 0
    %3656 = vmatprep.subr.bf16.mxu0 0
    %3657 = vmatpush2.bf16.xpose.msra.mxu0 0
    %3658 = vmatprep.subr.bf16.mxu0 0
    %3659 = vmatpush2.bf16.xpose.msra.mxu0 0
    %3660 = vmatprep.subr.bf16.mxu0 0
    %3661 = vmatpush2.bf16.xpose.msra.mxu0 0
    %3662 = vmatprep.subr.bf16.mxu0 0
    %3663 = vmatpush2.bf16.xpose.msra.mxu0 0
    %3664 = vmatprep.mubr.bf16.mxu0 0
    %3665 = vmatmul.mubr.bf16.gmra.mxu0 %v3627
    %v3666 = vpop.f32.mrf.mxu0
    %v3667 = vadd.f32 0.0, %v3666
    %v3668 = vpop.f32.mrf.mxu0
    %v3669 = vpop.f32.mrf.mxu0
    %v3670 = vpop.f32.mrf.mxu0
    %3671 = vdwg.mxu0
    %3672 = vrot.lane.b32.xlu0 %v2686, 112
    %v3673 = vpop.permute.xlu0 %3672
    %3674 = vrot.lane.b32.xlu0 %v2686, 80
    %v3675 = vpop.permute.xlu0 %3674
    %v3677 = vsel %vm320, %v3673, 0
    %v3680 = vsel %vm320, %v3675, 0
    %3682 = vmatprep.subr.bf16.mxu0 0
    %3683 = vmatpush1.bf16.xpose.msra.mxu0 0
    %3684 = vmatprep.subr.bf16.mxu0 0
    %3685 = vmatpush1.bf16.xpose.msra.mxu0 0
    %3686 = vmatprep.subr.bf16.mxu0 0
    %3687 = vmatpush1.bf16.xpose.msra.mxu0 0
    %3688 = vmatprep.subr.bf16.mxu0 0
    %3689 = vmatpush1.bf16.xpose.msra.mxu0 0
    %3690 = vmatprep.subr.bf16.mxu0 0
    %3691 = vmatpush1.bf16.xpose.msra.mxu0 0
    %3692 = vmatprep.subr.bf16.mxu0 0
    %3693 = vmatpush1.bf16.xpose.msra.mxu0 0
    %3694 = vmatprep.subr.bf16.mxu0 0
    %3695 = vmatpush1.bf16.xpose.msra.mxu0 0
    %3696 = vmatprep.subr.bf16.mxu0 0
    %3697 = vmatpush1.bf16.xpose.msra.mxu0 %v3680
    %3698 = vmatprep.subr.bf16.mxu0 0
    %3699 = vmatpush2.bf16.xpose.msra.mxu0 0
    %3700 = vmatprep.subr.bf16.mxu0 0
    %3701 = vmatpush2.bf16.xpose.msra.mxu0 0
    %3702 = vmatprep.subr.bf16.mxu0 0
    %3703 = vmatpush2.bf16.xpose.msra.mxu0 0
    %3704 = vmatprep.subr.bf16.mxu0 0
    %3705 = vmatpush2.bf16.xpose.msra.mxu0 0
    %3706 = vmatprep.subr.bf16.mxu0 0
    %3707 = vmatpush2.bf16.xpose.msra.mxu0 0
    %3708 = vmatprep.subr.bf16.mxu0 0
    %3709 = vmatpush2.bf16.xpose.msra.mxu0 0
    %3710 = vmatprep.subr.bf16.mxu0 0
    %3711 = vmatpush2.bf16.xpose.msra.mxu0 0
    %3712 = vmatprep.subr.bf16.mxu0 0
    %3713 = vmatpush2.bf16.xpose.msra.mxu0 0
    %3714 = vmatprep.mubr.bf16.mxu0 0
    %3715 = vmatmul.mubr.bf16.gmra.mxu0 %v3677
    %v3716 = vpop.f32.mrf.mxu0
    %v3717 = vadd.f32 0.0, %v3716
    %v3718 = vpop.f32.mrf.mxu0
    %v3719 = vpop.f32.mrf.mxu0
    %v3720 = vpop.f32.mrf.mxu0
    %3721 = vdwg.mxu0
    %3722 = vrot.lane.b32.xlu0 %v2687, 112
    %v3723 = vpop.permute.xlu0 %3722
    %3724 = vrot.lane.b32.xlu0 %v2687, 80
    %v3725 = vpop.permute.xlu0 %3724
    %v3727 = vsel %vm320, %v3723, 0
    %v3730 = vsel %vm320, %v3725, 0
    %3732 = vmatprep.subr.bf16.mxu0 0
    %3733 = vmatpush1.bf16.xpose.msra.mxu0 0
    %3734 = vmatprep.subr.bf16.mxu0 0
    %3735 = vmatpush1.bf16.xpose.msra.mxu0 0
    %3736 = vmatprep.subr.bf16.mxu0 0
    %3737 = vmatpush1.bf16.xpose.msra.mxu0 0
    %3738 = vmatprep.subr.bf16.mxu0 0
    %3739 = vmatpush1.bf16.xpose.msra.mxu0 0
    %3740 = vmatprep.subr.bf16.mxu0 0
    %3741 = vmatpush1.bf16.xpose.msra.mxu0 0
    %3742 = vmatprep.subr.bf16.mxu0 0
    %3743 = vmatpush1.bf16.xpose.msra.mxu0 0
    %3744 = vmatprep.subr.bf16.mxu0 0
    %3745 = vmatpush1.bf16.xpose.msra.mxu0 0
    %3746 = vmatprep.subr.bf16.mxu0 0
    %3747 = vmatpush1.bf16.xpose.msra.mxu0 %v3730
    %3748 = vmatprep.subr.bf16.mxu0 0
    %3749 = vmatpush2.bf16.xpose.msra.mxu0 0
    %3750 = vmatprep.subr.bf16.mxu0 0
    %3751 = vmatpush2.bf16.xpose.msra.mxu0 0
    %3752 = vmatprep.subr.bf16.mxu0 0
    %3753 = vmatpush2.bf16.xpose.msra.mxu0 0
    %3754 = vmatprep.subr.bf16.mxu0 0
    %3755 = vmatpush2.bf16.xpose.msra.mxu0 0
    %3756 = vmatprep.subr.bf16.mxu0 0
    %3757 = vmatpush2.bf16.xpose.msra.mxu0 0
    %3758 = vmatprep.subr.bf16.mxu0 0
    %3759 = vmatpush2.bf16.xpose.msra.mxu0 0
    %3760 = vmatprep.subr.bf16.mxu0 0
    %3761 = vmatpush2.bf16.xpose.msra.mxu0 0
    %3762 = vmatprep.subr.bf16.mxu0 0
    %3763 = vmatpush2.bf16.xpose.msra.mxu0 0
    %3764 = vmatprep.mubr.bf16.mxu0 0
    %3765 = vmatmul.mubr.bf16.gmra.mxu0 %v3727
    %v3766 = vpop.f32.mrf.mxu0
    %v3767 = vadd.f32 0.0, %v3766
    %v3768 = vpop.f32.mrf.mxu0
    %v3769 = vpop.f32.mrf.mxu0
    %v3770 = vpop.f32.mrf.mxu0
    %3771 = vdwg.mxu0
    %v3772 = vmul.f32 %v3617, 0.35355338
    %v3773 = vmul.f32 %v3667, 0.35355338
    %v3774 = vmul.f32 %v3717, 0.35355338
    %v3775 = vmul.f32 %v3767, 0.35355338
    %v3776 = vsel %vm320, %v3772, -inf
    %3777 = vmax.xlane.f32.xlu0 %v3776
    %v3778 = vpop.xlane.xlu0 %3777
    %v3779 = vsel %vm320, %v3773, -inf
    %3780 = vmax.xlane.f32.xlu0 %v3779
    %v3781 = vpop.xlane.xlu0 %3780
    %v3782 = vsel %vm320, %v3774, -inf
    %3783 = vmax.xlane.f32.xlu0 %v3782
    %v3784 = vpop.xlane.xlu0 %3783
    %v3785 = vsel %vm320, %v3775, -inf
    %3786 = vmax.xlane.f32.xlu0 %v3785
    %v3787 = vpop.xlane.xlu0 %3786
    %v3788 = vsub.f32 %v3772, %v3778
    %v3789 = vsub.f32 %v3773, %v3781
    %v3790 = vsub.f32 %v3774, %v3784
    %v3791 = vsub.f32 %v3775, %v3787
    %v3792 = vmul.f32 %v3788, 1.442695
    %v3793 = vpow.pop %v3792
    %v3794 = vmul.f32 %v3789, 1.442695
    %v3795 = vpow.pop %v3794
    %v3796 = vmul.f32 %v3790, 1.442695
    %v3797 = vpow.pop %v3796
    %v3798 = vmul.f32 %v3791, 1.442695
    %v3799 = vpow.pop %v3798
    %v3800 = vsel %vm320, %v3793, 0.0
    %3801 = vadd.xlane.f32.xlu0 %v3800
    %v3802 = vpop.xlane.xlu0 %3801
    %v3803 = vsel %vm320, %v3795, 0.0
    %3804 = vadd.xlane.f32.xlu0 %v3803
    %v3805 = vpop.xlane.xlu0 %3804
    %v3806 = vsel %vm320, %v3797, 0.0
    %3807 = vadd.xlane.f32.xlu0 %v3806
    %v3808 = vpop.xlane.xlu0 %3807
    %v3809 = vsel %vm320, %v3799, 0.0
    %3810 = vadd.xlane.f32.xlu0 %v3809
    %v3811 = vpop.xlane.xlu0 %3810
    %v3812 = vrcp.pop %v3802
    %v3813 = vrcp.pop %v3805
    %v3814 = vrcp.pop %v3808
    %v3815 = vrcp.pop %v3811
    %v3816 = vmul.f32 %v3793, %v3812
    %v3817 = vmul.f32 %v3795, %v3813
    %v3818 = vmul.f32 %v3797, %v3814
    %v3819 = vmul.f32 %v3799, %v3815
    %v3820 = vpack.c.bf16 %v3816, %v3816
    %v3821 = vpack.c.bf16 %v3817, %v3817
    %v3822 = vpack.c.bf16 %v3818, %v3818
    %v3823 = vpack.c.bf16 %v3819, %v3819
    %3824 = vrot.lane.b32.xlu0 %v2684, 48
    %v3825 = vpop.permute.xlu0 %3824
    %v3827 = vsel %vm320, %v3820, 0
    %v3830 = vsel %vm571, %v3825, 0
    %3832 = vmatprep.subr.bf16.mxu0 0
    %3833 = vmatpush1.bf16.msra.mxu0 0
    %3834 = vmatprep.subr.bf16.mxu0 0
    %3835 = vmatpush1.bf16.msra.mxu0 0
    %3836 = vmatprep.subr.bf16.mxu0 0
    %3837 = vmatpush1.bf16.msra.mxu0 0
    %3838 = vmatprep.subr.bf16.mxu0 0
    %3839 = vmatpush1.bf16.msra.mxu0 0
    %3840 = vmatprep.subr.bf16.mxu0 0
    %3841 = vmatpush1.bf16.msra.mxu0 0
    %3842 = vmatprep.subr.bf16.mxu0 0
    %3843 = vmatpush1.bf16.msra.mxu0 0
    %3844 = vmatprep.subr.bf16.mxu0 0
    %3845 = vmatpush1.bf16.msra.mxu0 0
    %3846 = vmatprep.subr.bf16.mxu0 0
    %3847 = vmatpush1.bf16.msra.mxu0 %v3830
    %3848 = vmatprep.subr.bf16.mxu0 0
    %3849 = vmatpush2.bf16.msra.mxu0 0
    %3850 = vmatprep.subr.bf16.mxu0 0
    %3851 = vmatpush2.bf16.msra.mxu0 0
    %3852 = vmatprep.subr.bf16.mxu0 0
    %3853 = vmatpush2.bf16.msra.mxu0 0
    %3854 = vmatprep.subr.bf16.mxu0 0
    %3855 = vmatpush2.bf16.msra.mxu0 0
    %3856 = vmatprep.subr.bf16.mxu0 0
    %3857 = vmatpush2.bf16.msra.mxu0 0
    %3858 = vmatprep.subr.bf16.mxu0 0
    %3859 = vmatpush2.bf16.msra.mxu0 0
    %3860 = vmatprep.subr.bf16.mxu0 0
    %3861 = vmatpush2.bf16.msra.mxu0 0
    %3862 = vmatprep.subr.bf16.mxu0 0
    %3863 = vmatpush2.bf16.msra.mxu0 0
    %3864 = vmatprep.mubr.bf16.mxu0 0
    %3865 = vmatmul.mubr.bf16.gmra.mxu0 %v3827
    %v3866 = vpop.f32.mrf.mxu0
    %v3867 = vadd.f32 0.0, %v3866
    %v3868 = vpop.f32.mrf.mxu0
    %v3869 = vpop.f32.mrf.mxu0
    %v3870 = vpop.f32.mrf.mxu0
    %3871 = vdwg.mxu0
    %3872 = vrot.lane.b32.xlu0 %v2685, 48
    %v3873 = vpop.permute.xlu0 %3872
    %v3875 = vsel %vm320, %v3821, 0
    %v3878 = vsel %vm571, %v3873, 0
    %3880 = vmatprep.subr.bf16.mxu0 0
    %3881 = vmatpush1.bf16.msra.mxu0 0
    %3882 = vmatprep.subr.bf16.mxu0 0
    %3883 = vmatpush1.bf16.msra.mxu0 0
    %3884 = vmatprep.subr.bf16.mxu0 0
    %3885 = vmatpush1.bf16.msra.mxu0 0
    %3886 = vmatprep.subr.bf16.mxu0 0
    %3887 = vmatpush1.bf16.msra.mxu0 0
    %3888 = vmatprep.subr.bf16.mxu0 0
    %3889 = vmatpush1.bf16.msra.mxu0 0
    %3890 = vmatprep.subr.bf16.mxu0 0
    %3891 = vmatpush1.bf16.msra.mxu0 0
    %3892 = vmatprep.subr.bf16.mxu0 0
    %3893 = vmatpush1.bf16.msra.mxu0 0
    %3894 = vmatprep.subr.bf16.mxu0 0
    %3895 = vmatpush1.bf16.msra.mxu0 %v3878
    %3896 = vmatprep.subr.bf16.mxu0 0
    %3897 = vmatpush2.bf16.msra.mxu0 0
    %3898 = vmatprep.subr.bf16.mxu0 0
    %3899 = vmatpush2.bf16.msra.mxu0 0
    %3900 = vmatprep.subr.bf16.mxu0 0
    %3901 = vmatpush2.bf16.msra.mxu0 0
    %3902 = vmatprep.subr.bf16.mxu0 0
    %3903 = vmatpush2.bf16.msra.mxu0 0
    %3904 = vmatprep.subr.bf16.mxu0 0
    %3905 = vmatpush2.bf16.msra.mxu0 0
    %3906 = vmatprep.subr.bf16.mxu0 0
    %3907 = vmatpush2.bf16.msra.mxu0 0
    %3908 = vmatprep.subr.bf16.mxu0 0
    %3909 = vmatpush2.bf16.msra.mxu0 0
    %3910 = vmatprep.subr.bf16.mxu0 0
    %3911 = vmatpush2.bf16.msra.mxu0 0
    %3912 = vmatprep.mubr.bf16.mxu0 0
    %3913 = vmatmul.mubr.bf16.gmra.mxu0 %v3875
    %v3914 = vpop.f32.mrf.mxu0
    %v3915 = vadd.f32 0.0, %v3914
    %v3916 = vpop.f32.mrf.mxu0
    %v3917 = vpop.f32.mrf.mxu0
    %v3918 = vpop.f32.mrf.mxu0
    %3919 = vdwg.mxu0
    %3920 = vrot.lane.b32.xlu0 %v2686, 48
    %v3921 = vpop.permute.xlu0 %3920
    %v3923 = vsel %vm320, %v3822, 0
    %v3926 = vsel %vm571, %v3921, 0
    %3928 = vmatprep.subr.bf16.mxu0 0
    %3929 = vmatpush1.bf16.msra.mxu0 0
    %3930 = vmatprep.subr.bf16.mxu0 0
    %3931 = vmatpush1.bf16.msra.mxu0 0
    %3932 = vmatprep.subr.bf16.mxu0 0
    %3933 = vmatpush1.bf16.msra.mxu0 0
    %3934 = vmatprep.subr.bf16.mxu0 0
    %3935 = vmatpush1.bf16.msra.mxu0 0
    %3936 = vmatprep.subr.bf16.mxu0 0
    %3937 = vmatpush1.bf16.msra.mxu0 0
    %3938 = vmatprep.subr.bf16.mxu0 0
    %3939 = vmatpush1.bf16.msra.mxu0 0
    %3940 = vmatprep.subr.bf16.mxu0 0
    %3941 = vmatpush1.bf16.msra.mxu0 0
    %3942 = vmatprep.subr.bf16.mxu0 0
    %3943 = vmatpush1.bf16.msra.mxu0 %v3926
    %3944 = vmatprep.subr.bf16.mxu0 0
    %3945 = vmatpush2.bf16.msra.mxu0 0
    %3946 = vmatprep.subr.bf16.mxu0 0
    %3947 = vmatpush2.bf16.msra.mxu0 0
    %3948 = vmatprep.subr.bf16.mxu0 0
    %3949 = vmatpush2.bf16.msra.mxu0 0
    %3950 = vmatprep.subr.bf16.mxu0 0
    %3951 = vmatpush2.bf16.msra.mxu0 0
    %3952 = vmatprep.subr.bf16.mxu0 0
    %3953 = vmatpush2.bf16.msra.mxu0 0
    %3954 = vmatprep.subr.bf16.mxu0 0
    %3955 = vmatpush2.bf16.msra.mxu0 0
    %3956 = vmatprep.subr.bf16.mxu0 0
    %3957 = vmatpush2.bf16.msra.mxu0 0
    %3958 = vmatprep.subr.bf16.mxu0 0
    %3959 = vmatpush2.bf16.msra.mxu0 0
    %3960 = vmatprep.mubr.bf16.mxu0 0
    %3961 = vmatmul.mubr.bf16.gmra.mxu0 %v3923
    %v3962 = vpop.f32.mrf.mxu0
    %v3963 = vadd.f32 0.0, %v3962
    %v3964 = vpop.f32.mrf.mxu0
    %v3965 = vpop.f32.mrf.mxu0
    %v3966 = vpop.f32.mrf.mxu0
    %3967 = vdwg.mxu0
    %3968 = vrot.lane.b32.xlu0 %v2687, 48
    %v3969 = vpop.permute.xlu0 %3968
    %v3971 = vsel %vm320, %v3823, 0
    %v3974 = vsel %vm571, %v3969, 0
    %3976 = vmatprep.subr.bf16.mxu0 0
    %3977 = vmatpush1.bf16.msra.mxu0 0
    %3978 = vmatprep.subr.bf16.mxu0 0
    %3979 = vmatpush1.bf16.msra.mxu0 0
    %3980 = vmatprep.subr.bf16.mxu0 0
    %3981 = vmatpush1.bf16.msra.mxu0 0
    %3982 = vmatprep.subr.bf16.mxu0 0
    %3983 = vmatpush1.bf16.msra.mxu0 0
    %3984 = vmatprep.subr.bf16.mxu0 0
    %3985 = vmatpush1.bf16.msra.mxu0 0
    %3986 = vmatprep.subr.bf16.mxu0 0
    %3987 = vmatpush1.bf16.msra.mxu0 0
    %3988 = vmatprep.subr.bf16.mxu0 0
    %3989 = vmatpush1.bf16.msra.mxu0 0
    %3990 = vmatprep.subr.bf16.mxu0 0
    %3991 = vmatpush1.bf16.msra.mxu0 %v3974
    %3992 = vmatprep.subr.bf16.mxu0 0
    %3993 = vmatpush2.bf16.msra.mxu0 0
    %3994 = vmatprep.subr.bf16.mxu0 0
    %3995 = vmatpush2.bf16.msra.mxu0 0
    %3996 = vmatprep.subr.bf16.mxu0 0
    %3997 = vmatpush2.bf16.msra.mxu0 0
    %3998 = vmatprep.subr.bf16.mxu0 0
    %3999 = vmatpush2.bf16.msra.mxu0 0
    %4000 = vmatprep.subr.bf16.mxu0 0
    %4001 = vmatpush2.bf16.msra.mxu0 0
    %4002 = vmatprep.subr.bf16.mxu0 0
    %4003 = vmatpush2.bf16.msra.mxu0 0
    %4004 = vmatprep.subr.bf16.mxu0 0
    %4005 = vmatpush2.bf16.msra.mxu0 0
    %4006 = vmatprep.subr.bf16.mxu0 0
    %4007 = vmatpush2.bf16.msra.mxu0 0
    %4008 = vmatprep.mubr.bf16.mxu0 0
    %4009 = vmatmul.mubr.bf16.gmra.mxu0 %v3971
    %v4010 = vpop.f32.mrf.mxu0
    %v4011 = vadd.f32 0.0, %v4010
    %v4012 = vpop.f32.mrf.mxu0
    %v4013 = vpop.f32.mrf.mxu0
    %v4014 = vpop.f32.mrf.mxu0
    %4015 = vdwg.mxu0
    %4016 = vrot.lane.b32.xlu0 %v2684, 104
    %v4017 = vpop.permute.xlu0 %4016
    %4018 = vrot.lane.b32.xlu0 %v2684, 72
    %v4019 = vpop.permute.xlu0 %4018
    %v4021 = vsel %vm320, %v4017, 0
    %v4024 = vsel %vm320, %v4019, 0
    %4026 = vmatprep.subr.bf16.mxu0 0
    %4027 = vmatpush1.bf16.xpose.msra.mxu0 0
    %4028 = vmatprep.subr.bf16.mxu0 0
    %4029 = vmatpush1.bf16.xpose.msra.mxu0 0
    %4030 = vmatprep.subr.bf16.mxu0 0
    %4031 = vmatpush1.bf16.xpose.msra.mxu0 0
    %4032 = vmatprep.subr.bf16.mxu0 0
    %4033 = vmatpush1.bf16.xpose.msra.mxu0 0
    %4034 = vmatprep.subr.bf16.mxu0 0
    %4035 = vmatpush1.bf16.xpose.msra.mxu0 0
    %4036 = vmatprep.subr.bf16.mxu0 0
    %4037 = vmatpush1.bf16.xpose.msra.mxu0 0
    %4038 = vmatprep.subr.bf16.mxu0 0
    %4039 = vmatpush1.bf16.xpose.msra.mxu0 0
    %4040 = vmatprep.subr.bf16.mxu0 0
    %4041 = vmatpush1.bf16.xpose.msra.mxu0 %v4024
    %4042 = vmatprep.subr.bf16.mxu0 0
    %4043 = vmatpush2.bf16.xpose.msra.mxu0 0
    %4044 = vmatprep.subr.bf16.mxu0 0
    %4045 = vmatpush2.bf16.xpose.msra.mxu0 0
    %4046 = vmatprep.subr.bf16.mxu0 0
    %4047 = vmatpush2.bf16.xpose.msra.mxu0 0
    %4048 = vmatprep.subr.bf16.mxu0 0
    %4049 = vmatpush2.bf16.xpose.msra.mxu0 0
    %4050 = vmatprep.subr.bf16.mxu0 0
    %4051 = vmatpush2.bf16.xpose.msra.mxu0 0
    %4052 = vmatprep.subr.bf16.mxu0 0
    %4053 = vmatpush2.bf16.xpose.msra.mxu0 0
    %4054 = vmatprep.subr.bf16.mxu0 0
    %4055 = vmatpush2.bf16.xpose.msra.mxu0 0
    %4056 = vmatprep.subr.bf16.mxu0 0
    %4057 = vmatpush2.bf16.xpose.msra.mxu0 0
    %4058 = vmatprep.mubr.bf16.mxu0 0
    %4059 = vmatmul.mubr.bf16.gmra.mxu0 %v4021
    %v4060 = vpop.f32.mrf.mxu0
    %v4061 = vadd.f32 0.0, %v4060
    %v4062 = vpop.f32.mrf.mxu0
    %v4063 = vpop.f32.mrf.mxu0
    %v4064 = vpop.f32.mrf.mxu0
    %4065 = vdwg.mxu0
    %4066 = vrot.lane.b32.xlu0 %v2685, 104
    %v4067 = vpop.permute.xlu0 %4066
    %4068 = vrot.lane.b32.xlu0 %v2685, 72
    %v4069 = vpop.permute.xlu0 %4068
    %v4071 = vsel %vm320, %v4067, 0
    %v4074 = vsel %vm320, %v4069, 0
    %4076 = vmatprep.subr.bf16.mxu0 0
    %4077 = vmatpush1.bf16.xpose.msra.mxu0 0
    %4078 = vmatprep.subr.bf16.mxu0 0
    %4079 = vmatpush1.bf16.xpose.msra.mxu0 0
    %4080 = vmatprep.subr.bf16.mxu0 0
    %4081 = vmatpush1.bf16.xpose.msra.mxu0 0
    %4082 = vmatprep.subr.bf16.mxu0 0
    %4083 = vmatpush1.bf16.xpose.msra.mxu0 0
    %4084 = vmatprep.subr.bf16.mxu0 0
    %4085 = vmatpush1.bf16.xpose.msra.mxu0 0
    %4086 = vmatprep.subr.bf16.mxu0 0
    %4087 = vmatpush1.bf16.xpose.msra.mxu0 0
    %4088 = vmatprep.subr.bf16.mxu0 0
    %4089 = vmatpush1.bf16.xpose.msra.mxu0 0
    %4090 = vmatprep.subr.bf16.mxu0 0
    %4091 = vmatpush1.bf16.xpose.msra.mxu0 %v4074
    %4092 = vmatprep.subr.bf16.mxu0 0
    %4093 = vmatpush2.bf16.xpose.msra.mxu0 0
    %4094 = vmatprep.subr.bf16.mxu0 0
    %4095 = vmatpush2.bf16.xpose.msra.mxu0 0
    %4096 = vmatprep.subr.bf16.mxu0 0
    %4097 = vmatpush2.bf16.xpose.msra.mxu0 0
    %4098 = vmatprep.subr.bf16.mxu0 0
    %4099 = vmatpush2.bf16.xpose.msra.mxu0 0
    %4100 = vmatprep.subr.bf16.mxu0 0
    %4101 = vmatpush2.bf16.xpose.msra.mxu0 0
    %4102 = vmatprep.subr.bf16.mxu0 0
    %4103 = vmatpush2.bf16.xpose.msra.mxu0 0
    %4104 = vmatprep.subr.bf16.mxu0 0
    %4105 = vmatpush2.bf16.xpose.msra.mxu0 0
    %4106 = vmatprep.subr.bf16.mxu0 0
    %4107 = vmatpush2.bf16.xpose.msra.mxu0 0
    %4108 = vmatprep.mubr.bf16.mxu0 0
    %4109 = vmatmul.mubr.bf16.gmra.mxu0 %v4071
    %v4110 = vpop.f32.mrf.mxu0
    %v4111 = vadd.f32 0.0, %v4110
    %v4112 = vpop.f32.mrf.mxu0
    %v4113 = vpop.f32.mrf.mxu0
    %v4114 = vpop.f32.mrf.mxu0
    %4115 = vdwg.mxu0
    %4116 = vrot.lane.b32.xlu0 %v2686, 104
    %v4117 = vpop.permute.xlu0 %4116
    %4118 = vrot.lane.b32.xlu0 %v2686, 72
    %v4119 = vpop.permute.xlu0 %4118
    %v4121 = vsel %vm320, %v4117, 0
    %v4124 = vsel %vm320, %v4119, 0
    %4126 = vmatprep.subr.bf16.mxu0 0
    %4127 = vmatpush1.bf16.xpose.msra.mxu0 0
    %4128 = vmatprep.subr.bf16.mxu0 0
    %4129 = vmatpush1.bf16.xpose.msra.mxu0 0
    %4130 = vmatprep.subr.bf16.mxu0 0
    %4131 = vmatpush1.bf16.xpose.msra.mxu0 0
    %4132 = vmatprep.subr.bf16.mxu0 0
    %4133 = vmatpush1.bf16.xpose.msra.mxu0 0
    %4134 = vmatprep.subr.bf16.mxu0 0
    %4135 = vmatpush1.bf16.xpose.msra.mxu0 0
    %4136 = vmatprep.subr.bf16.mxu0 0
    %4137 = vmatpush1.bf16.xpose.msra.mxu0 0
    %4138 = vmatprep.subr.bf16.mxu0 0
    %4139 = vmatpush1.bf16.xpose.msra.mxu0 0
    %4140 = vmatprep.subr.bf16.mxu0 0
    %4141 = vmatpush1.bf16.xpose.msra.mxu0 %v4124
    %4142 = vmatprep.subr.bf16.mxu0 0
    %4143 = vmatpush2.bf16.xpose.msra.mxu0 0
    %4144 = vmatprep.subr.bf16.mxu0 0
    %4145 = vmatpush2.bf16.xpose.msra.mxu0 0
    %4146 = vmatprep.subr.bf16.mxu0 0
    %4147 = vmatpush2.bf16.xpose.msra.mxu0 0
    %4148 = vmatprep.subr.bf16.mxu0 0
    %4149 = vmatpush2.bf16.xpose.msra.mxu0 0
    %4150 = vmatprep.subr.bf16.mxu0 0
    %4151 = vmatpush2.bf16.xpose.msra.mxu0 0
    %4152 = vmatprep.subr.bf16.mxu0 0
    %4153 = vmatpush2.bf16.xpose.msra.mxu0 0
    %4154 = vmatprep.subr.bf16.mxu0 0
    %4155 = vmatpush2.bf16.xpose.msra.mxu0 0
    %4156 = vmatprep.subr.bf16.mxu0 0
    %4157 = vmatpush2.bf16.xpose.msra.mxu0 0
    %4158 = vmatprep.mubr.bf16.mxu0 0
    %4159 = vmatmul.mubr.bf16.gmra.mxu0 %v4121
    %v4160 = vpop.f32.mrf.mxu0
    %v4161 = vadd.f32 0.0, %v4160
    %v4162 = vpop.f32.mrf.mxu0
    %v4163 = vpop.f32.mrf.mxu0
    %v4164 = vpop.f32.mrf.mxu0
    %4165 = vdwg.mxu0
    %4166 = vrot.lane.b32.xlu0 %v2687, 104
    %v4167 = vpop.permute.xlu0 %4166
    %4168 = vrot.lane.b32.xlu0 %v2687, 72
    %v4169 = vpop.permute.xlu0 %4168
    %v4171 = vsel %vm320, %v4167, 0
    %v4174 = vsel %vm320, %v4169, 0
    %4176 = vmatprep.subr.bf16.mxu0 0
    %4177 = vmatpush1.bf16.xpose.msra.mxu0 0
    %4178 = vmatprep.subr.bf16.mxu0 0
    %4179 = vmatpush1.bf16.xpose.msra.mxu0 0
    %4180 = vmatprep.subr.bf16.mxu0 0
    %4181 = vmatpush1.bf16.xpose.msra.mxu0 0
    %4182 = vmatprep.subr.bf16.mxu0 0
    %4183 = vmatpush1.bf16.xpose.msra.mxu0 0
    %4184 = vmatprep.subr.bf16.mxu0 0
    %4185 = vmatpush1.bf16.xpose.msra.mxu0 0
    %4186 = vmatprep.subr.bf16.mxu0 0
    %4187 = vmatpush1.bf16.xpose.msra.mxu0 0
    %4188 = vmatprep.subr.bf16.mxu0 0
    %4189 = vmatpush1.bf16.xpose.msra.mxu0 0
    %4190 = vmatprep.subr.bf16.mxu0 0
    %4191 = vmatpush1.bf16.xpose.msra.mxu0 %v4174
    %4192 = vmatprep.subr.bf16.mxu0 0
    %4193 = vmatpush2.bf16.xpose.msra.mxu0 0
    %4194 = vmatprep.subr.bf16.mxu0 0
    %4195 = vmatpush2.bf16.xpose.msra.mxu0 0
    %4196 = vmatprep.subr.bf16.mxu0 0
    %4197 = vmatpush2.bf16.xpose.msra.mxu0 0
    %4198 = vmatprep.subr.bf16.mxu0 0
    %4199 = vmatpush2.bf16.xpose.msra.mxu0 0
    %4200 = vmatprep.subr.bf16.mxu0 0
    %4201 = vmatpush2.bf16.xpose.msra.mxu0 0
    %4202 = vmatprep.subr.bf16.mxu0 0
    %4203 = vmatpush2.bf16.xpose.msra.mxu0 0
    %4204 = vmatprep.subr.bf16.mxu0 0
    %4205 = vmatpush2.bf16.xpose.msra.mxu0 0
    %4206 = vmatprep.subr.bf16.mxu0 0
    %4207 = vmatpush2.bf16.xpose.msra.mxu0 0
    %4208 = vmatprep.mubr.bf16.mxu0 0
    %4209 = vmatmul.mubr.bf16.gmra.mxu0 %v4171
    %v4210 = vpop.f32.mrf.mxu0
    %v4211 = vadd.f32 0.0, %v4210
    %v4212 = vpop.f32.mrf.mxu0
    %v4213 = vpop.f32.mrf.mxu0
    %v4214 = vpop.f32.mrf.mxu0
    %4215 = vdwg.mxu0
    %v4216 = vmul.f32 %v4061, 0.35355338
    %v4217 = vmul.f32 %v4111, 0.35355338
    %v4218 = vmul.f32 %v4161, 0.35355338
    %v4219 = vmul.f32 %v4211, 0.35355338
    %v4220 = vsel %vm320, %v4216, -inf
    %4221 = vmax.xlane.f32.xlu0 %v4220
    %v4222 = vpop.xlane.xlu0 %4221
    %v4223 = vsel %vm320, %v4217, -inf
    %4224 = vmax.xlane.f32.xlu0 %v4223
    %v4225 = vpop.xlane.xlu0 %4224
    %v4226 = vsel %vm320, %v4218, -inf
    %4227 = vmax.xlane.f32.xlu0 %v4226
    %v4228 = vpop.xlane.xlu0 %4227
    %v4229 = vsel %vm320, %v4219, -inf
    %4230 = vmax.xlane.f32.xlu0 %v4229
    %v4231 = vpop.xlane.xlu0 %4230
    %v4232 = vsub.f32 %v4216, %v4222
    %v4233 = vsub.f32 %v4217, %v4225
    %v4234 = vsub.f32 %v4218, %v4228
    %v4235 = vsub.f32 %v4219, %v4231
    %v4236 = vmul.f32 %v4232, 1.442695
    %v4237 = vpow.pop %v4236
    %v4238 = vmul.f32 %v4233, 1.442695
    %v4239 = vpow.pop %v4238
    %v4240 = vmul.f32 %v4234, 1.442695
    %v4241 = vpow.pop %v4240
    %v4242 = vmul.f32 %v4235, 1.442695
    %v4243 = vpow.pop %v4242
    %v4244 = vsel %vm320, %v4237, 0.0
    %4245 = vadd.xlane.f32.xlu0 %v4244
    %v4246 = vpop.xlane.xlu0 %4245
    %v4247 = vsel %vm320, %v4239, 0.0
    %4248 = vadd.xlane.f32.xlu0 %v4247
    %v4249 = vpop.xlane.xlu0 %4248
    %v4250 = vsel %vm320, %v4241, 0.0
    %4251 = vadd.xlane.f32.xlu0 %v4250
    %v4252 = vpop.xlane.xlu0 %4251
    %v4253 = vsel %vm320, %v4243, 0.0
    %4254 = vadd.xlane.f32.xlu0 %v4253
    %v4255 = vpop.xlane.xlu0 %4254
    %v4256 = vrcp.pop %v4246
    %v4257 = vrcp.pop %v4249
    %v4258 = vrcp.pop %v4252
    %v4259 = vrcp.pop %v4255
    %v4260 = vmul.f32 %v4237, %v4256
    %v4261 = vmul.f32 %v4239, %v4257
    %v4262 = vmul.f32 %v4241, %v4258
    %v4263 = vmul.f32 %v4243, %v4259
    %v4264 = vpack.c.bf16 %v4260, %v4260
    %v4265 = vpack.c.bf16 %v4261, %v4261
    %v4266 = vpack.c.bf16 %v4262, %v4262
    %v4267 = vpack.c.bf16 %v4263, %v4263
    %4268 = vrot.lane.b32.xlu0 %v2684, 40
    %v4269 = vpop.permute.xlu0 %4268
    %v4271 = vsel %vm320, %v4264, 0
    %v4274 = vsel %vm571, %v4269, 0
    %4276 = vmatprep.subr.bf16.mxu0 0
    %4277 = vmatpush1.bf16.msra.mxu0 0
    %4278 = vmatprep.subr.bf16.mxu0 0
    %4279 = vmatpush1.bf16.msra.mxu0 0
    %4280 = vmatprep.subr.bf16.mxu0 0
    %4281 = vmatpush1.bf16.msra.mxu0 0
    %4282 = vmatprep.subr.bf16.mxu0 0
    %4283 = vmatpush1.bf16.msra.mxu0 0
    %4284 = vmatprep.subr.bf16.mxu0 0
    %4285 = vmatpush1.bf16.msra.mxu0 0
    %4286 = vmatprep.subr.bf16.mxu0 0
    %4287 = vmatpush1.bf16.msra.mxu0 0
    %4288 = vmatprep.subr.bf16.mxu0 0
    %4289 = vmatpush1.bf16.msra.mxu0 0
    %4290 = vmatprep.subr.bf16.mxu0 0
    %4291 = vmatpush1.bf16.msra.mxu0 %v4274
    %4292 = vmatprep.subr.bf16.mxu0 0
    %4293 = vmatpush2.bf16.msra.mxu0 0
    %4294 = vmatprep.subr.bf16.mxu0 0
    %4295 = vmatpush2.bf16.msra.mxu0 0
    %4296 = vmatprep.subr.bf16.mxu0 0
    %4297 = vmatpush2.bf16.msra.mxu0 0
    %4298 = vmatprep.subr.bf16.mxu0 0
    %4299 = vmatpush2.bf16.msra.mxu0 0
    %4300 = vmatprep.subr.bf16.mxu0 0
    %4301 = vmatpush2.bf16.msra.mxu0 0
    %4302 = vmatprep.subr.bf16.mxu0 0
    %4303 = vmatpush2.bf16.msra.mxu0 0
    %4304 = vmatprep.subr.bf16.mxu0 0
    %4305 = vmatpush2.bf16.msra.mxu0 0
    %4306 = vmatprep.subr.bf16.mxu0 0
    %4307 = vmatpush2.bf16.msra.mxu0 0
    %4308 = vmatprep.mubr.bf16.mxu0 0
    %4309 = vmatmul.mubr.bf16.gmra.mxu0 %v4271
    %v4310 = vpop.f32.mrf.mxu0
    %v4311 = vadd.f32 0.0, %v4310
    %v4312 = vpop.f32.mrf.mxu0
    %v4313 = vpop.f32.mrf.mxu0
    %v4314 = vpop.f32.mrf.mxu0
    %4315 = vdwg.mxu0
    %4316 = vrot.lane.b32.xlu0 %v2685, 40
    %v4317 = vpop.permute.xlu0 %4316
    %v4319 = vsel %vm320, %v4265, 0
    %v4322 = vsel %vm571, %v4317, 0
    %4324 = vmatprep.subr.bf16.mxu0 0
    %4325 = vmatpush1.bf16.msra.mxu0 0
    %4326 = vmatprep.subr.bf16.mxu0 0
    %4327 = vmatpush1.bf16.msra.mxu0 0
    %4328 = vmatprep.subr.bf16.mxu0 0
    %4329 = vmatpush1.bf16.msra.mxu0 0
    %4330 = vmatprep.subr.bf16.mxu0 0
    %4331 = vmatpush1.bf16.msra.mxu0 0
    %4332 = vmatprep.subr.bf16.mxu0 0
    %4333 = vmatpush1.bf16.msra.mxu0 0
    %4334 = vmatprep.subr.bf16.mxu0 0
    %4335 = vmatpush1.bf16.msra.mxu0 0
    %4336 = vmatprep.subr.bf16.mxu0 0
    %4337 = vmatpush1.bf16.msra.mxu0 0
    %4338 = vmatprep.subr.bf16.mxu0 0
    %4339 = vmatpush1.bf16.msra.mxu0 %v4322
    %4340 = vmatprep.subr.bf16.mxu0 0
    %4341 = vmatpush2.bf16.msra.mxu0 0
    %4342 = vmatprep.subr.bf16.mxu0 0
    %4343 = vmatpush2.bf16.msra.mxu0 0
    %4344 = vmatprep.subr.bf16.mxu0 0
    %4345 = vmatpush2.bf16.msra.mxu0 0
    %4346 = vmatprep.subr.bf16.mxu0 0
    %4347 = vmatpush2.bf16.msra.mxu0 0
    %4348 = vmatprep.subr.bf16.mxu0 0
    %4349 = vmatpush2.bf16.msra.mxu0 0
    %4350 = vmatprep.subr.bf16.mxu0 0
    %4351 = vmatpush2.bf16.msra.mxu0 0
    %4352 = vmatprep.subr.bf16.mxu0 0
    %4353 = vmatpush2.bf16.msra.mxu0 0
    %4354 = vmatprep.subr.bf16.mxu0 0
    %4355 = vmatpush2.bf16.msra.mxu0 0
    %4356 = vmatprep.mubr.bf16.mxu0 0
    %4357 = vmatmul.mubr.bf16.gmra.mxu0 %v4319
    %v4358 = vpop.f32.mrf.mxu0
    %v4359 = vadd.f32 0.0, %v4358
    %v4360 = vpop.f32.mrf.mxu0
    %v4361 = vpop.f32.mrf.mxu0
    %v4362 = vpop.f32.mrf.mxu0
    %4363 = vdwg.mxu0
    %4364 = vrot.lane.b32.xlu0 %v2686, 40
    %v4365 = vpop.permute.xlu0 %4364
    %v4367 = vsel %vm320, %v4266, 0
    %v4370 = vsel %vm571, %v4365, 0
    %4372 = vmatprep.subr.bf16.mxu0 0
    %4373 = vmatpush1.bf16.msra.mxu0 0
    %4374 = vmatprep.subr.bf16.mxu0 0
    %4375 = vmatpush1.bf16.msra.mxu0 0
    %4376 = vmatprep.subr.bf16.mxu0 0
    %4377 = vmatpush1.bf16.msra.mxu0 0
    %4378 = vmatprep.subr.bf16.mxu0 0
    %4379 = vmatpush1.bf16.msra.mxu0 0
    %4380 = vmatprep.subr.bf16.mxu0 0
    %4381 = vmatpush1.bf16.msra.mxu0 0
    %4382 = vmatprep.subr.bf16.mxu0 0
    %4383 = vmatpush1.bf16.msra.mxu0 0
    %4384 = vmatprep.subr.bf16.mxu0 0
    %4385 = vmatpush1.bf16.msra.mxu0 0
    %4386 = vmatprep.subr.bf16.mxu0 0
    %4387 = vmatpush1.bf16.msra.mxu0 %v4370
    %4388 = vmatprep.subr.bf16.mxu0 0
    %4389 = vmatpush2.bf16.msra.mxu0 0
    %4390 = vmatprep.subr.bf16.mxu0 0
    %4391 = vmatpush2.bf16.msra.mxu0 0
    %4392 = vmatprep.subr.bf16.mxu0 0
    %4393 = vmatpush2.bf16.msra.mxu0 0
    %4394 = vmatprep.subr.bf16.mxu0 0
    %4395 = vmatpush2.bf16.msra.mxu0 0
    %4396 = vmatprep.subr.bf16.mxu0 0
    %4397 = vmatpush2.bf16.msra.mxu0 0
    %4398 = vmatprep.subr.bf16.mxu0 0
    %4399 = vmatpush2.bf16.msra.mxu0 0
    %4400 = vmatprep.subr.bf16.mxu0 0
    %4401 = vmatpush2.bf16.msra.mxu0 0
    %4402 = vmatprep.subr.bf16.mxu0 0
    %4403 = vmatpush2.bf16.msra.mxu0 0
    %4404 = vmatprep.mubr.bf16.mxu0 0
    %4405 = vmatmul.mubr.bf16.gmra.mxu0 %v4367
    %v4406 = vpop.f32.mrf.mxu0
    %v4407 = vadd.f32 0.0, %v4406
    %v4408 = vpop.f32.mrf.mxu0
    %v4409 = vpop.f32.mrf.mxu0
    %v4410 = vpop.f32.mrf.mxu0
    %4411 = vdwg.mxu0
    %4412 = vrot.lane.b32.xlu0 %v2687, 40
    %v4413 = vpop.permute.xlu0 %4412
    %v4415 = vsel %vm320, %v4267, 0
    %v4418 = vsel %vm571, %v4413, 0
    %4420 = vmatprep.subr.bf16.mxu0 0
    %4421 = vmatpush1.bf16.msra.mxu0 0
    %4422 = vmatprep.subr.bf16.mxu0 0
    %4423 = vmatpush1.bf16.msra.mxu0 0
    %4424 = vmatprep.subr.bf16.mxu0 0
    %4425 = vmatpush1.bf16.msra.mxu0 0
    %4426 = vmatprep.subr.bf16.mxu0 0
    %4427 = vmatpush1.bf16.msra.mxu0 0
    %4428 = vmatprep.subr.bf16.mxu0 0
    %4429 = vmatpush1.bf16.msra.mxu0 0
    %4430 = vmatprep.subr.bf16.mxu0 0
    %4431 = vmatpush1.bf16.msra.mxu0 0
    %4432 = vmatprep.subr.bf16.mxu0 0
    %4433 = vmatpush1.bf16.msra.mxu0 0
    %4434 = vmatprep.subr.bf16.mxu0 0
    %4435 = vmatpush1.bf16.msra.mxu0 %v4418
    %4436 = vmatprep.subr.bf16.mxu0 0
    %4437 = vmatpush2.bf16.msra.mxu0 0
    %4438 = vmatprep.subr.bf16.mxu0 0
    %4439 = vmatpush2.bf16.msra.mxu0 0
    %4440 = vmatprep.subr.bf16.mxu0 0
    %4441 = vmatpush2.bf16.msra.mxu0 0
    %4442 = vmatprep.subr.bf16.mxu0 0
    %4443 = vmatpush2.bf16.msra.mxu0 0
    %4444 = vmatprep.subr.bf16.mxu0 0
    %4445 = vmatpush2.bf16.msra.mxu0 0
    %4446 = vmatprep.subr.bf16.mxu0 0
    %4447 = vmatpush2.bf16.msra.mxu0 0
    %4448 = vmatprep.subr.bf16.mxu0 0
    %4449 = vmatpush2.bf16.msra.mxu0 0
    %4450 = vmatprep.subr.bf16.mxu0 0
    %4451 = vmatpush2.bf16.msra.mxu0 0
    %4452 = vmatprep.mubr.bf16.mxu0 0
    %4453 = vmatmul.mubr.bf16.gmra.mxu0 %v4415
    %v4454 = vpop.f32.mrf.mxu0
    %v4455 = vadd.f32 0.0, %v4454
    %v4456 = vpop.f32.mrf.mxu0
    %v4457 = vpop.f32.mrf.mxu0
    %v4458 = vpop.f32.mrf.mxu0
    %4459 = vdwg.mxu0
    %4464 = vrot.lane.b32.xlu0 %v3423, 8
    %v4465 = vpop.permute.xlu0 %4464
    %4466 = vrot.lane.b32.xlu0 %v3471, 8
    %v4467 = vpop.permute.xlu0 %4466
    %4468 = vrot.lane.b32.xlu0 %v3519, 8
    %v4469 = vpop.permute.xlu0 %4468
    %4470 = vrot.lane.b32.xlu0 %v3567, 8
    %v4471 = vpop.permute.xlu0 %4470
    %4480 = vrot.lane.b32.xlu0 %v3867, 16
    %v4481 = vpop.permute.xlu0 %4480
    %4482 = vrot.lane.b32.xlu0 %v3915, 16
    %v4483 = vpop.permute.xlu0 %4482
    %4484 = vrot.lane.b32.xlu0 %v3963, 16
    %v4485 = vpop.permute.xlu0 %4484
    %4486 = vrot.lane.b32.xlu0 %v4011, 16
    %v4487 = vpop.permute.xlu0 %4486
    %4496 = vrot.lane.b32.xlu0 %v4311, 24
    %v4497 = vpop.permute.xlu0 %4496
    %4498 = vrot.lane.b32.xlu0 %v4359, 24
    %v4499 = vpop.permute.xlu0 %4498
    %4500 = vrot.lane.b32.xlu0 %v4407, 24
    %v4501 = vpop.permute.xlu0 %4500
    %4502 = vrot.lane.b32.xlu0 %v4455, 24
    %v4503 = vpop.permute.xlu0 %4502
    %v4508 = vsel %vm320, %v2979, %v4465
    %v4509 = vsel %vm320, %v3027, %v4467
    %v4510 = vsel %vm320, %v3075, %v4469
    %v4511 = vsel %vm320, %v3123, %v4471
    %v4512 = vsel %vm2143, %v4508, %v4481
    %v4513 = vsel %vm2143, %v4509, %v4483
    %v4514 = vsel %vm2143, %v4510, %v4485
    %v4515 = vsel %vm2143, %v4511, %v4487
    %v4516 = vsel %vm2148, %v4512, %v4497
    %v4517 = vsel %vm2148, %v4513, %v4499
    %v4518 = vsel %vm2148, %v4514, %v4501
    %v4519 = vsel %vm2148, %v4515, %v4503
    %v4520 = vpack.c.bf16 %v4517, %v4516
    %v4521 = vpack.c.bf16 %v4519, %v4518
    %s4522 = scalar_lea.vmem %s6, 16
    %v4523 = vld [vmem:[%s4522] sm:$0xf]
    %v4524 = vld [vmem:[%s4522 + $0x4] sm:$0xf]
    %v4525 = vld [vmem:[%s4522 + $0x8] sm:$0xf]
    %v4526 = vld [vmem:[%s4522 + $0xc] sm:$0xf]
    %s4527 = scalar_lea.vmem [#allocation9], 1
    %v4528 = vld [vmem:[%s4527] sm:$0x1]
    %v4530 = vlaneseq
    %v4531 = vshrl.u32 %v4530, 7
    %v4532 = vsub.s32 0, %v4531
    %v4533 = vrot.slane %v4528, %v4532
    %v4539 = vunpack.c.l.b16 %v4523
    %v4540 = vunpack.c.l.b16 %v4524
    %v4541 = vunpack.c.l.b16 %v4525
    %v4542 = vunpack.c.l.b16 %v4526
    %v4543 = vpack.c.b16 %v4540, %v4539
    %v4544 = vpack.c.b16 %v4542, %v4541
    %v4548 = vsel %vm159, %v4520, 0
    %v4551 = vsel %vm159, %v4521, 0
    %4553 = vmatprep.subr.bf16.mxu0 0
    %4554 = vmatpush1.bf16.msra.mxu0 0
    %4555 = vmatprep.subr.bf16.mxu0 0
    %4556 = vmatpush1.bf16.msra.mxu0 0
    %4557 = vmatprep.subr.bf16.mxu0 0
    %4558 = vmatpush1.bf16.msra.mxu0 0
    %4559 = vmatprep.subr.bf16.mxu0 0
    %4560 = vmatpush1.bf16.msra.mxu0 0
    %4561 = vmatprep.subr.bf16.mxu0 0
    %4562 = vmatpush1.bf16.msra.mxu0 0
    %4563 = vmatprep.subr.bf16.mxu0 0
    %4564 = vmatpush1.bf16.msra.mxu0 0
    %4565 = vmatprep.subr.bf16.mxu0 0
    %4566 = vmatpush1.bf16.msra.mxu0 %v4544
    %4567 = vmatprep.subr.bf16.mxu0 0
    %4568 = vmatpush1.bf16.msra.mxu0 %v4543
    %4569 = vmatprep.subr.bf16.mxu0 0
    %4570 = vmatpush2.bf16.msra.mxu0 0
    %4571 = vmatprep.subr.bf16.mxu0 0
    %4572 = vmatpush2.bf16.msra.mxu0 0
    %4573 = vmatprep.subr.bf16.mxu0 0
    %4574 = vmatpush2.bf16.msra.mxu0 0
    %4575 = vmatprep.subr.bf16.mxu0 0
    %4576 = vmatpush2.bf16.msra.mxu0 0
    %4577 = vmatprep.subr.bf16.mxu0 0
    %4578 = vmatpush2.bf16.msra.mxu0 0
    %4579 = vmatprep.subr.bf16.mxu0 0
    %4580 = vmatpush2.bf16.msra.mxu0 0
    %4581 = vmatprep.subr.bf16.mxu0 0
    %4582 = vmatpush2.bf16.msra.mxu0 0
    %4583 = vmatprep.subr.bf16.mxu0 0
    %4584 = vmatpush2.bf16.msra.mxu0 0
    %4585 = vmatprep.mubr.bf16.mxu0 0
    %4586 = vmatmul.mubr.bf16.gmra.mxu0 %v4548
    %v4587 = vpop.f32.mrf.mxu0
    %v4588 = vadd.f32 %v4533, %v4587
    %v4589 = vpop.f32.mrf.mxu0
    %v4590 = vpop.f32.mrf.mxu0
    %v4591 = vadd.f32 %v4533, %v4590
    %v4592 = vpop.f32.mrf.mxu0
    %4593 = vmatprep.mubr.bf16.mxu0 0
    %4594 = vmatmul.mubr.bf16.gmra.mxu0 %v4551
    %v4595 = vpop.f32.mrf.mxu0
    %v4596 = vadd.f32 %v4533, %v4595
    %v4597 = vpop.f32.mrf.mxu0
    %v4598 = vpop.f32.mrf.mxu0
    %v4599 = vadd.f32 %v4533, %v4598
    %v4600 = vpop.f32.mrf.mxu0
    %4601 = vdwg.mxu0
    %v4602 = vadd.f32 %v2598, %v4588
    %v4603 = vadd.f32 %v2599, %v4591
    %v4604 = vadd.f32 %v2600, %v4596
    %v4605 = vadd.f32 %v2601, %v4599
    %s4606 = scalar_lea.vmem [#allocation11], 1
    %v4607 = vld [vmem:[%s4606] sm:$0x1]
    %s4608 = scalar_lea.vmem [#allocation12], 1
    %v4609 = vld [vmem:[%s4608] sm:$0x1]
    %v4610 = vsel %vm159, %v4602, 0.0
    %4611 = vadd.xlane.f32.xlu0 %v4610
    %v4612 = vpop.xlane.xlu0 %4611
    %v4613 = vsel %vm159, %v4603, 0.0
    %4614 = vadd.xlane.f32.xlu0 %v4613
    %v4615 = vpop.xlane.xlu0 %4614
    %v4616 = vsel %vm159, %v4604, 0.0
    %4617 = vadd.xlane.f32.xlu0 %v4616
    %v4618 = vpop.xlane.xlu0 %4617
    %v4619 = vsel %vm159, %v4605, 0.0
    %4620 = vadd.xlane.f32.xlu0 %v4619
    %v4621 = vpop.xlane.xlu0 %4620
    %v4622 = vmul.f32 %v4612, %v172
    %v4623 = vmul.f32 %v4615, %v172
    %v4624 = vmul.f32 %v4618, %v172
    %v4625 = vmul.f32 %v4621, %v172
    %v4626 = vsub.f32 %v4602, %v4622
    %v4627 = vsub.f32 %v4603, %v4623
    %v4628 = vsub.f32 %v4604, %v4624
    %v4629 = vsub.f32 %v4605, %v4625
    %v4630 = vmul.f32 %v4626, %v4626
    %v4631 = vmul.f32 %v4627, %v4627
    %v4632 = vmul.f32 %v4628, %v4628
    %v4633 = vmul.f32 %v4629, %v4629
    %v4634 = vsel %vm159, %v4630, 0.0
    %4635 = vadd.xlane.f32.xlu0 %v4634
    %v4636 = vpop.xlane.xlu0 %4635
    %v4637 = vsel %vm159, %v4631, 0.0
    %4638 = vadd.xlane.f32.xlu0 %v4637
    %v4639 = vpop.xlane.xlu0 %4638
    %v4640 = vsel %vm159, %v4632, 0.0
    %4641 = vadd.xlane.f32.xlu0 %v4640
    %v4642 = vpop.xlane.xlu0 %4641
    %v4643 = vsel %vm159, %v4633, 0.0
    %4644 = vadd.xlane.f32.xlu0 %v4643
    %v4645 = vpop.xlane.xlu0 %4644
    %v4646 = vmul.f32 %v4636, %v172
    %v4647 = vmul.f32 %v4639, %v172
    %v4648 = vmul.f32 %v4642, %v172
    %v4649 = vmul.f32 %v4645, %v172
    %v4650 = vadd.f32 %v4646, 1e-05
    %v4651 = vadd.f32 %v4647, 1e-05
    %v4652 = vadd.f32 %v4648, 1e-05
    %v4653 = vadd.f32 %v4649, 1e-05
    %v4654 = vrsqrt.pop %v4650
    %v4655 = vrsqrt.pop %v4651
    %v4656 = vrsqrt.pop %v4652
    %v4657 = vrsqrt.pop %v4653
    %v4658 = vmul.f32 %v4626, %v4654
    %v4659 = vmul.f32 %v4627, %v4655
    %v4660 = vmul.f32 %v4628, %v4656
    %v4661 = vmul.f32 %v4629, %v4657
    %v4663 = vlaneseq
    %v4664 = vshrl.u32 %v4663, 7
    %v4665 = vsub.s32 0, %v4664
    %v4666 = vrot.slane %v4607, %v4665
    %v4668 = vmul.f32 %v4658, %v4666
    %v4669 = vmul.f32 %v4659, %v4666
    %v4670 = vmul.f32 %v4660, %v4666
    %v4671 = vmul.f32 %v4661, %v4666
    %v4673 = vlaneseq
    %v4674 = vshrl.u32 %v4673, 7
    %v4675 = vsub.s32 0, %v4674
    %v4676 = vrot.slane %v4609, %v4675
    %v4678 = vadd.f32 %v4668, %v4676
    %v4679 = vadd.f32 %v4669, %v4676
    %v4680 = vadd.f32 %v4670, %v4676
    %v4681 = vadd.f32 %v4671, %v4676
    %v4682 = vpack.c.bf16 %v4679, %v4678
    %v4683 = vpack.c.bf16 %v4681, %v4680
    %s4684 = scalar_lea.vmem [#allocation14], 16
    %v4685 = vld [vmem:[%s4684] sm:$0xf]
    %v4686 = vld [vmem:[%s4684 + $0x4] sm:$0xf]
    %v4687 = vld [vmem:[%s4684 + $0x8] sm:$0xf]
    %v4688 = vld [vmem:[%s4684 + $0xc] sm:$0xf]
    %s4689 = scalar_lea.vmem %s11, 1
    %v4690 = vld [vmem:[%s4689] sm:$0x1]
    %v4692 = vlaneseq
    %v4693 = vshrl.u32 %v4692, 7
    %v4694 = vsub.s32 0, %v4693
    %v4695 = vrot.slane %v4690, %v4694
    %v4701 = vunpack.c.l.b16 %v4685
    %v4702 = vunpack.c.l.b16 %v4686
    %v4703 = vunpack.c.l.b16 %v4687
    %v4704 = vunpack.c.l.b16 %v4688
    %v4705 = vpack.c.b16 %v4702, %v4701
    %v4706 = vpack.c.b16 %v4704, %v4703
    %v4710 = vsel %vm159, %v4682, 0
    %v4713 = vsel %vm159, %v4683, 0
    %4715 = vmatprep.subr.bf16.mxu0 0
    %4716 = vmatpush1.bf16.msra.mxu0 0
    %4717 = vmatprep.subr.bf16.mxu0 0
    %4718 = vmatpush1.bf16.msra.mxu0 0
    %4719 = vmatprep.subr.bf16.mxu0 0
    %4720 = vmatpush1.bf16.msra.mxu0 0
    %4721 = vmatprep.subr.bf16.mxu0 0
    %4722 = vmatpush1.bf16.msra.mxu0 0
    %4723 = vmatprep.subr.bf16.mxu0 0
    %4724 = vmatpush1.bf16.msra.mxu0 0
    %4725 = vmatprep.subr.bf16.mxu0 0
    %4726 = vmatpush1.bf16.msra.mxu0 0
    %4727 = vmatprep.subr.bf16.mxu0 0
    %4728 = vmatpush1.bf16.msra.mxu0 %v4706
    %4729 = vmatprep.subr.bf16.mxu0 0
    %4730 = vmatpush1.bf16.msra.mxu0 %v4705
    %4731 = vmatprep.subr.bf16.mxu0 0
    %4732 = vmatpush2.bf16.msra.mxu0 0
    %4733 = vmatprep.subr.bf16.mxu0 0
    %4734 = vmatpush2.bf16.msra.mxu0 0
    %4735 = vmatprep.subr.bf16.mxu0 0
    %4736 = vmatpush2.bf16.msra.mxu0 0
    %4737 = vmatprep.subr.bf16.mxu0 0
    %4738 = vmatpush2.bf16.msra.mxu0 0
    %4739 = vmatprep.subr.bf16.mxu0 0
    %4740 = vmatpush2.bf16.msra.mxu0 0
    %4741 = vmatprep.subr.bf16.mxu0 0
    %4742 = vmatpush2.bf16.msra.mxu0 0
    %4743 = vmatprep.subr.bf16.mxu0 0
    %4744 = vmatpush2.bf16.msra.mxu0 0
    %4745 = vmatprep.subr.bf16.mxu0 0
    %4746 = vmatpush2.bf16.msra.mxu0 0
    %4747 = vmatprep.mubr.bf16.mxu0 0
    %4748 = vmatmul.mubr.bf16.gmra.mxu0 %v4710
    %v4749 = vpop.f32.mrf.mxu0
    %v4750 = vadd.f32 %v4695, %v4749
    %v4751 = vpop.f32.mrf.mxu0
    %v4752 = vpop.f32.mrf.mxu0
    %v4753 = vadd.f32 %v4695, %v4752
    %v4754 = vpop.f32.mrf.mxu0
    %4755 = vmatprep.mubr.bf16.mxu0 0
    %4756 = vmatmul.mubr.bf16.gmra.mxu0 %v4713
    %v4757 = vpop.f32.mrf.mxu0
    %v4758 = vadd.f32 %v4695, %v4757
    %v4759 = vpop.f32.mrf.mxu0
    %v4760 = vpop.f32.mrf.mxu0
    %v4761 = vadd.f32 %v4695, %v4760
    %v4762 = vpop.f32.mrf.mxu0
    %4763 = vdwg.mxu0
    %v4764 = vmul.f32 %v4750, 0.5
    %v4765 = vmul.f32 %v4753, 0.5
    %v4766 = vmul.f32 %v4758, 0.5
    %v4767 = vmul.f32 %v4761, 0.5
    %v4768 = vmul.f32 %v4750, 0.044715
    %v4769 = vmul.f32 %v4753, 0.044715
    %v4770 = vmul.f32 %v4758, 0.044715
    %v4771 = vmul.f32 %v4761, 0.044715
    %v4772 = vmul.f32 %v4768, %v4750
    %v4773 = vmul.f32 %v4769, %v4753
    %v4774 = vmul.f32 %v4770, %v4758
    %v4775 = vmul.f32 %v4771, %v4761
    %v4776 = vmul.f32 %v4772, %v4750
    %v4777 = vmul.f32 %v4773, %v4753
    %v4778 = vmul.f32 %v4774, %v4758
    %v4779 = vmul.f32 %v4775, %v4761
    %v4780 = vadd.f32 %v4750, %v4776
    %v4781 = vadd.f32 %v4753, %v4777
    %v4782 = vadd.f32 %v4758, %v4778
    %v4783 = vadd.f32 %v4761, %v4779
    %v4784 = vmul.f32 %v4780, 0.7978846
    %v4785 = vmul.f32 %v4781, 0.7978846
    %v4786 = vmul.f32 %v4782, 0.7978846
    %v4787 = vmul.f32 %v4783, 0.7978846
    %v4788 = vtanh.pop %v4784
    %v4789 = vtanh.pop %v4785
    %v4790 = vtanh.pop %v4786
    %v4791 = vtanh.pop %v4787
    %v4792 = vadd.f32 %v4788, 1.0
    %v4793 = vadd.f32 %v4789, 1.0
    %v4794 = vadd.f32 %v4790, 1.0
    %v4795 = vadd.f32 %v4791, 1.0
    %v4796 = vmul.f32 %v4764, %v4792
    %v4797 = vmul.f32 %v4765, %v4793
    %v4798 = vmul.f32 %v4766, %v4794
    %v4799 = vmul.f32 %v4767, %v4795
    %v4800 = vpack.c.bf16 %v4797, %v4796
    %v4801 = vpack.c.bf16 %v4799, %v4798
    %s4802 = scalar_lea.vmem %s12, 32
    %v4803 = vld [vmem:[%s4802] sm:$0xf]
    %v4804 = vld [vmem:[%s4802 + $0x4] sm:$0xf]
    %v4805 = vld [vmem:[%s4802 + $0x8] sm:$0xf]
    %v4806 = vld [vmem:[%s4802 + $0xc] sm:$0xf]
    %v4807 = vld [vmem:[%s4802 + $0x10] sm:$0xf]
    %v4808 = vld [vmem:[%s4802 + $0x14] sm:$0xf]
    %v4809 = vld [vmem:[%s4802 + $0x18] sm:$0xf]
    %v4810 = vld [vmem:[%s4802 + $0x1c] sm:$0xf]
    %s4811 = scalar_lea.vmem %s13, 1
    %v4812 = vld [vmem:[%s4811] sm:$0x1]
    %v4814 = vlaneseq
    %v4815 = vshrl.u32 %v4814, 7
    %v4816 = vsub.s32 0, %v4815
    %v4817 = vrot.slane %v4812, %v4816
    %v4827 = vunpack.c.l.b16 %v4803
    %v4828 = vunpack.c.l.b16 %v4804
    %v4829 = vunpack.c.l.b16 %v4805
    %v4830 = vunpack.c.l.b16 %v4806
    %v4831 = vunpack.c.l.b16 %v4807
    %v4832 = vunpack.c.l.b16 %v4808
    %v4833 = vunpack.c.l.b16 %v4809
    %v4834 = vunpack.c.l.b16 %v4810
    %v4835 = vpack.c.b16 %v4828, %v4827
    %v4836 = vpack.c.b16 %v4830, %v4829
    %v4837 = vpack.c.b16 %v4832, %v4831
    %v4838 = vpack.c.b16 %v4834, %v4833
    %v4844 = vsel %vm2468, %v4800, 0
    %v4847 = vsel %vm2468, %v4801, 0
    %4849 = vmatprep.subr.bf16.mxu0 0
    %4850 = vmatpush1.bf16.msra.mxu0 0
    %4851 = vmatprep.subr.bf16.mxu0 0
    %4852 = vmatpush1.bf16.msra.mxu0 0
    %4853 = vmatprep.subr.bf16.mxu0 0
    %4854 = vmatpush1.bf16.msra.mxu0 0
    %4855 = vmatprep.subr.bf16.mxu0 0
    %4856 = vmatpush1.bf16.msra.mxu0 0
    %4857 = vmatprep.subr.bf16.mxu0 0
    %4858 = vmatpush1.bf16.msra.mxu0 %v4838
    %4859 = vmatprep.subr.bf16.mxu0 0
    %4860 = vmatpush1.bf16.msra.mxu0 %v4837
    %4861 = vmatprep.subr.bf16.mxu0 0
    %4862 = vmatpush1.bf16.msra.mxu0 %v4836
    %4863 = vmatprep.subr.bf16.mxu0 0
    %4864 = vmatpush1.bf16.msra.mxu0 %v4835
    %4865 = vmatprep.subr.bf16.mxu0 0
    %4866 = vmatpush2.bf16.msra.mxu0 0
    %4867 = vmatprep.subr.bf16.mxu0 0
    %4868 = vmatpush2.bf16.msra.mxu0 0
    %4869 = vmatprep.subr.bf16.mxu0 0
    %4870 = vmatpush2.bf16.msra.mxu0 0
    %4871 = vmatprep.subr.bf16.mxu0 0
    %4872 = vmatpush2.bf16.msra.mxu0 0
    %4873 = vmatprep.subr.bf16.mxu0 0
    %4874 = vmatpush2.bf16.msra.mxu0 0
    %4875 = vmatprep.subr.bf16.mxu0 0
    %4876 = vmatpush2.bf16.msra.mxu0 0
    %4877 = vmatprep.subr.bf16.mxu0 0
    %4878 = vmatpush2.bf16.msra.mxu0 0
    %4879 = vmatprep.subr.bf16.mxu0 0
    %4880 = vmatpush2.bf16.msra.mxu0 0
    %4881 = vmatprep.mubr.bf16.mxu0 0
    %4882 = vmatmul.mubr.bf16.gmra.mxu0 %v4844
    %v4883 = vpop.f32.mrf.mxu0
    %v4884 = vadd.f32 %v4817, %v4883
    %v4885 = vpop.f32.mrf.mxu0
    %v4886 = vpop.f32.mrf.mxu0
    %v4887 = vadd.f32 %v4817, %v4886
    %v4888 = vpop.f32.mrf.mxu0
    %4889 = vmatprep.mubr.bf16.mxu0 0
    %4890 = vmatmul.mubr.bf16.gmra.mxu0 %v4847
    %v4891 = vpop.f32.mrf.mxu0
    %v4892 = vadd.f32 %v4817, %v4891
    %v4893 = vpop.f32.mrf.mxu0
    %v4894 = vpop.f32.mrf.mxu0
    %v4895 = vadd.f32 %v4817, %v4894
    %v4896 = vpop.f32.mrf.mxu0
    %4897 = vdwg.mxu0
    %v4898 = vadd.f32 %v4678, %v4884
    %v4899 = vadd.f32 %v4679, %v4887
    %v4900 = vadd.f32 %v4680, %v4892
    %v4901 = vadd.f32 %v4681, %v4895
    %s4902 = scalar_lea.vmem %s14, 1
    %v4903 = vld [vmem:[%s4902] sm:$0x1]
    %s4904 = scalar_lea.vmem %s15, 1
    %v4905 = vld [vmem:[%s4904] sm:$0x1]
    %v4906 = vsel %vm159, %v4898, 0.0
    %4907 = vadd.xlane.f32.xlu0 %v4906
    %v4908 = vpop.xlane.xlu0 %4907
    %v4909 = vsel %vm159, %v4899, 0.0
    %4910 = vadd.xlane.f32.xlu0 %v4909
    %v4911 = vpop.xlane.xlu0 %4910
    %v4912 = vsel %vm159, %v4900, 0.0
    %4913 = vadd.xlane.f32.xlu0 %v4912
    %v4914 = vpop.xlane.xlu0 %4913
    %v4915 = vsel %vm159, %v4901, 0.0
    %4916 = vadd.xlane.f32.xlu0 %v4915
    %v4917 = vpop.xlane.xlu0 %4916
    %v4918 = vmul.f32 %v4908, %v172
    %v4919 = vmul.f32 %v4911, %v172
    %v4920 = vmul.f32 %v4914, %v172
    %v4921 = vmul.f32 %v4917, %v172
    %v4922 = vsub.f32 %v4898, %v4918
    %v4923 = vsub.f32 %v4899, %v4919
    %v4924 = vsub.f32 %v4900, %v4920
    %v4925 = vsub.f32 %v4901, %v4921
    %v4926 = vmul.f32 %v4922, %v4922
    %v4927 = vmul.f32 %v4923, %v4923
    %v4928 = vmul.f32 %v4924, %v4924
    %v4929 = vmul.f32 %v4925, %v4925
    %v4930 = vsel %vm159, %v4926, 0.0
    %4931 = vadd.xlane.f32.xlu0 %v4930
    %v4932 = vpop.xlane.xlu0 %4931
    %v4933 = vsel %vm159, %v4927, 0.0
    %4934 = vadd.xlane.f32.xlu0 %v4933
    %v4935 = vpop.xlane.xlu0 %4934
    %v4936 = vsel %vm159, %v4928, 0.0
    %4937 = vadd.xlane.f32.xlu0 %v4936
    %v4938 = vpop.xlane.xlu0 %4937
    %v4939 = vsel %vm159, %v4929, 0.0
    %4940 = vadd.xlane.f32.xlu0 %v4939
    %v4941 = vpop.xlane.xlu0 %4940
    %v4942 = vmul.f32 %v4932, %v172
    %v4943 = vmul.f32 %v4935, %v172
    %v4944 = vmul.f32 %v4938, %v172
    %v4945 = vmul.f32 %v4941, %v172
    %v4946 = vadd.f32 %v4942, 1e-05
    %v4947 = vadd.f32 %v4943, 1e-05
    %v4948 = vadd.f32 %v4944, 1e-05
    %v4949 = vadd.f32 %v4945, 1e-05
    %v4950 = vrsqrt.pop %v4946
    %v4951 = vrsqrt.pop %v4947
    %v4952 = vrsqrt.pop %v4948
    %v4953 = vrsqrt.pop %v4949
    %v4954 = vmul.f32 %v4922, %v4950
    %v4955 = vmul.f32 %v4923, %v4951
    %v4956 = vmul.f32 %v4924, %v4952
    %v4957 = vmul.f32 %v4925, %v4953
    %v4959 = vlaneseq
    %v4960 = vshrl.u32 %v4959, 7
    %v4961 = vsub.s32 0, %v4960
    %v4962 = vrot.slane %v4903, %v4961
    %v4964 = vmul.f32 %v4954, %v4962
    %v4965 = vmul.f32 %v4955, %v4962
    %v4966 = vmul.f32 %v4956, %v4962
    %v4967 = vmul.f32 %v4957, %v4962
    %v4969 = vlaneseq
    %v4970 = vshrl.u32 %v4969, 7
    %v4971 = vsub.s32 0, %v4970
    %v4972 = vrot.slane %v4905, %v4971
    %v4974 = vadd.f32 %v4964, %v4972
    %v4975 = vadd.f32 %v4965, %v4972
    %v4976 = vadd.f32 %v4966, %v4972
    %v4977 = vadd.f32 %v4967, %v4972
    %s4978 = sld [smem:[#allocation2]]
    %v4979 = vstv %s4978
    %v4980 = vmul.f32 %v4974, %v4979
    %v4981 = vmul.f32 %v4975, %v4979
    %s4982 = ssub.f32 1.0, %s4978
    %v4983 = vstv %s4982
    %v4984 = vmul.f32 %v4976, %v4983
    %v4985 = vmul.f32 %v4977, %v4983
    %v4986 = vadd.f32 %v4980, %v4984
    %v4987 = vadd.f32 %v4981, %v4985
    %v4988 = vpack.c.bf16 %v4986, %v4986
    %v4989 = vpack.c.bf16 %v4987, %v4987
    %v4990 = vld [vmem:[%s16] sm:$0xf]
    %v4991 = vld [vmem:[%s16 + $0x4] sm:$0xf]
    %v4992 = vld [vmem:[%s16 + $0x8] sm:$0xf]
    %v4993 = vld [vmem:[%s16 + $0xc] sm:$0xf]
    %v4994 = vld [vmem:[%s17] sm:$0x1]
    %v4996 = vlaneseq
    %v4997 = vshrl.u32 %v4996, 7
    %v4998 = vsub.s32 0, %v4997
    %v4999 = vrot.slane %v4994, %v4998
    %v5003 = vunpack.c.l.b16 %v4988
    %v5004 = vunpack.c.l.b16 %v4989
    %v5005 = vrot.slane %v5004, 7
    %vm5006 = vcmask 1041409
    %v5007 = vsel %vm5006, %v5005, %v5003
    %v5008 = vpack.c.b16 %v5007, %v5007
    %v5013 = vunpack.c.l.b16 %v4990
    %v5014 = vunpack.c.l.b16 %v4991
    %v5015 = vunpack.c.l.b16 %v4992
    %v5016 = vunpack.c.l.b16 %v4993
    %v5017 = vpack.c.b16 %v5014, %v5013
    %v5018 = vpack.c.b16 %v5016, %v5015
    %v5022 = vsel %vm159, %v5008, 0
    %5024 = vmatprep.subr.bf16.mxu0 0
    %5025 = vmatpush1.bf16.msra.mxu0 0
    %5026 = vmatprep.subr.bf16.mxu0 0
    %5027 = vmatpush1.bf16.msra.mxu0 0
    %5028 = vmatprep.subr.bf16.mxu0 0
    %5029 = vmatpush1.bf16.msra.mxu0 0
    %5030 = vmatprep.subr.bf16.mxu0 0
    %5031 = vmatpush1.bf16.msra.mxu0 0
    %5032 = vmatprep.subr.bf16.mxu0 0
    %5033 = vmatpush1.bf16.msra.mxu0 0
    %5034 = vmatprep.subr.bf16.mxu0 0
    %5035 = vmatpush1.bf16.msra.mxu0 0
    %5036 = vmatprep.subr.bf16.mxu0 0
    %5037 = vmatpush1.bf16.msra.mxu0 %v5018
    %5038 = vmatprep.subr.bf16.mxu0 0
    %5039 = vmatpush1.bf16.msra.mxu0 %v5017
    %5040 = vmatprep.subr.bf16.mxu0 0
    %5041 = vmatpush2.bf16.msra.mxu0 0
    %5042 = vmatprep.subr.bf16.mxu0 0
    %5043 = vmatpush2.bf16.msra.mxu0 0
    %5044 = vmatprep.subr.bf16.mxu0 0
    %5045 = vmatpush2.bf16.msra.mxu0 0
    %5046 = vmatprep.subr.bf16.mxu0 0
    %5047 = vmatpush2.bf16.msra.mxu0 0
    %5048 = vmatprep.subr.bf16.mxu0 0
    %5049 = vmatpush2.bf16.msra.mxu0 0
    %5050 = vmatprep.subr.bf16.mxu0 0
    %5051 = vmatpush2.bf16.msra.mxu0 0
    %5052 = vmatprep.subr.bf16.mxu0 0
    %5053 = vmatpush2.bf16.msra.mxu0 0
    %5054 = vmatprep.subr.bf16.mxu0 0
    %5055 = vmatpush2.bf16.msra.mxu0 0
    %5056 = vmatprep.mubr.bf16.mxu0 0
    %5057 = vmatmul.mubr.bf16.gmra.mxu0 %v5022
    %v5058 = vpop.f32.mrf.mxu0
    %v5059 = vadd.f32 %v4999, %v5058
    %v5060 = vpop.f32.mrf.mxu0
    %v5061 = vpop.f32.mrf.mxu0
    %v5062 = vpop.f32.mrf.mxu0
    %5063 = vdwg.mxu0
    %5064 = vst [vmem:[#allocation15] sm:$0x3] %v5059
    // Predicated region
    $region102: #{tpu_custom_call.1} parent=1 // pred_check
      _
    $region103: #{tpu_custom_call.1} parent=1 // pred_check_branch
      %5066 = sbr.rel (0) target = $region105
    $region104: #{tpu_custom_call.1} parent=1 // pred_region
      %s5068 = ssub.s32 32, 32
      %5069 = vsyncadd [#allocation5], %s5068
      %s5071 = sshll.u32 [#allocation15], 4
      %s5072 = int_to_ptr.vmem [resolvable:$true] %s5071
      %5074 = dma.vmem_to_hbm [thread:$0]  %s5072, 32, %s18, [#allocation5]
    $region105: #{tpu_custom_call.1} parent=1 // pred_fallthru
      _
    // Predicated region
    $region106: #{tpu_custom_call.1} parent=1 // pred_check
      _
    $region107: #{tpu_custom_call.1} parent=1 // pred_check_branch
      %5076 = sbr.rel (0) target = $region109
    $region108: #{tpu_custom_call.1} parent=1 // pred_region
      %5077 = dma.done [#allocation5], 32
    $region109: #{tpu_custom_call.1} parent=1 // pred_fallthru
      _
    %5078 = vsyncpa [#allocation4], 1
    %5079 = vsyncpa [#allocation7], 1
    %5080 = vsyncpa [#allocation10], 1
    %5081 = vsyncpa [#allocation13], 1
    %5082 = vsyncpa [#allocation5], 1

</llo_original>
